<compile_context>
chip_gen: v7x
topology: tpu7x:2x2x1
jax: 0.10.0
libtpu: 0.0.40
codegen_flags: <defaults>
</compile_context>

<pallas_src>
import functools

import jax
import jax.numpy as jnp
from jax import lax
from jax.experimental import pallas as pl
from jax.experimental.pallas import tpu as pltpu

EPS = 1e-12
_VMEM_LIMIT = 32 * 1024 * 1024   # safe on v5e/v6e (128 MiB) and v7x (64 MiB)


# ----------------------------------------------------------------------------
# Generic gridded linear (with optional fused residual add)
# ----------------------------------------------------------------------------
def _linear_kernel(x_ref, w_ref, b_ref, o_ref):
    o_ref[...] = (
        jnp.dot(x_ref[...], w_ref[...], preferred_element_type=jnp.float32)
        + b_ref[...]
    )


def _linear_res_kernel(x_ref, w_ref, b_ref, r_ref, o_ref):
    o_ref[...] = (
        jnp.dot(x_ref[...], w_ref[...], preferred_element_type=jnp.float32)
        + b_ref[...]
        + r_ref[...]
    )


def pallas_linear(x, weight, bias, residual=None, block_rows=512):
    """y = x @ weight.T + bias (+ residual) along the last dim. weight: (Out, In)."""
    orig_shape = x.shape
    in_dim = orig_shape[-1]
    out_dim = weight.shape[0]
    m = 1
    for d in orig_shape[:-1]:
        m *= d
    x2 = x.reshape(m, in_dim).astype(jnp.float32)
    w_t = jnp.transpose(weight).astype(jnp.float32)
    b2 = bias.reshape(1, out_dim).astype(jnp.float32)

    bm = m if m <= block_rows else block_rows          # block_rows multiple of 8
    grid = (pl.cdiv(m, bm),)
    in_specs = [
        pl.BlockSpec((bm, in_dim), lambda i: (i, 0)),
        pl.BlockSpec((in_dim, out_dim), lambda i: (0, 0)),
        pl.BlockSpec((1, out_dim), lambda i: (0, 0)),
    ]
    args = [x2, w_t, b2]
    kern = _linear_kernel
    if residual is not None:
        in_specs.append(pl.BlockSpec((bm, out_dim), lambda i: (i, 0)))
        args.append(residual.reshape(m, out_dim).astype(jnp.float32))
        kern = _linear_res_kernel

    out = pl.pallas_call(
        kern,
        grid=grid,
        in_specs=in_specs,
        out_specs=pl.BlockSpec((bm, out_dim), lambda i: (i, 0)),
        out_shape=jax.ShapeDtypeStruct((m, out_dim), jnp.float32),
        compiler_params=pltpu.CompilerParams(
            dimension_semantics=("parallel",),
            vmem_limit_bytes=_VMEM_LIMIT),
    )(*args)
    return out.reshape(orig_shape[:-1] + (out_dim,))


# ----------------------------------------------------------------------------
# Fused LSTM (recurrence) + fc projection
# ----------------------------------------------------------------------------
def _lstm_fc_kernel(x_ref, wih_ref, whh_ref, b_ref, fcw_ref, fcb_ref,
                    o_ref, gx_ref, h_all_ref, *, hidden, steps):
    # x: (K, bn, F) time-major; wih: (F, 4H); whh: (H, 4H); b: (1, 4H)
    kk, bn, feat = x_ref.shape

    # Hoisted input projection: one (K*bn, F) x (F, 4H) matmul for all timesteps.
    x2 = x_ref[...].reshape(kk * bn, feat)
    gx = jnp.dot(x2, wih_ref[...], preferred_element_type=jnp.float32) + b_ref[...]
    gx_ref[...] = gx.reshape(kk, bn, 4 * hidden)

    def step(t, carry):
        h, c = carry
        gates = gx_ref[t] + jnp.dot(h, whh_ref[...],
                                    preferred_element_type=jnp.float32)
        i_g = jax.nn.sigmoid(gates[:, 0:hidden])
        f_g = jax.nn.sigmoid(gates[:, hidden:2 * hidden])
        g_g = jnp.tanh(gates[:, 2 * hidden:3 * hidden])
        o_g = jax.nn.sigmoid(gates[:, 3 * hidden:4 * hidden])
        c_new = f_g * c + i_g * g_g
        h_new = o_g * jnp.tanh(c_new)
        h_all_ref[t] = h_new
        return (h_new, c_new)

    h0 = jnp.zeros((bn, hidden), jnp.float32)
    c0 = jnp.zeros((bn, hidden), jnp.float32)
    lax.fori_loop(0, steps, step, (h0, c0), unroll=True)

    # Fused fc projection on all timesteps at once: (K*bn, H) x (H, F).
    h2 = h_all_ref[...].reshape(kk * bn, hidden)
    out = jnp.dot(h2, fcw_ref[...], preferred_element_type=jnp.float32) + fcb_ref[...]
    o_ref[...] = out.reshape(kk, bn, feat)


def pallas_lstm_fc(x_t, p):
    """x_t: (K, N, F) time-major -> (K, N, F) = fc(LSTM(x)). Gate order i,f,g,o."""
    k, n, f = x_t.shape
    hidden = p["w_hh"].shape[1]
    wih_t = jnp.transpose(p["w_ih"]).astype(jnp.float32)            # (F, 4H)
    whh_t = jnp.transpose(p["w_hh"]).astype(jnp.float32)            # (H, 4H)
    b = (p["b_ih"] + p["b_hh"]).reshape(1, 4 * hidden).astype(jnp.float32)
    fcw_t = jnp.transpose(p["fc_w"]).astype(jnp.float32)            # (H, F)
    fcb = p["fc_b"].reshape(1, f).astype(jnp.float32)

    bn = n if n <= 256 else 256
    grid = (pl.cdiv(n, bn),)
    out = pl.pallas_call(
        functools.partial(_lstm_fc_kernel, hidden=hidden, steps=k),
        grid=grid,
        in_specs=[
            pl.BlockSpec((k, bn, f), lambda i: (0, i, 0)),
            pl.BlockSpec((f, 4 * hidden), lambda i: (0, 0)),
            pl.BlockSpec((hidden, 4 * hidden), lambda i: (0, 0)),
            pl.BlockSpec((1, 4 * hidden), lambda i: (0, 0)),
            pl.BlockSpec((hidden, f), lambda i: (0, 0)),
            pl.BlockSpec((1, f), lambda i: (0, 0)),
        ],
        out_specs=pl.BlockSpec((k, bn, f), lambda i: (0, i, 0)),
        out_shape=jax.ShapeDtypeStruct((k, n, f), jnp.float32),
        scratch_shapes=[pltpu.VMEM((k, bn, 4 * hidden), jnp.float32),
                        pltpu.VMEM((k, bn, hidden), jnp.float32)],
        compiler_params=pltpu.CompilerParams(
            dimension_semantics=("parallel",),
            vmem_limit_bytes=_VMEM_LIMIT),
    )(x_t.astype(jnp.float32), wih_t, whh_t, b, fcw_t, fcb)
    return out


# ----------------------------------------------------------------------------
# Fused fc_map + LayerNormAlongChannel + positional-encoding add
# ----------------------------------------------------------------------------
def _map_norm_kernel(x_ref, w_ref, b_ref, g_ref, bt_ref, enc_ref, o_ref):
    # x: (S, F, K); w: (K, Q); b: (1, Q); g/bt: (F, 1); enc: (S, F, Q)
    ss, f, k = x_ref.shape
    q = w_ref.shape[1]
    x2 = x_ref[...].reshape(ss * f, k)
    y = jnp.dot(x2, w_ref[...], preferred_element_type=jnp.float32) + b_ref[...]
    y = y.reshape(ss, f, q)
    # LayerNorm over the feature axis (axis=1), eps inside the sqrt (nn.LayerNorm).
    mu = jnp.mean(y, axis=1, keepdims=True)
    var = jnp.mean((y - mu) ** 2, axis=1, keepdims=True)
    y = (y - mu) * lax.rsqrt(var + EPS) * g_ref[...][None] + bt_ref[...][None]
    o_ref[...] = y + enc_ref[...]


def pallas_map_norm(x, p, q_size):
    """x: (B, F, S, K) -> (B, S, F, Q) = LN_F(fc_map(x)) + pos_enc."""
    bsz, f, s, k = x.shape
    x_sfk = jnp.transpose(x, (0, 2, 1, 3))                      # (B, S, F, K)
    w_t = jnp.transpose(p["fc_map_w"]).astype(jnp.float32)      # (K, Q)
    b2 = p["fc_map_b"].reshape(1, q_size).astype(jnp.float32)
    ln_w = p["ln_w"].reshape(f, 1).astype(jnp.float32)
    ln_b = p["ln_b"].reshape(f, 1).astype(jnp.float32)
    enc = positional_encoding(s * q_size, f)                    # (S*Q, F)
    enc = jnp.transpose(enc.reshape(s, q_size, f), (0, 2, 1))   # (S, F, Q)
    enc = enc.astype(jnp.float32)

    out = pl.pallas_call(
        _map_norm_kernel,
        grid=(bsz,),
        in_specs=[
            pl.BlockSpec((None, s, f, k), lambda i: (i, 0, 0, 0)),
            pl.BlockSpec((k, q_size), lambda i: (0, 0)),
            pl.BlockSpec((1, q_size), lambda i: (0, 0)),
            pl.BlockSpec((f, 1), lambda i: (0, 0)),
            pl.BlockSpec((f, 1), lambda i: (0, 0)),
            pl.BlockSpec((s, f, q_size), lambda i: (0, 0, 0)),
        ],
        out_specs=pl.BlockSpec((None, s, f, q_size), lambda i: (i, 0, 0, 0)),
        out_shape=jax.ShapeDtypeStruct((bsz, s, f, q_size), jnp.float32),
        compiler_params=pltpu.CompilerParams(
            dimension_semantics=("parallel",),
            vmem_limit_bytes=_VMEM_LIMIT),
    )(x_sfk.astype(jnp.float32), w_t, b2, ln_w, ln_b, enc)
    return out


# ----------------------------------------------------------------------------
# Multi-head self attention (fused QKV, batched heads, residual add fused)
# ----------------------------------------------------------------------------
def _mha_kernel(x_ref, wqkv_ref, bqkv_ref, wo_ref, bo_ref, o_ref, attn_ref,
                *, num_heads, head_dim):
    x = x_ref[...]                                               # (L, E)
    length, e = x.shape
    xh = jnp.broadcast_to(x[None], (num_heads, length, e))       # (H, L, E)
    # One batched matmul for Q|K|V of every head: (H,L,E) x (H,E,3D) -> (H,L,3D)
    qkv = lax.dot_general(xh, wqkv_ref[...], (((2,), (1,)), ((0,), (0,))),
                          preferred_element_type=jnp.float32) + bqkv_ref[...]
    scale = 1.0 / (head_dim ** 0.5)
    qh = qkv[:, :, 0:head_dim] * scale
    kh = qkv[:, :, head_dim:2 * head_dim]
    vh = qkv[:, :, 2 * head_dim:3 * head_dim]
    # Batched attention over heads.
    s = lax.dot_general(qh, kh, (((2,), (2,)), ((0,), (0,))),
                        preferred_element_type=jnp.float32)      # (H, L, L)
    s = s - jnp.max(s, axis=-1, keepdims=True)
    p = jnp.exp(s)
    p = p * pl.reciprocal(jnp.sum(p, axis=-1, keepdims=True), approx=True)
    ctx = lax.dot_general(p, vh, (((2,), (1,)), ((0,), (0,))),
                          preferred_element_type=jnp.float32)    # (H, L, D)
    # Output projection as a head-batched matmul summed over heads
    # (equivalent to concat(heads) @ Wo^T).
    proj = lax.dot_general(ctx, wo_ref[...], (((2,), (1,)), ((0,), (0,))),
                           preferred_element_type=jnp.float32)   # (H, L, E)
    # TODO(synk): dropout (p=0.1) treated as eval-mode identity before the residual.
    o_ref[...] = jnp.sum(proj, axis=0) + bo_ref[...] + x          # residual fused
    attn_ref[...] = jnp.mean(p, axis=0)                           # averaged over heads


def pallas_mha(x, p, num_heads):
    """Batch-first self attention with fused residual.
    x: (N, L, E) -> (out+x (N,L,E), attn (N,L,L))."""
    n, l, e = x.shape
    d = e // num_heads

    def heads_w(w):      # (E_out, E_in) torch Linear weight -> (H, E_in, D)
        return jnp.transpose(w).reshape(e, num_heads, d).transpose(1, 0, 2)

    wqkv = jnp.concatenate([heads_w(p["wq"]), heads_w(p["wk"]), heads_w(p["wv"])],
                           axis=-1).astype(jnp.float32)                   # (H, E, 3D)
    bqkv = jnp.concatenate([p["bq"].reshape(num_heads, d),
                            p["bk"].reshape(num_heads, d),
                            p["bv"].reshape(num_heads, d)], axis=-1)
    bqkv = bqkv.reshape(num_heads, 1, 3 * d).astype(jnp.float32)          # (H, 1, 3D)
    wo_h = jnp.transpose(p["wo"]).reshape(num_heads, d, e).astype(jnp.float32)
    bo = p["bo"].reshape(1, e).astype(jnp.float32)

    kern = functools.partial(_mha_kernel, num_heads=num_heads, head_dim=d)
    out, attn = pl.pallas_call(
        kern,
        grid=(n,),
        in_specs=[
            pl.BlockSpec((None, l, e), lambda i: (i, 0, 0)),
            pl.BlockSpec((num_heads, e, 3 * d), lambda i: (0, 0, 0)),
            pl.BlockSpec((num_heads, 1, 3 * d), lambda i: (0, 0, 0)),
            pl.BlockSpec((num_heads, d, e), lambda i: (0, 0, 0)),
            pl.BlockSpec((1, e), lambda i: (0, 0)),
        ],
        out_specs=[
            pl.BlockSpec((None, l, e), lambda i: (i, 0, 0)),
            pl.BlockSpec((None, l, l), lambda i: (i, 0, 0)),
        ],
        out_shape=[
            jax.ShapeDtypeStruct((n, l, e), jnp.float32),
            jax.ShapeDtypeStruct((n, l, l), jnp.float32),
        ],
        compiler_params=pltpu.CompilerParams(
            dimension_semantics=("parallel",),
            vmem_limit_bytes=_VMEM_LIMIT),
    )(x.astype(jnp.float32), wqkv, bqkv, wo_h, bo)
    return out, attn


# ----------------------------------------------------------------------------
# Plain-JAX glue (cheap norms without a matmul hot path, positional encoding)
# ----------------------------------------------------------------------------
def global_layer_norm(x, weight, bias):
    """x: (B, F, T). nn.GroupNorm(1, F, eps=EPS)."""
    mean = jnp.mean(x, axis=(1, 2), keepdims=True)
    var = jnp.mean((x - mean) ** 2, axis=(1, 2), keepdims=True)
    return ((x - mean) * lax.rsqrt(var + EPS)
            * weight[None, :, None] + bias[None, :, None])


def cumulative_layer_norm(x, gamma, beta):
    """x: (B, F, S, K). gamma/beta: (1, F, 1).  Causal cLN (cumsum along time)."""
    # TODO(synk): cumsum along time stays in plain JAX (no clean Pallas lowering).
    b, f, s, k = x.shape
    t = s * k
    xf = x.reshape(b, f, t)
    step_sum = jnp.sum(xf, axis=1)                   # (B, T)
    step_sq = jnp.sum(xf ** 2, axis=1)
    cum_sum = jnp.cumsum(step_sum, axis=1)
    cum_sq = jnp.cumsum(step_sq, axis=1)
    cum_num = jnp.arange(f, f * (t + 1), f, dtype=jnp.float32)    # (T,)
    cum_mean = cum_sum / cum_num
    cum_sq_mean = cum_sq / cum_num
    cum_var = cum_sq_mean - cum_mean ** 2
    cum_var = jnp.maximum(cum_var, 0.0)              # guard catastrophic cancellation
    cum_mean = cum_mean[:, None, :]
    cum_var = cum_var[:, None, :]
    out = (xf - cum_mean) / (jnp.sqrt(cum_var) + EPS) * gamma + beta
    return out.reshape(b, f, s, k)


def positional_encoding(length, dimension, base=10000.0):
    position = jnp.arange(length, dtype=jnp.float32)[:, None]
    index = (jnp.arange(dimension // 2, dtype=jnp.float32) / dimension)[None, :]
    indices = position / (base ** index)
    return jnp.concatenate([jnp.sin(indices), jnp.cos(indices)], axis=1)


# ----------------------------------------------------------------------------
# GALR blocks
# ----------------------------------------------------------------------------
def intra_chunk_rnn(x, p):
    b, f, s, k = x.shape
    residual = x
    xt = jnp.transpose(x, (3, 0, 2, 1)).reshape(k, b * s, f)     # (K, B*S, F)
    h = pallas_lstm_fc(xt, p)                                    # (K, B*S, F)
    h = h.reshape(k, b, s, f)
    h = jnp.transpose(h, (1, 3, 2, 0))                           # (B, F, S, K)
    h = global_layer_norm(h.reshape(b, f, s * k), p["gn_w"], p["gn_b"])
    return h.reshape(b, f, s, k) + residual


def low_dim_globally_attentive(x, p, num_heads):
    b, f, s, k = x.shape
    q_size = p["fc_map_w"].shape[0]
    # fused fc_map + LayerNormAlongChannel + positional encoding -> (B, S, F, Q)
    y = pallas_map_norm(x, p, q_size)
    # -> batch-first MHA layout (B*Q, S, F)
    y = jnp.transpose(y, (0, 3, 1, 2)).reshape(b * q_size, s, f)
    # attention (residual add fused inside the kernel)
    x2, attn_w = pallas_mha(y, p, num_heads)                     # (B*Q, S, F)
    # back to (B, F, S, Q)
    x2 = jnp.transpose(x2.reshape(b, q_size, s, f), (0, 3, 2, 1))
    x2 = cumulative_layer_norm(x2, p["cln_gamma"], p["cln_beta"])
    # fc_inv with the block residual (x) fused into the linear kernel
    x2 = pallas_linear(x2, p["fc_inv_w"], p["fc_inv_b"], residual=x)  # (B,F,S,K)
    return x2, attn_w


def galr_forward(x, params, num_heads):
    out = x
    attn = None
    n_blocks = len(params["blocks"])
    for i, blk in enumerate(params["blocks"]):
        out = intra_chunk_rnn(out, blk["intra"])
        out, attn_w = low_dim_globally_attentive(out, blk["inter"], num_heads)
        if i == n_blocks - 1:
            attn = attn_w
    # Matches GALR: last block has attn_op=True -> (output, attention)
    return out, attn


# ----------------------------------------------------------------------------
# Deterministic parameter initialization (shapes follow the PyTorch module)
# ----------------------------------------------------------------------------
def _randn(key, shape, scale=0.1):
    return scale * jax.random.normal(key, shape, dtype=jnp.float32)


def init_galr_params(key, num_features, hidden_channels, chunk_size,
                     down_chunk_size, num_blocks):
    f, h, k, q = num_features, hidden_channels, chunk_size, down_chunk_size
    blocks = []
    for _ in range(num_blocks):
        key, *ks = jax.random.split(key, 20)
        intra = dict(
            w_ih=_randn(ks[0], (4 * h, f)),
            w_hh=_randn(ks[1], (4 * h, h)),
            b_ih=_randn(ks[2], (4 * h,), 0.05),
            b_hh=_randn(ks[3], (4 * h,), 0.05),
            fc_w=_randn(ks[4], (f, h)),
            fc_b=_randn(ks[5], (f,), 0.05),
            gn_w=jnp.ones((f,), jnp.float32),
            gn_b=jnp.zeros((f,), jnp.float32),
        )
        inter = dict(
            fc_map_w=_randn(ks[6], (q, k)),
            fc_map_b=_randn(ks[7], (q,), 0.05),
            ln_w=jnp.ones((f,), jnp.float32),
            ln_b=jnp.zeros((f,), jnp.float32),
            wq=_randn(ks[8], (f, f)),
            wk=_randn(ks[9], (f, f)),
            wv=_randn(ks[10], (f, f)),
            bq=_randn(ks[11], (f,), 0.05),
            bk=_randn(ks[12], (f,), 0.05),
            bv=_randn(ks[13], (f,), 0.05),
            wo=_randn(ks[14], (f, f)),
            bo=jnp.zeros((f,), jnp.float32),
            cln_gamma=jnp.ones((1, f, 1), jnp.float32),
            cln_beta=jnp.zeros((1, f, 1), jnp.float32),
            fc_inv_w=_randn(ks[15], (k, q)),
            fc_inv_b=_randn(ks[16], (k,), 0.05),
        )
        blocks.append(dict(intra=intra, inter=inter))
    return dict(blocks=blocks)


# ----------------------------------------------------------------------------
if __name__ == "__main__":
    # Small config consistent with GALR(num_features, hidden_channels,
    # num_heads=2, low_dimension=True, causal=True,
    # chunk_size=K, down_chunk_size=Q, num_blocks=2)
    B, F, S, K = 2, 16, 4, 8
    H = 16            # hidden_channels
    Q = 4             # down_chunk_size
    NUM_HEADS = 2     # F % NUM_HEADS == 0
    NUM_BLOCKS = 2

    root = jax.random.PRNGKey(0)
    k_in, k_params = jax.random.split(root)
    x = jax.random.normal(k_in, (B, F, S, K), dtype=jnp.float32)
    params = init_galr_params(k_params, F, H, K, Q, NUM_BLOCKS)

    fwd = jax.jit(functools.partial(galr_forward, num_heads=NUM_HEADS))
    out, attn = fwd(x, params)
    out = jax.block_until_ready(out)
    attn = jax.block_until_ready(attn)

    assert out.shape == (B, F, S, K), out.shape
    assert attn.shape == (B * Q, S, S), attn.shape
    assert jnp.all(jnp.isfinite(out)) and jnp.all(jnp.isfinite(attn))
    print("KERNEL_OK")
</pallas_src>

<mosaic_0001>
module attributes {stable_mosaic.version = 11 : i64} {
  func.func @_lstm_fc_kernel(%arg0: i32, %arg1: memref<8x8x16xf32, #tpu.memory_space<vmem>>, %arg2: memref<16x64xf32, #tpu.memory_space<vmem>>, %arg3: memref<16x64xf32, #tpu.memory_space<vmem>>, %arg4: memref<1x64xf32, #tpu.memory_space<vmem>>, %arg5: memref<16x16xf32, #tpu.memory_space<vmem>>, %arg6: memref<1x16xf32, #tpu.memory_space<vmem>>, %arg7: memref<8x8x16xf32, #tpu.memory_space<vmem>>, %arg8: memref<8x8x64xf32, #tpu.memory_space<vmem>>, %arg9: memref<8x8x16xf32, #tpu.memory_space<vmem>>) attributes {dimension_semantics = [#tpu.dimension_semantics<parallel>], iteration_bounds = array<i64: 1>, scalar_prefetch = 0 : i64, scratch_operands = 2 : i64, tpu.core_type = #tpu.core_type<tc>, window_params = [{transform_indices = @transform_0, window_bounds = array<i64: 8, 8, 16>}, {pipeline_mode = #tpu.pipeline_mode<synchronous>, transform_indices = @transform_1, window_bounds = array<i64: 16, 64>}, {pipeline_mode = #tpu.pipeline_mode<synchronous>, transform_indices = @transform_2, window_bounds = array<i64: 16, 64>}, {pipeline_mode = #tpu.pipeline_mode<synchronous>, transform_indices = @transform_3, window_bounds = array<i64: 1, 64>}, {pipeline_mode = #tpu.pipeline_mode<synchronous>, transform_indices = @transform_4, window_bounds = array<i64: 16, 16>}, {pipeline_mode = #tpu.pipeline_mode<synchronous>, transform_indices = @transform_5, window_bounds = array<i64: 1, 16>}, {transform_indices = @transform_6, window_bounds = array<i64: 8, 8, 16>}]} {
    %c0 = arith.constant 0 : index
    %c0_0 = arith.constant 0 : index
    %c0_1 = arith.constant 0 : index
    %0 = vector.load %arg1[%c0, %c0_0, %c0_1] : memref<8x8x16xf32, #tpu.memory_space<vmem>>, vector<8x8x16xf32>
    %1 = vector.shape_cast %0 : vector<8x8x16xf32> to vector<64x16xf32>
    %c0_2 = arith.constant 0 : index
    %c0_3 = arith.constant 0 : index
    %2 = vector.load %arg2[%c0_2, %c0_3] : memref<16x64xf32, #tpu.memory_space<vmem>>, vector<16x64xf32>
    %cst = arith.constant dense<0.000000e+00> : vector<64x64xf32>
    %3 = tpu.matmul %1, %2, %cst {dimension_numbers = #tpu.dot_dimension_numbers<[1], [0], [0], [1], [0, 0, 1, 1], [], []>} : vector<64x16xf32>, vector<16x64xf32>, vector<64x64xf32> -> vector<64x64xf32>
    %c0_4 = arith.constant 0 : index
    %c0_5 = arith.constant 0 : index
    %4 = vector.load %arg4[%c0_4, %c0_5] : memref<1x64xf32, #tpu.memory_space<vmem>>, vector<1x64xf32>
    %5 = vector.broadcast %4 : vector<1x64xf32> to vector<64x64xf32>
    %6 = arith.addf %3, %5 : vector<64x64xf32>
    %7 = vector.shape_cast %6 : vector<64x64xf32> to vector<8x8x64xf32>
    %c0_6 = arith.constant 0 : index
    %c0_7 = arith.constant 0 : index
    %c0_8 = arith.constant 0 : index
    %8 = vector.load %arg8[%c0_6, %c0_7, %c0_8] : memref<8x8x64xf32, #tpu.memory_space<vmem>>, vector<8x8x64xf32>
    tpu.vector_store %arg8[%c0_6, %c0_7, %c0_8], %7 {strides = array<i32>} : memref<8x8x64xf32, #tpu.memory_space<vmem>>, vector<8x8x64xf32>,
    %cst_9 = arith.constant 0.000000e+00 : f32
    %9 = vector.broadcast %cst_9 : f32 to vector<8x16xf32>
    %cst_10 = arith.constant 0.000000e+00 : f32
    %10 = vector.broadcast %cst_10 : f32 to vector<8x16xf32>
    %c0_i32 = arith.constant 0 : i32
    %11 = arith.index_cast %c0_i32 : i32 to index
    %c0_11 = arith.constant 0 : index
    %c0_12 = arith.constant 0 : index
    %12 = vector.load %arg8[%11, %c0_11, %c0_12] : memref<8x8x64xf32, #tpu.memory_space<vmem>>, vector<1x8x64xf32>
    %13 = vector.shape_cast %12 : vector<1x8x64xf32> to vector<8x64xf32>
    %c0_13 = arith.constant 0 : index
    %c0_14 = arith.constant 0 : index
    %14 = vector.load %arg3[%c0_13, %c0_14] : memref<16x64xf32, #tpu.memory_space<vmem>>, vector<16x64xf32>
    %cst_15 = arith.constant dense<0.000000e+00> : vector<8x64xf32>
    %15 = tpu.matmul %9, %14, %cst_15 {dimension_numbers = #tpu.dot_dimension_numbers<[1], [0], [0], [1], [0, 0, 1, 1], [], []>} : vector<8x16xf32>, vector<16x64xf32>, vector<8x64xf32> -> vector<8x64xf32>
    %16 = arith.addf %13, %15 : vector<8x64xf32>
    %17 = vector.extract_strided_slice %16 {offsets = [0, 0], sizes = [8, 16], strides = [1, 1]} : vector<8x64xf32> to vector<8x16xf32>
    %18 = arith.negf %17 : vector<8x16xf32>
    %19 = math.exp %18 : vector<8x16xf32>
    %cst_16 = arith.constant 1.000000e+00 : f32
    %20 = vector.broadcast %cst_16 : f32 to vector<8x16xf32>
    %21 = arith.addf %20, %19 : vector<8x16xf32>
    %22 = arith.divf %20, %21 : vector<8x16xf32>
    %23 = vector.extract_strided_slice %16 {offsets = [0, 16], sizes = [8, 16], strides = [1, 1]} : vector<8x64xf32> to vector<8x16xf32>
    %24 = arith.negf %23 : vector<8x16xf32>
    %25 = math.exp %24 : vector<8x16xf32>
    %cst_17 = arith.constant 1.000000e+00 : f32
    %26 = vector.broadcast %cst_17 : f32 to vector<8x16xf32>
    %27 = arith.addf %26, %25 : vector<8x16xf32>
    %28 = arith.divf %26, %27 : vector<8x16xf32>
    %29 = vector.extract_strided_slice %16 {offsets = [0, 32], sizes = [8, 16], strides = [1, 1]} : vector<8x64xf32> to vector<8x16xf32>
    %30 = math.tanh %29 : vector<8x16xf32>
    %31 = vector.extract_strided_slice %16 {offsets = [0, 48], sizes = [8, 16], strides = [1, 1]} : vector<8x64xf32> to vector<8x16xf32>
    %32 = arith.negf %31 : vector<8x16xf32>
    %33 = math.exp %32 : vector<8x16xf32>
    %cst_18 = arith.constant 1.000000e+00 : f32
    %34 = vector.broadcast %cst_18 : f32 to vector<8x16xf32>
    %35 = arith.addf %34, %33 : vector<8x16xf32>
    %36 = arith.divf %34, %35 : vector<8x16xf32>
    %37 = arith.mulf %28, %10 : vector<8x16xf32>
    %38 = arith.mulf %22, %30 : vector<8x16xf32>
    %39 = arith.addf %37, %38 : vector<8x16xf32>
    %40 = math.tanh %39 : vector<8x16xf32>
    %41 = arith.mulf %36, %40 : vector<8x16xf32>
    %42 = arith.index_cast %c0_i32 : i32 to index
    %c0_19 = arith.constant 0 : index
    %c0_20 = arith.constant 0 : index
    %43 = vector.load %arg9[%42, %c0_19, %c0_20] : memref<8x8x16xf32, #tpu.memory_space<vmem>>, vector<1x8x16xf32>
    %44 = vector.shape_cast %43 : vector<1x8x16xf32> to vector<8x16xf32>
    %45 = vector.shape_cast %41 : vector<8x16xf32> to vector<1x8x16xf32>
    tpu.vector_store %arg9[%42, %c0_19, %c0_20], %45 {strides = array<i32>} : memref<8x8x16xf32, #tpu.memory_space<vmem>>, vector<1x8x16xf32>,
    %c1_i32 = arith.constant 1 : i32
    %46 = arith.index_cast %c1_i32 : i32 to index
    %c0_21 = arith.constant 0 : index
    %c0_22 = arith.constant 0 : index
    %47 = vector.load %arg8[%46, %c0_21, %c0_22] : memref<8x8x64xf32, #tpu.memory_space<vmem>>, vector<1x8x64xf32>
    %48 = vector.shape_cast %47 : vector<1x8x64xf32> to vector<8x64xf32>
    %c0_23 = arith.constant 0 : index
    %c0_24 = arith.constant 0 : index
    %49 = vector.load %arg3[%c0_23, %c0_24] : memref<16x64xf32, #tpu.memory_space<vmem>>, vector<16x64xf32>
    %cst_25 = arith.constant dense<0.000000e+00> : vector<8x64xf32>
    %50 = tpu.matmul %41, %49, %cst_25 {dimension_numbers = #tpu.dot_dimension_numbers<[1], [0], [0], [1], [0, 0, 1, 1], [], []>} : vector<8x16xf32>, vector<16x64xf32>, vector<8x64xf32> -> vector<8x64xf32>
    %51 = arith.addf %48, %50 : vector<8x64xf32>
    %52 = vector.extract_strided_slice %51 {offsets = [0, 0], sizes = [8, 16], strides = [1, 1]} : vector<8x64xf32> to vector<8x16xf32>
    %53 = arith.negf %52 : vector<8x16xf32>
    %54 = math.exp %53 : vector<8x16xf32>
    %cst_26 = arith.constant 1.000000e+00 : f32
    %55 = vector.broadcast %cst_26 : f32 to vector<8x16xf32>
    %56 = arith.addf %55, %54 : vector<8x16xf32>
    %57 = arith.divf %55, %56 : vector<8x16xf32>
    %58 = vector.extract_strided_slice %51 {offsets = [0, 16], sizes = [8, 16], strides = [1, 1]} : vector<8x64xf32> to vector<8x16xf32>
    %59 = arith.negf %58 : vector<8x16xf32>
    %60 = math.exp %59 : vector<8x16xf32>
    %cst_27 = arith.constant 1.000000e+00 : f32
    %61 = vector.broadcast %cst_27 : f32 to vector<8x16xf32>
    %62 = arith.addf %61, %60 : vector<8x16xf32>
    %63 = arith.divf %61, %62 : vector<8x16xf32>
    %64 = vector.extract_strided_slice %51 {offsets = [0, 32], sizes = [8, 16], strides = [1, 1]} : vector<8x64xf32> to vector<8x16xf32>
    %65 = math.tanh %64 : vector<8x16xf32>
    %66 = vector.extract_strided_slice %51 {offsets = [0, 48], sizes = [8, 16], strides = [1, 1]} : vector<8x64xf32> to vector<8x16xf32>
    %67 = arith.negf %66 : vector<8x16xf32>
    %68 = math.exp %67 : vector<8x16xf32>
    %cst_28 = arith.constant 1.000000e+00 : f32
    %69 = vector.broadcast %cst_28 : f32 to vector<8x16xf32>
    %70 = arith.addf %69, %68 : vector<8x16xf32>
    %71 = arith.divf %69, %70 : vector<8x16xf32>
    %72 = arith.mulf %63, %39 : vector<8x16xf32>
    %73 = arith.mulf %57, %65 : vector<8x16xf32>
    %74 = arith.addf %72, %73 : vector<8x16xf32>
    %75 = math.tanh %74 : vector<8x16xf32>
    %76 = arith.mulf %71, %75 : vector<8x16xf32>
    %77 = arith.index_cast %c1_i32 : i32 to index
    %c0_29 = arith.constant 0 : index
    %c0_30 = arith.constant 0 : index
    %78 = vector.load %arg9[%77, %c0_29, %c0_30] : memref<8x8x16xf32, #tpu.memory_space<vmem>>, vector<1x8x16xf32>
    %79 = vector.shape_cast %78 : vector<1x8x16xf32> to vector<8x16xf32>
    %80 = vector.shape_cast %76 : vector<8x16xf32> to vector<1x8x16xf32>
    tpu.vector_store %arg9[%77, %c0_29, %c0_30], %80 {strides = array<i32>} : memref<8x8x16xf32, #tpu.memory_space<vmem>>, vector<1x8x16xf32>,
    %c2_i32 = arith.constant 2 : i32
    %81 = arith.index_cast %c2_i32 : i32 to index
    %c0_31 = arith.constant 0 : index
    %c0_32 = arith.constant 0 : index
    %82 = vector.load %arg8[%81, %c0_31, %c0_32] : memref<8x8x64xf32, #tpu.memory_space<vmem>>, vector<1x8x64xf32>
    %83 = vector.shape_cast %82 : vector<1x8x64xf32> to vector<8x64xf32>
    %c0_33 = arith.constant 0 : index
    %c0_34 = arith.constant 0 : index
    %84 = vector.load %arg3[%c0_33, %c0_34] : memref<16x64xf32, #tpu.memory_space<vmem>>, vector<16x64xf32>
    %cst_35 = arith.constant dense<0.000000e+00> : vector<8x64xf32>
    %85 = tpu.matmul %76, %84, %cst_35 {dimension_numbers = #tpu.dot_dimension_numbers<[1], [0], [0], [1], [0, 0, 1, 1], [], []>} : vector<8x16xf32>, vector<16x64xf32>, vector<8x64xf32> -> vector<8x64xf32>
    %86 = arith.addf %83, %85 : vector<8x64xf32>
    %87 = vector.extract_strided_slice %86 {offsets = [0, 0], sizes = [8, 16], strides = [1, 1]} : vector<8x64xf32> to vector<8x16xf32>
    %88 = arith.negf %87 : vector<8x16xf32>
    %89 = math.exp %88 : vector<8x16xf32>
    %cst_36 = arith.constant 1.000000e+00 : f32
    %90 = vector.broadcast %cst_36 : f32 to vector<8x16xf32>
    %91 = arith.addf %90, %89 : vector<8x16xf32>
    %92 = arith.divf %90, %91 : vector<8x16xf32>
    %93 = vector.extract_strided_slice %86 {offsets = [0, 16], sizes = [8, 16], strides = [1, 1]} : vector<8x64xf32> to vector<8x16xf32>
    %94 = arith.negf %93 : vector<8x16xf32>
    %95 = math.exp %94 : vector<8x16xf32>
    %cst_37 = arith.constant 1.000000e+00 : f32
    %96 = vector.broadcast %cst_37 : f32 to vector<8x16xf32>
    %97 = arith.addf %96, %95 : vector<8x16xf32>
    %98 = arith.divf %96, %97 : vector<8x16xf32>
    %99 = vector.extract_strided_slice %86 {offsets = [0, 32], sizes = [8, 16], strides = [1, 1]} : vector<8x64xf32> to vector<8x16xf32>
    %100 = math.tanh %99 : vector<8x16xf32>
    %101 = vector.extract_strided_slice %86 {offsets = [0, 48], sizes = [8, 16], strides = [1, 1]} : vector<8x64xf32> to vector<8x16xf32>
    %102 = arith.negf %101 : vector<8x16xf32>
    %103 = math.exp %102 : vector<8x16xf32>
    %cst_38 = arith.constant 1.000000e+00 : f32
    %104 = vector.broadcast %cst_38 : f32 to vector<8x16xf32>
    %105 = arith.addf %104, %103 : vector<8x16xf32>
    %106 = arith.divf %104, %105 : vector<8x16xf32>
    %107 = arith.mulf %98, %74 : vector<8x16xf32>
    %108 = arith.mulf %92, %100 : vector<8x16xf32>
    %109 = arith.addf %107, %108 : vector<8x16xf32>
    %110 = math.tanh %109 : vector<8x16xf32>
    %111 = arith.mulf %106, %110 : vector<8x16xf32>
    %112 = arith.index_cast %c2_i32 : i32 to index
    %c0_39 = arith.constant 0 : index
    %c0_40 = arith.constant 0 : index
    %113 = vector.load %arg9[%112, %c0_39, %c0_40] : memref<8x8x16xf32, #tpu.memory_space<vmem>>, vector<1x8x16xf32>
    %114 = vector.shape_cast %113 : vector<1x8x16xf32> to vector<8x16xf32>
    %115 = vector.shape_cast %111 : vector<8x16xf32> to vector<1x8x16xf32>
    tpu.vector_store %arg9[%112, %c0_39, %c0_40], %115 {strides = array<i32>} : memref<8x8x16xf32, #tpu.memory_space<vmem>>, vector<1x8x16xf32>,
    %c3_i32 = arith.constant 3 : i32
    %116 = arith.index_cast %c3_i32 : i32 to index
    %c0_41 = arith.constant 0 : index
    %c0_42 = arith.constant 0 : index
    %117 = vector.load %arg8[%116, %c0_41, %c0_42] : memref<8x8x64xf32, #tpu.memory_space<vmem>>, vector<1x8x64xf32>
    %118 = vector.shape_cast %117 : vector<1x8x64xf32> to vector<8x64xf32>
    %c0_43 = arith.constant 0 : index
    %c0_44 = arith.constant 0 : index
    %119 = vector.load %arg3[%c0_43, %c0_44] : memref<16x64xf32, #tpu.memory_space<vmem>>, vector<16x64xf32>
    %cst_45 = arith.constant dense<0.000000e+00> : vector<8x64xf32>
    %120 = tpu.matmul %111, %119, %cst_45 {dimension_numbers = #tpu.dot_dimension_numbers<[1], [0], [0], [1], [0, 0, 1, 1], [], []>} : vector<8x16xf32>, vector<16x64xf32>, vector<8x64xf32> -> vector<8x64xf32>
    %121 = arith.addf %118, %120 : vector<8x64xf32>
    %122 = vector.extract_strided_slice %121 {offsets = [0, 0], sizes = [8, 16], strides = [1, 1]} : vector<8x64xf32> to vector<8x16xf32>
    %123 = arith.negf %122 : vector<8x16xf32>
    %124 = math.exp %123 : vector<8x16xf32>
    %cst_46 = arith.constant 1.000000e+00 : f32
    %125 = vector.broadcast %cst_46 : f32 to vector<8x16xf32>
    %126 = arith.addf %125, %124 : vector<8x16xf32>
    %127 = arith.divf %125, %126 : vector<8x16xf32>
    %128 = vector.extract_strided_slice %121 {offsets = [0, 16], sizes = [8, 16], strides = [1, 1]} : vector<8x64xf32> to vector<8x16xf32>
    %129 = arith.negf %128 : vector<8x16xf32>
    %130 = math.exp %129 : vector<8x16xf32>
    %cst_47 = arith.constant 1.000000e+00 : f32
    %131 = vector.broadcast %cst_47 : f32 to vector<8x16xf32>
    %132 = arith.addf %131, %130 : vector<8x16xf32>
    %133 = arith.divf %131, %132 : vector<8x16xf32>
    %134 = vector.extract_strided_slice %121 {offsets = [0, 32], sizes = [8, 16], strides = [1, 1]} : vector<8x64xf32> to vector<8x16xf32>
    %135 = math.tanh %134 : vector<8x16xf32>
    %136 = vector.extract_strided_slice %121 {offsets = [0, 48], sizes = [8, 16], strides = [1, 1]} : vector<8x64xf32> to vector<8x16xf32>
    %137 = arith.negf %136 : vector<8x16xf32>
    %138 = math.exp %137 : vector<8x16xf32>
    %cst_48 = arith.constant 1.000000e+00 : f32
    %139 = vector.broadcast %cst_48 : f32 to vector<8x16xf32>
    %140 = arith.addf %139, %138 : vector<8x16xf32>
    %141 = arith.divf %139, %140 : vector<8x16xf32>
    %142 = arith.mulf %133, %109 : vector<8x16xf32>
    %143 = arith.mulf %127, %135 : vector<8x16xf32>
    %144 = arith.addf %142, %143 : vector<8x16xf32>
    %145 = math.tanh %144 : vector<8x16xf32>
    %146 = arith.mulf %141, %145 : vector<8x16xf32>
    %147 = arith.index_cast %c3_i32 : i32 to index
    %c0_49 = arith.constant 0 : index
    %c0_50 = arith.constant 0 : index
    %148 = vector.load %arg9[%147, %c0_49, %c0_50] : memref<8x8x16xf32, #tpu.memory_space<vmem>>, vector<1x8x16xf32>
    %149 = vector.shape_cast %148 : vector<1x8x16xf32> to vector<8x16xf32>
    %150 = vector.shape_cast %146 : vector<8x16xf32> to vector<1x8x16xf32>
    tpu.vector_store %arg9[%147, %c0_49, %c0_50], %150 {strides = array<i32>} : memref<8x8x16xf32, #tpu.memory_space<vmem>>, vector<1x8x16xf32>,
    %c4_i32 = arith.constant 4 : i32
    %151 = arith.index_cast %c4_i32 : i32 to index
    %c0_51 = arith.constant 0 : index
    %c0_52 = arith.constant 0 : index
    %152 = vector.load %arg8[%151, %c0_51, %c0_52] : memref<8x8x64xf32, #tpu.memory_space<vmem>>, vector<1x8x64xf32>
    %153 = vector.shape_cast %152 : vector<1x8x64xf32> to vector<8x64xf32>
    %c0_53 = arith.constant 0 : index
    %c0_54 = arith.constant 0 : index
    %154 = vector.load %arg3[%c0_53, %c0_54] : memref<16x64xf32, #tpu.memory_space<vmem>>, vector<16x64xf32>
    %cst_55 = arith.constant dense<0.000000e+00> : vector<8x64xf32>
    %155 = tpu.matmul %146, %154, %cst_55 {dimension_numbers = #tpu.dot_dimension_numbers<[1], [0], [0], [1], [0, 0, 1, 1], [], []>} : vector<8x16xf32>, vector<16x64xf32>, vector<8x64xf32> -> vector<8x64xf32>
    %156 = arith.addf %153, %155 : vector<8x64xf32>
    %157 = vector.extract_strided_slice %156 {offsets = [0, 0], sizes = [8, 16], strides = [1, 1]} : vector<8x64xf32> to vector<8x16xf32>
    %158 = arith.negf %157 : vector<8x16xf32>
    %159 = math.exp %158 : vector<8x16xf32>
    %cst_56 = arith.constant 1.000000e+00 : f32
    %160 = vector.broadcast %cst_56 : f32 to vector<8x16xf32>
    %161 = arith.addf %160, %159 : vector<8x16xf32>
    %162 = arith.divf %160, %161 : vector<8x16xf32>
    %163 = vector.extract_strided_slice %156 {offsets = [0, 16], sizes = [8, 16], strides = [1, 1]} : vector<8x64xf32> to vector<8x16xf32>
    %164 = arith.negf %163 : vector<8x16xf32>
    %165 = math.exp %164 : vector<8x16xf32>
    %cst_57 = arith.constant 1.000000e+00 : f32
    %166 = vector.broadcast %cst_57 : f32 to vector<8x16xf32>
    %167 = arith.addf %166, %165 : vector<8x16xf32>
    %168 = arith.divf %166, %167 : vector<8x16xf32>
    %169 = vector.extract_strided_slice %156 {offsets = [0, 32], sizes = [8, 16], strides = [1, 1]} : vector<8x64xf32> to vector<8x16xf32>
    %170 = math.tanh %169 : vector<8x16xf32>
    %171 = vector.extract_strided_slice %156 {offsets = [0, 48], sizes = [8, 16], strides = [1, 1]} : vector<8x64xf32> to vector<8x16xf32>
    %172 = arith.negf %171 : vector<8x16xf32>
    %173 = math.exp %172 : vector<8x16xf32>
    %cst_58 = arith.constant 1.000000e+00 : f32
    %174 = vector.broadcast %cst_58 : f32 to vector<8x16xf32>
    %175 = arith.addf %174, %173 : vector<8x16xf32>
    %176 = arith.divf %174, %175 : vector<8x16xf32>
    %177 = arith.mulf %168, %144 : vector<8x16xf32>
    %178 = arith.mulf %162, %170 : vector<8x16xf32>
    %179 = arith.addf %177, %178 : vector<8x16xf32>
    %180 = math.tanh %179 : vector<8x16xf32>
    %181 = arith.mulf %176, %180 : vector<8x16xf32>
    %182 = arith.index_cast %c4_i32 : i32 to index
    %c0_59 = arith.constant 0 : index
    %c0_60 = arith.constant 0 : index
    %183 = vector.load %arg9[%182, %c0_59, %c0_60] : memref<8x8x16xf32, #tpu.memory_space<vmem>>, vector<1x8x16xf32>
    %184 = vector.shape_cast %183 : vector<1x8x16xf32> to vector<8x16xf32>
    %185 = vector.shape_cast %181 : vector<8x16xf32> to vector<1x8x16xf32>
    tpu.vector_store %arg9[%182, %c0_59, %c0_60], %185 {strides = array<i32>} : memref<8x8x16xf32, #tpu.memory_space<vmem>>, vector<1x8x16xf32>,
    %c5_i32 = arith.constant 5 : i32
    %186 = arith.index_cast %c5_i32 : i32 to index
    %c0_61 = arith.constant 0 : index
    %c0_62 = arith.constant 0 : index
    %187 = vector.load %arg8[%186, %c0_61, %c0_62] : memref<8x8x64xf32, #tpu.memory_space<vmem>>, vector<1x8x64xf32>
    %188 = vector.shape_cast %187 : vector<1x8x64xf32> to vector<8x64xf32>
    %c0_63 = arith.constant 0 : index
    %c0_64 = arith.constant 0 : index
    %189 = vector.load %arg3[%c0_63, %c0_64] : memref<16x64xf32, #tpu.memory_space<vmem>>, vector<16x64xf32>
    %cst_65 = arith.constant dense<0.000000e+00> : vector<8x64xf32>
    %190 = tpu.matmul %181, %189, %cst_65 {dimension_numbers = #tpu.dot_dimension_numbers<[1], [0], [0], [1], [0, 0, 1, 1], [], []>} : vector<8x16xf32>, vector<16x64xf32>, vector<8x64xf32> -> vector<8x64xf32>
    %191 = arith.addf %188, %190 : vector<8x64xf32>
    %192 = vector.extract_strided_slice %191 {offsets = [0, 0], sizes = [8, 16], strides = [1, 1]} : vector<8x64xf32> to vector<8x16xf32>
    %193 = arith.negf %192 : vector<8x16xf32>
    %194 = math.exp %193 : vector<8x16xf32>
    %cst_66 = arith.constant 1.000000e+00 : f32
    %195 = vector.broadcast %cst_66 : f32 to vector<8x16xf32>
    %196 = arith.addf %195, %194 : vector<8x16xf32>
    %197 = arith.divf %195, %196 : vector<8x16xf32>
    %198 = vector.extract_strided_slice %191 {offsets = [0, 16], sizes = [8, 16], strides = [1, 1]} : vector<8x64xf32> to vector<8x16xf32>
    %199 = arith.negf %198 : vector<8x16xf32>
    %200 = math.exp %199 : vector<8x16xf32>
    %cst_67 = arith.constant 1.000000e+00 : f32
    %201 = vector.broadcast %cst_67 : f32 to vector<8x16xf32>
    %202 = arith.addf %201, %200 : vector<8x16xf32>
    %203 = arith.divf %201, %202 : vector<8x16xf32>
    %204 = vector.extract_strided_slice %191 {offsets = [0, 32], sizes = [8, 16], strides = [1, 1]} : vector<8x64xf32> to vector<8x16xf32>
    %205 = math.tanh %204 : vector<8x16xf32>
    %206 = vector.extract_strided_slice %191 {offsets = [0, 48], sizes = [8, 16], strides = [1, 1]} : vector<8x64xf32> to vector<8x16xf32>
    %207 = arith.negf %206 : vector<8x16xf32>
    %208 = math.exp %207 : vector<8x16xf32>
    %cst_68 = arith.constant 1.000000e+00 : f32
    %209 = vector.broadcast %cst_68 : f32 to vector<8x16xf32>
    %210 = arith.addf %209, %208 : vector<8x16xf32>
    %211 = arith.divf %209, %210 : vector<8x16xf32>
    %212 = arith.mulf %203, %179 : vector<8x16xf32>
    %213 = arith.mulf %197, %205 : vector<8x16xf32>
    %214 = arith.addf %212, %213 : vector<8x16xf32>
    %215 = math.tanh %214 : vector<8x16xf32>
    %216 = arith.mulf %211, %215 : vector<8x16xf32>
    %217 = arith.index_cast %c5_i32 : i32 to index
    %c0_69 = arith.constant 0 : index
    %c0_70 = arith.constant 0 : index
    %218 = vector.load %arg9[%217, %c0_69, %c0_70] : memref<8x8x16xf32, #tpu.memory_space<vmem>>, vector<1x8x16xf32>
    %219 = vector.shape_cast %218 : vector<1x8x16xf32> to vector<8x16xf32>
    %220 = vector.shape_cast %216 : vector<8x16xf32> to vector<1x8x16xf32>
    tpu.vector_store %arg9[%217, %c0_69, %c0_70], %220 {strides = array<i32>} : memref<8x8x16xf32, #tpu.memory_space<vmem>>, vector<1x8x16xf32>,
    %c6_i32 = arith.constant 6 : i32
    %221 = arith.index_cast %c6_i32 : i32 to index
    %c0_71 = arith.constant 0 : index
    %c0_72 = arith.constant 0 : index
    %222 = vector.load %arg8[%221, %c0_71, %c0_72] : memref<8x8x64xf32, #tpu.memory_space<vmem>>, vector<1x8x64xf32>
    %223 = vector.shape_cast %222 : vector<1x8x64xf32> to vector<8x64xf32>
    %c0_73 = arith.constant 0 : index
    %c0_74 = arith.constant 0 : index
    %224 = vector.load %arg3[%c0_73, %c0_74] : memref<16x64xf32, #tpu.memory_space<vmem>>, vector<16x64xf32>
    %cst_75 = arith.constant dense<0.000000e+00> : vector<8x64xf32>
    %225 = tpu.matmul %216, %224, %cst_75 {dimension_numbers = #tpu.dot_dimension_numbers<[1], [0], [0], [1], [0, 0, 1, 1], [], []>} : vector<8x16xf32>, vector<16x64xf32>, vector<8x64xf32> -> vector<8x64xf32>
    %226 = arith.addf %223, %225 : vector<8x64xf32>
    %227 = vector.extract_strided_slice %226 {offsets = [0, 0], sizes = [8, 16], strides = [1, 1]} : vector<8x64xf32> to vector<8x16xf32>
    %228 = arith.negf %227 : vector<8x16xf32>
    %229 = math.exp %228 : vector<8x16xf32>
    %cst_76 = arith.constant 1.000000e+00 : f32
    %230 = vector.broadcast %cst_76 : f32 to vector<8x16xf32>
    %231 = arith.addf %230, %229 : vector<8x16xf32>
    %232 = arith.divf %230, %231 : vector<8x16xf32>
    %233 = vector.extract_strided_slice %226 {offsets = [0, 16], sizes = [8, 16], strides = [1, 1]} : vector<8x64xf32> to vector<8x16xf32>
    %234 = arith.negf %233 : vector<8x16xf32>
    %235 = math.exp %234 : vector<8x16xf32>
    %cst_77 = arith.constant 1.000000e+00 : f32
    %236 = vector.broadcast %cst_77 : f32 to vector<8x16xf32>
    %237 = arith.addf %236, %235 : vector<8x16xf32>
    %238 = arith.divf %236, %237 : vector<8x16xf32>
    %239 = vector.extract_strided_slice %226 {offsets = [0, 32], sizes = [8, 16], strides = [1, 1]} : vector<8x64xf32> to vector<8x16xf32>
    %240 = math.tanh %239 : vector<8x16xf32>
    %241 = vector.extract_strided_slice %226 {offsets = [0, 48], sizes = [8, 16], strides = [1, 1]} : vector<8x64xf32> to vector<8x16xf32>
    %242 = arith.negf %241 : vector<8x16xf32>
    %243 = math.exp %242 : vector<8x16xf32>
    %cst_78 = arith.constant 1.000000e+00 : f32
    %244 = vector.broadcast %cst_78 : f32 to vector<8x16xf32>
    %245 = arith.addf %244, %243 : vector<8x16xf32>
    %246 = arith.divf %244, %245 : vector<8x16xf32>
    %247 = arith.mulf %238, %214 : vector<8x16xf32>
    %248 = arith.mulf %232, %240 : vector<8x16xf32>
    %249 = arith.addf %247, %248 : vector<8x16xf32>
    %250 = math.tanh %249 : vector<8x16xf32>
    %251 = arith.mulf %246, %250 : vector<8x16xf32>
    %252 = arith.index_cast %c6_i32 : i32 to index
    %c0_79 = arith.constant 0 : index
    %c0_80 = arith.constant 0 : index
    %253 = vector.load %arg9[%252, %c0_79, %c0_80] : memref<8x8x16xf32, #tpu.memory_space<vmem>>, vector<1x8x16xf32>
    %254 = vector.shape_cast %253 : vector<1x8x16xf32> to vector<8x16xf32>
    %255 = vector.shape_cast %251 : vector<8x16xf32> to vector<1x8x16xf32>
    tpu.vector_store %arg9[%252, %c0_79, %c0_80], %255 {strides = array<i32>} : memref<8x8x16xf32, #tpu.memory_space<vmem>>, vector<1x8x16xf32>,
    %c7_i32 = arith.constant 7 : i32
    %256 = arith.index_cast %c7_i32 : i32 to index
    %c0_81 = arith.constant 0 : index
    %c0_82 = arith.constant 0 : index
    %257 = vector.load %arg8[%256, %c0_81, %c0_82] : memref<8x8x64xf32, #tpu.memory_space<vmem>>, vector<1x8x64xf32>
    %258 = vector.shape_cast %257 : vector<1x8x64xf32> to vector<8x64xf32>
    %c0_83 = arith.constant 0 : index
    %c0_84 = arith.constant 0 : index
    %259 = vector.load %arg3[%c0_83, %c0_84] : memref<16x64xf32, #tpu.memory_space<vmem>>, vector<16x64xf32>
    %cst_85 = arith.constant dense<0.000000e+00> : vector<8x64xf32>
    %260 = tpu.matmul %251, %259, %cst_85 {dimension_numbers = #tpu.dot_dimension_numbers<[1], [0], [0], [1], [0, 0, 1, 1], [], []>} : vector<8x16xf32>, vector<16x64xf32>, vector<8x64xf32> -> vector<8x64xf32>
    %261 = arith.addf %258, %260 : vector<8x64xf32>
    %262 = vector.extract_strided_slice %261 {offsets = [0, 0], sizes = [8, 16], strides = [1, 1]} : vector<8x64xf32> to vector<8x16xf32>
    %263 = arith.negf %262 : vector<8x16xf32>
    %264 = math.exp %263 : vector<8x16xf32>
    %cst_86 = arith.constant 1.000000e+00 : f32
    %265 = vector.broadcast %cst_86 : f32 to vector<8x16xf32>
    %266 = arith.addf %265, %264 : vector<8x16xf32>
    %267 = arith.divf %265, %266 : vector<8x16xf32>
    %268 = vector.extract_strided_slice %261 {offsets = [0, 16], sizes = [8, 16], strides = [1, 1]} : vector<8x64xf32> to vector<8x16xf32>
    %269 = arith.negf %268 : vector<8x16xf32>
    %270 = math.exp %269 : vector<8x16xf32>
    %cst_87 = arith.constant 1.000000e+00 : f32
    %271 = vector.broadcast %cst_87 : f32 to vector<8x16xf32>
    %272 = arith.addf %271, %270 : vector<8x16xf32>
    %273 = arith.divf %271, %272 : vector<8x16xf32>
    %274 = vector.extract_strided_slice %261 {offsets = [0, 32], sizes = [8, 16], strides = [1, 1]} : vector<8x64xf32> to vector<8x16xf32>
    %275 = math.tanh %274 : vector<8x16xf32>
    %276 = vector.extract_strided_slice %261 {offsets = [0, 48], sizes = [8, 16], strides = [1, 1]} : vector<8x64xf32> to vector<8x16xf32>
    %277 = arith.negf %276 : vector<8x16xf32>
    %278 = math.exp %277 : vector<8x16xf32>
    %cst_88 = arith.constant 1.000000e+00 : f32
    %279 = vector.broadcast %cst_88 : f32 to vector<8x16xf32>
    %280 = arith.addf %279, %278 : vector<8x16xf32>
    %281 = arith.divf %279, %280 : vector<8x16xf32>
    %282 = arith.mulf %273, %249 : vector<8x16xf32>
    %283 = arith.mulf %267, %275 : vector<8x16xf32>
    %284 = arith.addf %282, %283 : vector<8x16xf32>
    %285 = math.tanh %284 : vector<8x16xf32>
    %286 = arith.mulf %281, %285 : vector<8x16xf32>
    %287 = arith.index_cast %c7_i32 : i32 to index
    %c0_89 = arith.constant 0 : index
    %c0_90 = arith.constant 0 : index
    %288 = vector.load %arg9[%287, %c0_89, %c0_90] : memref<8x8x16xf32, #tpu.memory_space<vmem>>, vector<1x8x16xf32>
    %289 = vector.shape_cast %288 : vector<1x8x16xf32> to vector<8x16xf32>
    %290 = vector.shape_cast %286 : vector<8x16xf32> to vector<1x8x16xf32>
    tpu.vector_store %arg9[%287, %c0_89, %c0_90], %290 {strides = array<i32>} : memref<8x8x16xf32, #tpu.memory_space<vmem>>, vector<1x8x16xf32>,
    %c8_i32 = arith.constant 8 : i32
    %c0_91 = arith.constant 0 : index
    %c0_92 = arith.constant 0 : index
    %c0_93 = arith.constant 0 : index
    %291 = vector.load %arg9[%c0_91, %c0_92, %c0_93] : memref<8x8x16xf32, #tpu.memory_space<vmem>>, vector<8x8x16xf32>
    %292 = vector.shape_cast %291 : vector<8x8x16xf32> to vector<64x16xf32>
    %c0_94 = arith.constant 0 : index
    %c0_95 = arith.constant 0 : index
    %293 = vector.load %arg5[%c0_94, %c0_95] : memref<16x16xf32, #tpu.memory_space<vmem>>, vector<16x16xf32>
    %cst_96 = arith.constant dense<0.000000e+00> : vector<64x16xf32>
    %294 = tpu.matmul %292, %293, %cst_96 {dimension_numbers = #tpu.dot_dimension_numbers<[1], [0], [0], [1], [0, 0, 1, 1], [], []>} : vector<64x16xf32>, vector<16x16xf32>, vector<64x16xf32> -> vector<64x16xf32>
    %c0_97 = arith.constant 0 : index
    %c0_98 = arith.constant 0 : index
    %295 = vector.load %arg6[%c0_97, %c0_98] : memref<1x16xf32, #tpu.memory_space<vmem>>, vector<1x16xf32>
    %296 = vector.broadcast %295 : vector<1x16xf32> to vector<64x16xf32>
    %297 = arith.addf %294, %296 : vector<64x16xf32>
    %298 = vector.shape_cast %297 : vector<64x16xf32> to vector<8x8x16xf32>
    %c0_99 = arith.constant 0 : index
    %c0_100 = arith.constant 0 : index
    %c0_101 = arith.constant 0 : index
    %299 = vector.load %arg7[%c0_99, %c0_100, %c0_101] : memref<8x8x16xf32, #tpu.memory_space<vmem>>, vector<8x8x16xf32>
    tpu.vector_store %arg7[%c0_99, %c0_100, %c0_101], %298 {strides = array<i32>} : memref<8x8x16xf32, #tpu.memory_space<vmem>>, vector<8x8x16xf32>,
    return
  }
  func.func @transform_0(%arg0: i32) -> (i32, i32, i32) {
    %c0_i32 = arith.constant 0 : i32
    %c0_i32_0 = arith.constant 0 : i32
    %c0_i32_1 = arith.constant 0 : i32
    return %c0_i32, %arg0, %c0_i32_0 : i32, i32, i32
  }
  func.func @transform_1(%arg0: i32) -> (i32, i32) {
    %c0_i32 = arith.constant 0 : i32
    %c0_i32_0 = arith.constant 0 : i32
    %c0_i32_1 = arith.constant 0 : i32
    return %c0_i32, %c0_i32_0 : i32, i32
  }
  func.func @transform_2(%arg0: i32) -> (i32, i32) {
    %c0_i32 = arith.constant 0 : i32
    %c0_i32_0 = arith.constant 0 : i32
    %c0_i32_1 = arith.constant 0 : i32
    return %c0_i32, %c0_i32_0 : i32, i32
  }
  func.func @transform_3(%arg0: i32) -> (i32, i32) {
    %c0_i32 = arith.constant 0 : i32
    %c0_i32_0 = arith.constant 0 : i32
    %c0_i32_1 = arith.constant 0 : i32
    return %c0_i32, %c0_i32_0 : i32, i32
  }
  func.func @transform_4(%arg0: i32) -> (i32, i32) {
    %c0_i32 = arith.constant 0 : i32
    %c0_i32_0 = arith.constant 0 : i32
    %c0_i32_1 = arith.constant 0 : i32
    return %c0_i32, %c0_i32_0 : i32, i32
  }
  func.func @transform_5(%arg0: i32) -> (i32, i32) {
    %c0_i32 = arith.constant 0 : i32
    %c0_i32_0 = arith.constant 0 : i32
    %c0_i32_1 = arith.constant 0 : i32
    return %c0_i32, %c0_i32_0 : i32, i32
  }
  func.func @transform_6(%arg0: i32) -> (i32, i32, i32) {
    %c0_i32 = arith.constant 0 : i32
    %c0_i32_0 = arith.constant 0 : i32
    %c0_i32_1 = arith.constant 0 : i32
    return %c0_i32, %arg0, %c0_i32_0 : i32, i32, i32
  }
}

module attributes {stable_mosaic.version = 11 : i64} {
  func.func @_map_norm_kernel(%arg0: i32, %arg1: memref<1x4x16x8xf32, #tpu.memory_space<vmem>>, %arg2: memref<8x4xf32, #tpu.memory_space<vmem>>, %arg3: memref<1x4xf32, #tpu.memory_space<vmem>>, %arg4: memref<16x1xf32, #tpu.memory_space<vmem>>, %arg5: memref<16x1xf32, #tpu.memory_space<vmem>>, %arg6: memref<4x16x4xf32, #tpu.memory_space<vmem>>, %arg7: memref<1x4x16x4xf32, #tpu.memory_space<vmem>>) attributes {dimension_semantics = [#tpu.dimension_semantics<parallel>], iteration_bounds = array<i64: 2>, scalar_prefetch = 0 : i64, scratch_operands = 0 : i64, tpu.core_type = #tpu.core_type<tc>, window_params = [{transform_indices = @transform_0, window_bounds = array<i64: 1, 4, 16, 8>}, {pipeline_mode = #tpu.pipeline_mode<synchronous>, transform_indices = @transform_1, window_bounds = array<i64: 8, 4>}, {pipeline_mode = #tpu.pipeline_mode<synchronous>, transform_indices = @transform_2, window_bounds = array<i64: 1, 4>}, {pipeline_mode = #tpu.pipeline_mode<synchronous>, transform_indices = @transform_3, window_bounds = array<i64: 16, 1>}, {pipeline_mode = #tpu.pipeline_mode<synchronous>, transform_indices = @transform_4, window_bounds = array<i64: 16, 1>}, {pipeline_mode = #tpu.pipeline_mode<synchronous>, transform_indices = @transform_5, window_bounds = array<i64: 4, 16, 4>}, {transform_indices = @transform_6, window_bounds = array<i64: 1, 4, 16, 4>}]} {
    %c0 = arith.constant 0 : index
    %c0_0 = arith.constant 0 : index
    %c0_1 = arith.constant 0 : index
    %c0_2 = arith.constant 0 : index
    %0 = vector.load %arg1[%c0, %c0_0, %c0_1, %c0_2] : memref<1x4x16x8xf32, #tpu.memory_space<vmem>>, vector<1x4x16x8xf32>
    %1 = vector.shape_cast %0 : vector<1x4x16x8xf32> to vector<4x16x8xf32>
    %2 = vector.shape_cast %1 : vector<4x16x8xf32> to vector<64x8xf32>
    %c0_3 = arith.constant 0 : index
    %c0_4 = arith.constant 0 : index
    %3 = vector.load %arg2[%c0_3, %c0_4] : memref<8x4xf32, #tpu.memory_space<vmem>>, vector<8x4xf32>
    %cst = arith.constant dense<0.000000e+00> : vector<64x4xf32>
    %4 = tpu.matmul %2, %3, %cst {dimension_numbers = #tpu.dot_dimension_numbers<[1], [0], [0], [1], [0, 0, 1, 1], [], []>} : vector<64x8xf32>, vector<8x4xf32>, vector<64x4xf32> -> vector<64x4xf32>
    %c0_5 = arith.constant 0 : index
    %c0_6 = arith.constant 0 : index
    %5 = vector.load %arg3[%c0_5, %c0_6] : memref<1x4xf32, #tpu.memory_space<vmem>>, vector<1x4xf32>
    %6 = vector.broadcast %5 : vector<1x4xf32> to vector<64x4xf32>
    %7 = arith.addf %4, %6 : vector<64x4xf32>
    %8 = vector.shape_cast %7 : vector<64x4xf32> to vector<4x16x4xf32>
    %cst_7 = arith.constant dense<0.000000e+00> : vector<4x4xf32>
    %9 = vector.multi_reduction <add>, %8, %cst_7 [1] : vector<4x16x4xf32> to vector<4x4xf32>
    %10 = vector.shape_cast %9 : vector<4x4xf32> to vector<4x1x4xf32>
    %cst_8 = arith.constant 1.600000e+01 : f32
    %11 = vector.broadcast %cst_8 : f32 to vector<4x1x4xf32>
    %12 = arith.divf %10, %11 : vector<4x1x4xf32>
    %13 = vector.broadcast %12 : vector<4x1x4xf32> to vector<4x16x4xf32>
    %14 = arith.subf %8, %13 : vector<4x16x4xf32>
    %15 = arith.mulf %14, %14 : vector<4x16x4xf32>
    %cst_9 = arith.constant dense<0.000000e+00> : vector<4x4xf32>
    %16 = vector.multi_reduction <add>, %15, %cst_9 [1] : vector<4x16x4xf32> to vector<4x4xf32>
    %17 = vector.shape_cast %16 : vector<4x4xf32> to vector<4x1x4xf32>
    %cst_10 = arith.constant 1.600000e+01 : f32
    %18 = vector.broadcast %cst_10 : f32 to vector<4x1x4xf32>
    %19 = arith.divf %17, %18 : vector<4x1x4xf32>
    %20 = vector.broadcast %12 : vector<4x1x4xf32> to vector<4x16x4xf32>
    %21 = arith.subf %8, %20 : vector<4x16x4xf32>
    %cst_11 = arith.constant 9.99999996E-13 : f32
    %22 = vector.broadcast %cst_11 : f32 to vector<4x1x4xf32>
    %23 = arith.addf %19, %22 : vector<4x1x4xf32>
    %24 = math.rsqrt %23 : vector<4x1x4xf32>
    %25 = vector.broadcast %24 : vector<4x1x4xf32> to vector<4x16x4xf32>
    %26 = arith.mulf %21, %25 : vector<4x16x4xf32>
    %c0_12 = arith.constant 0 : index
    %c0_13 = arith.constant 0 : index
    %27 = vector.load %arg4[%c0_12, %c0_13] : memref<16x1xf32, #tpu.memory_space<vmem>>, vector<16x1xf32>
    %28 = vector.shape_cast %27 : vector<16x1xf32> to vector<1x16x1xf32>
    %29 = vector.broadcast %28 : vector<1x16x1xf32> to vector<4x16x4xf32>
    %30 = arith.mulf %26, %29 : vector<4x16x4xf32>
    %c0_14 = arith.constant 0 : index
    %c0_15 = arith.constant 0 : index
    %31 = vector.load %arg5[%c0_14, %c0_15] : memref<16x1xf32, #tpu.memory_space<vmem>>, vector<16x1xf32>
    %32 = vector.shape_cast %31 : vector<16x1xf32> to vector<1x16x1xf32>
    %33 = vector.broadcast %32 : vector<1x16x1xf32> to vector<4x16x4xf32>
    %34 = arith.addf %30, %33 : vector<4x16x4xf32>
    %c0_16 = arith.constant 0 : index
    %c0_17 = arith.constant 0 : index
    %c0_18 = arith.constant 0 : index
    %35 = vector.load %arg6[%c0_16, %c0_17, %c0_18] : memref<4x16x4xf32, #tpu.memory_space<vmem>>, vector<4x16x4xf32>
    %36 = arith.addf %34, %35 : vector<4x16x4xf32>
    %c0_19 = arith.constant 0 : index
    %c0_20 = arith.constant 0 : index
    %c0_21 = arith.constant 0 : index
    %c0_22 = arith.constant 0 : index
    %37 = vector.load %arg7[%c0_19, %c0_20, %c0_21, %c0_22] : memref<1x4x16x4xf32, #tpu.memory_space<vmem>>, vector<1x4x16x4xf32>
    %38 = vector.shape_cast %37 : vector<1x4x16x4xf32> to vector<4x16x4xf32>
    %39 = vector.shape_cast %36 : vector<4x16x4xf32> to vector<1x4x16x4xf32>
    tpu.vector_store %arg7[%c0_19, %c0_20, %c0_21, %c0_22], %39 {strides = array<i32>} : memref<1x4x16x4xf32, #tpu.memory_space<vmem>>, vector<1x4x16x4xf32>,
    return
  }
  func.func @transform_0(%arg0: i32) -> (i32, i32, i32, i32) {
    %c0_i32 = arith.constant 0 : i32
    %c0_i32_0 = arith.constant 0 : i32
    %c0_i32_1 = arith.constant 0 : i32
    %c0_i32_2 = arith.constant 0 : i32
    return %arg0, %c0_i32, %c0_i32_0, %c0_i32_1 : i32, i32, i32, i32
  }
  func.func @transform_1(%arg0: i32) -> (i32, i32) {
    %c0_i32 = arith.constant 0 : i32
    %c0_i32_0 = arith.constant 0 : i32
    %c0_i32_1 = arith.constant 0 : i32
    return %c0_i32, %c0_i32_0 : i32, i32
  }
  func.func @transform_2(%arg0: i32) -> (i32, i32) {
    %c0_i32 = arith.constant 0 : i32
    %c0_i32_0 = arith.constant 0 : i32
    %c0_i32_1 = arith.constant 0 : i32
    return %c0_i32, %c0_i32_0 : i32, i32
  }
  func.func @transform_3(%arg0: i32) -> (i32, i32) {
    %c0_i32 = arith.constant 0 : i32
    %c0_i32_0 = arith.constant 0 : i32
    %c0_i32_1 = arith.constant 0 : i32
    return %c0_i32, %c0_i32_0 : i32, i32
  }
  func.func @transform_4(%arg0: i32) -> (i32, i32) {
    %c0_i32 = arith.constant 0 : i32
    %c0_i32_0 = arith.constant 0 : i32
    %c0_i32_1 = arith.constant 0 : i32
    return %c0_i32, %c0_i32_0 : i32, i32
  }
  func.func @transform_5(%arg0: i32) -> (i32, i32, i32) {
    %c0_i32 = arith.constant 0 : i32
    %c0_i32_0 = arith.constant 0 : i32
    %c0_i32_1 = arith.constant 0 : i32
    %c0_i32_2 = arith.constant 0 : i32
    return %c0_i32, %c0_i32_0, %c0_i32_1 : i32, i32, i32
  }
  func.func @transform_6(%arg0: i32) -> (i32, i32, i32, i32) {
    %c0_i32 = arith.constant 0 : i32
    %c0_i32_0 = arith.constant 0 : i32
    %c0_i32_1 = arith.constant 0 : i32
    %c0_i32_2 = arith.constant 0 : i32
    return %arg0, %c0_i32, %c0_i32_0, %c0_i32_1 : i32, i32, i32, i32
  }
}

module attributes {stable_mosaic.version = 11 : i64} {
  func.func @_mha_kernel(%arg0: i32, %arg1: memref<1x4x16xf32, #tpu.memory_space<vmem>>, %arg2: memref<2x16x24xf32, #tpu.memory_space<vmem>>, %arg3: memref<2x1x24xf32, #tpu.memory_space<vmem>>, %arg4: memref<2x8x16xf32, #tpu.memory_space<vmem>>, %arg5: memref<1x16xf32, #tpu.memory_space<vmem>>, %arg6: memref<1x4x16xf32, #tpu.memory_space<vmem>>, %arg7: memref<1x4x4xf32, #tpu.memory_space<vmem>>) attributes {dimension_semantics = [#tpu.dimension_semantics<parallel>], iteration_bounds = array<i64: 8>, scalar_prefetch = 0 : i64, scratch_operands = 0 : i64, tpu.core_type = #tpu.core_type<tc>, window_params = [{transform_indices = @transform_0, window_bounds = array<i64: 1, 4, 16>}, {pipeline_mode = #tpu.pipeline_mode<synchronous>, transform_indices = @transform_1, window_bounds = array<i64: 2, 16, 24>}, {pipeline_mode = #tpu.pipeline_mode<synchronous>, transform_indices = @transform_2, window_bounds = array<i64: 2, 1, 24>}, {pipeline_mode = #tpu.pipeline_mode<synchronous>, transform_indices = @transform_3, window_bounds = array<i64: 2, 8, 16>}, {pipeline_mode = #tpu.pipeline_mode<synchronous>, transform_indices = @transform_4, window_bounds = array<i64: 1, 16>}, {transform_indices = @transform_5, window_bounds = array<i64: 1, 4, 16>}, {transform_indices = @transform_6, window_bounds = array<i64: 1, 4, 4>}]} {
    %c0 = arith.constant 0 : index
    %c0_0 = arith.constant 0 : index
    %c0_1 = arith.constant 0 : index
    %0 = vector.load %arg1[%c0, %c0_0, %c0_1] : memref<1x4x16xf32, #tpu.memory_space<vmem>>, vector<1x4x16xf32>
    %1 = vector.shape_cast %0 : vector<1x4x16xf32> to vector<4x16xf32>
    %2 = vector.shape_cast %1 : vector<4x16xf32> to vector<1x4x16xf32>
    %3 = vector.shape_cast %2 : vector<1x4x16xf32> to vector<1x4x16xf32>
    %4 = vector.broadcast %3 : vector<1x4x16xf32> to vector<2x4x16xf32>
    %c0_2 = arith.constant 0 : index
    %c0_3 = arith.constant 0 : index
    %c0_4 = arith.constant 0 : index
    %5 = vector.load %arg2[%c0_2, %c0_3, %c0_4] : memref<2x16x24xf32, #tpu.memory_space<vmem>>, vector<2x16x24xf32>
    %cst = arith.constant dense<0.000000e+00> : vector<2x4x24xf32>
    %6 = tpu.matmul %4, %5, %cst {dimension_numbers = #tpu.dot_dimension_numbers<[2], [1], [1], [2], [0, 0, 0, 1, 1, 2], [0], [0]>} : vector<2x4x16xf32>, vector<2x16x24xf32>, vector<2x4x24xf32> -> vector<2x4x24xf32>
    %c0_5 = arith.constant 0 : index
    %c0_6 = arith.constant 0 : index
    %c0_7 = arith.constant 0 : index
    %7 = vector.load %arg3[%c0_5, %c0_6, %c0_7] : memref<2x1x24xf32, #tpu.memory_space<vmem>>, vector<2x1x24xf32>
    %8 = vector.broadcast %7 : vector<2x1x24xf32> to vector<2x4x24xf32>
    %9 = arith.addf %6, %8 : vector<2x4x24xf32>
    %10 = vector.extract_strided_slice %9 {offsets = [0, 0, 0], sizes = [2, 4, 8], strides = [1, 1, 1]} : vector<2x4x24xf32> to vector<2x4x8xf32>
    %cst_8 = arith.constant 0.353553385 : f32
    %11 = vector.broadcast %cst_8 : f32 to vector<2x4x8xf32>
    %12 = arith.mulf %10, %11 : vector<2x4x8xf32>
    %13 = vector.extract_strided_slice %9 {offsets = [0, 0, 8], sizes = [2, 4, 8], strides = [1, 1, 1]} : vector<2x4x24xf32> to vector<2x4x8xf32>
    %14 = vector.extract_strided_slice %9 {offsets = [0, 0, 16], sizes = [2, 4, 8], strides = [1, 1, 1]} : vector<2x4x24xf32> to vector<2x4x8xf32>
    %cst_9 = arith.constant dense<0.000000e+00> : vector<2x4x4xf32>
    %15 = tpu.matmul %12, %13, %cst_9 {dimension_numbers = #tpu.dot_dimension_numbers<[2], [2], [1], [1], [0, 0, 0, 1, 1, 1], [0], [0]>} : vector<2x4x8xf32>, vector<2x4x8xf32>, vector<2x4x4xf32> -> vector<2x4x4xf32>
    %cst_10 = arith.constant dense<0xFF800000> : vector<2x4xf32>
    %16 = vector.multi_reduction <maximumf>, %15, %cst_10 [2] : vector<2x4x4xf32> to vector<2x4xf32>
    %17 = vector.shape_cast %16 : vector<2x4xf32> to vector<2x4x1xf32>
    %18 = vector.broadcast %17 : vector<2x4x1xf32> to vector<2x4x4xf32>
    %19 = arith.subf %15, %18 : vector<2x4x4xf32>
    %20 = math.exp %19 : vector<2x4x4xf32>
    %cst_11 = arith.constant dense<0.000000e+00> : vector<2x4xf32>
    %21 = vector.multi_reduction <add>, %20, %cst_11 [2] : vector<2x4x4xf32> to vector<2x4xf32>
    %22 = vector.shape_cast %21 : vector<2x4xf32> to vector<2x4x1xf32>
    %23 = tpu.reciprocal %22 {approx = true} : vector<2x4x1xf32> -> vector<2x4x1xf32>
    %24 = vector.broadcast %23 : vector<2x4x1xf32> to vector<2x4x4xf32>
    %25 = arith.mulf %20, %24 : vector<2x4x4xf32>
    %cst_12 = arith.constant dense<0.000000e+00> : vector<2x4x8xf32>
    %26 = tpu.matmul %25, %14, %cst_12 {dimension_numbers = #tpu.dot_dimension_numbers<[2], [1], [1], [2], [0, 0, 0, 1, 1, 2], [0], [0]>} : vector<2x4x4xf32>, vector<2x4x8xf32>, vector<2x4x8xf32> -> vector<2x4x8xf32>
    %c0_13 = arith.constant 0 : index
    %c0_14 = arith.constant 0 : index
    %c0_15 = arith.constant 0 : index
    %27 = vector.load %arg4[%c0_13, %c0_14, %c0_15] : memref<2x8x16xf32, #tpu.memory_space<vmem>>, vector<2x8x16xf32>
    %cst_16 = arith.constant dense<0.000000e+00> : vector<2x4x16xf32>
    %28 = tpu.matmul %26, %27, %cst_16 {dimension_numbers = #tpu.dot_dimension_numbers<[2], [1], [1], [2], [0, 0, 0, 1, 1, 2], [0], [0]>} : vector<2x4x8xf32>, vector<2x8x16xf32>, vector<2x4x16xf32> -> vector<2x4x16xf32>
    %cst_17 = arith.constant dense<0.000000e+00> : vector<4x16xf32>
    %29 = vector.multi_reduction <add>, %28, %cst_17 [0] : vector<2x4x16xf32> to vector<4x16xf32>
    %c0_18 = arith.constant 0 : index
    %c0_19 = arith.constant 0 : index
    %30 = vector.load %arg5[%c0_18, %c0_19] : memref<1x16xf32, #tpu.memory_space<vmem>>, vector<1x16xf32>
    %31 = vector.broadcast %30 : vector<1x16xf32> to vector<4x16xf32>
    %32 = arith.addf %29, %31 : vector<4x16xf32>
    %33 = arith.addf %32, %1 : vector<4x16xf32>
    %c0_20 = arith.constant 0 : index
    %c0_21 = arith.constant 0 : index
    %c0_22 = arith.constant 0 : index
    %34 = vector.load %arg6[%c0_20, %c0_21, %c0_22] : memref<1x4x16xf32, #tpu.memory_space<vmem>>, vector<1x4x16xf32>
    %35 = vector.shape_cast %34 : vector<1x4x16xf32> to vector<4x16xf32>
    %36 = vector.shape_cast %33 : vector<4x16xf32> to vector<1x4x16xf32>
    tpu.vector_store %arg6[%c0_20, %c0_21, %c0_22], %36 {strides = array<i32>} : memref<1x4x16xf32, #tpu.memory_space<vmem>>, vector<1x4x16xf32>,
    %cst_23 = arith.constant dense<0.000000e+00> : vector<4x4xf32>
    %37 = vector.multi_reduction <add>, %25, %cst_23 [0] : vector<2x4x4xf32> to vector<4x4xf32>
    %cst_24 = arith.constant 2.000000e+00 : f32
    %38 = vector.broadcast %cst_24 : f32 to vector<4x4xf32>
    %39 = arith.divf %37, %38 : vector<4x4xf32>
    %c0_25 = arith.constant 0 : index
    %c0_26 = arith.constant 0 : index
    %c0_27 = arith.constant 0 : index
    %40 = vector.load %arg7[%c0_25, %c0_26, %c0_27] : memref<1x4x4xf32, #tpu.memory_space<vmem>>, vector<1x4x4xf32>
    %41 = vector.shape_cast %40 : vector<1x4x4xf32> to vector<4x4xf32>
    %42 = vector.shape_cast %39 : vector<4x4xf32> to vector<1x4x4xf32>
    tpu.vector_store %arg7[%c0_25, %c0_26, %c0_27], %42 {strides = array<i32>} : memref<1x4x4xf32, #tpu.memory_space<vmem>>, vector<1x4x4xf32>,
    return
  }
  func.func @transform_0(%arg0: i32) -> (i32, i32, i32) {
    %c0_i32 = arith.constant 0 : i32
    %c0_i32_0 = arith.constant 0 : i32
    %c0_i32_1 = arith.constant 0 : i32
    return %arg0, %c0_i32, %c0_i32_0 : i32, i32, i32
  }
  func.func @transform_1(%arg0: i32) -> (i32, i32, i32) {
    %c0_i32 = arith.constant 0 : i32
    %c0_i32_0 = arith.constant 0 : i32
    %c0_i32_1 = arith.constant 0 : i32
    %c0_i32_2 = arith.constant 0 : i32
    return %c0_i32, %c0_i32_0, %c0_i32_1 : i32, i32, i32
  }
  func.func @transform_2(%arg0: i32) -> (i32, i32, i32) {
    %c0_i32 = arith.constant 0 : i32
    %c0_i32_0 = arith.constant 0 : i32
    %c0_i32_1 = arith.constant 0 : i32
    %c0_i32_2 = arith.constant 0 : i32
    return %c0_i32, %c0_i32_0, %c0_i32_1 : i32, i32, i32
  }
  func.func @transform_3(%arg0: i32) -> (i32, i32, i32) {
    %c0_i32 = arith.constant 0 : i32
    %c0_i32_0 = arith.constant 0 : i32
    %c0_i32_1 = arith.constant 0 : i32
    %c0_i32_2 = arith.constant 0 : i32
    return %c0_i32, %c0_i32_0, %c0_i32_1 : i32, i32, i32
  }
  func.func @transform_4(%arg0: i32) -> (i32, i32) {
    %c0_i32 = arith.constant 0 : i32
    %c0_i32_0 = arith.constant 0 : i32
    %c0_i32_1 = arith.constant 0 : i32
    return %c0_i32, %c0_i32_0 : i32, i32
  }
  func.func @transform_5(%arg0: i32) -> (i32, i32, i32) {
    %c0_i32 = arith.constant 0 : i32
    %c0_i32_0 = arith.constant 0 : i32
    %c0_i32_1 = arith.constant 0 : i32
    return %arg0, %c0_i32, %c0_i32_0 : i32, i32, i32
  }
  func.func @transform_6(%arg0: i32) -> (i32, i32, i32) {
    %c0_i32 = arith.constant 0 : i32
    %c0_i32_0 = arith.constant 0 : i32
    %c0_i32_1 = arith.constant 0 : i32
    return %arg0, %c0_i32, %c0_i32_0 : i32, i32, i32
  }
}

module attributes {stable_mosaic.version = 11 : i64} {
  func.func @_linear_res_kernel(%arg0: i32, %arg1: memref<128x4xf32, #tpu.memory_space<vmem>>, %arg2: memref<4x8xf32, #tpu.memory_space<vmem>>, %arg3: memref<1x8xf32, #tpu.memory_space<vmem>>, %arg4: memref<128x8xf32, #tpu.memory_space<vmem>>, %arg5: memref<128x8xf32, #tpu.memory_space<vmem>>) attributes {dimension_semantics = [#tpu.dimension_semantics<parallel>], iteration_bounds = array<i64: 1>, scalar_prefetch = 0 : i64, scratch_operands = 0 : i64, tpu.core_type = #tpu.core_type<tc>, window_params = [{transform_indices = @transform_0, window_bounds = array<i64: 128, 4>}, {pipeline_mode = #tpu.pipeline_mode<synchronous>, transform_indices = @transform_1, window_bounds = array<i64: 4, 8>}, {pipeline_mode = #tpu.pipeline_mode<synchronous>, transform_indices = @transform_2, window_bounds = array<i64: 1, 8>}, {transform_indices = @transform_3, window_bounds = array<i64: 128, 8>}, {transform_indices = @transform_4, window_bounds = array<i64: 128, 8>}]} {
    %c0 = arith.constant 0 : index
    %c0_0 = arith.constant 0 : index
    %0 = vector.load %arg1[%c0, %c0_0] : memref<128x4xf32, #tpu.memory_space<vmem>>, vector<128x4xf32>
    %c0_1 = arith.constant 0 : index
    %c0_2 = arith.constant 0 : index
    %1 = vector.load %arg2[%c0_1, %c0_2] : memref<4x8xf32, #tpu.memory_space<vmem>>, vector<4x8xf32>
    %cst = arith.constant dense<0.000000e+00> : vector<128x8xf32>
    %2 = tpu.matmul %0, %1, %cst {dimension_numbers = #tpu.dot_dimension_numbers<[1], [0], [0], [1], [0, 0, 1, 1], [], []>} : vector<128x4xf32>, vector<4x8xf32>, vector<128x8xf32> -> vector<128x8xf32>
    %c0_3 = arith.constant 0 : index
    %c0_4 = arith.constant 0 : index
    %3 = vector.load %arg3[%c0_3, %c0_4] : memref<1x8xf32, #tpu.memory_space<vmem>>, vector<1x8xf32>
    %4 = vector.broadcast %3 : vector<1x8xf32> to vector<128x8xf32>
    %5 = arith.addf %2, %4 : vector<128x8xf32>
    %c0_5 = arith.constant 0 : index
    %c0_6 = arith.constant 0 : index
    %6 = vector.load %arg4[%c0_5, %c0_6] : memref<128x8xf32, #tpu.memory_space<vmem>>, vector<128x8xf32>
    %7 = arith.addf %5, %6 : vector<128x8xf32>
    %c0_7 = arith.constant 0 : index
    %c0_8 = arith.constant 0 : index
    %8 = vector.load %arg5[%c0_7, %c0_8] : memref<128x8xf32, #tpu.memory_space<vmem>>, vector<128x8xf32>
    tpu.vector_store %arg5[%c0_7, %c0_8], %7 {strides = array<i32>} : memref<128x8xf32, #tpu.memory_space<vmem>>, vector<128x8xf32>,
    return
  }
  func.func @transform_0(%arg0: i32) -> (i32, i32) {
    %c0_i32 = arith.constant 0 : i32
    %c0_i32_0 = arith.constant 0 : i32
    return %arg0, %c0_i32 : i32, i32
  }
  func.func @transform_1(%arg0: i32) -> (i32, i32) {
    %c0_i32 = arith.constant 0 : i32
    %c0_i32_0 = arith.constant 0 : i32
    %c0_i32_1 = arith.constant 0 : i32
    return %c0_i32, %c0_i32_0 : i32, i32
  }
  func.func @transform_2(%arg0: i32) -> (i32, i32) {
    %c0_i32 = arith.constant 0 : i32
    %c0_i32_0 = arith.constant 0 : i32
    %c0_i32_1 = arith.constant 0 : i32
    return %c0_i32, %c0_i32_0 : i32, i32
  }
  func.func @transform_3(%arg0: i32) -> (i32, i32) {
    %c0_i32 = arith.constant 0 : i32
    %c0_i32_0 = arith.constant 0 : i32
    return %arg0, %c0_i32 : i32, i32
  }
  func.func @transform_4(%arg0: i32) -> (i32, i32) {
    %c0_i32 = arith.constant 0 : i32
    %c0_i32_0 = arith.constant 0 : i32
    return %arg0, %c0_i32 : i32, i32
  }
}

module attributes {stable_mosaic.version = 11 : i64} {
  func.func @_mha_kernel(%arg0: i32, %arg1: memref<1x4x16xf32, #tpu.memory_space<vmem>>, %arg2: memref<2x16x24xf32, #tpu.memory_space<vmem>>, %arg3: memref<2x1x24xf32, #tpu.memory_space<vmem>>, %arg4: memref<2x8x16xf32, #tpu.memory_space<vmem>>, %arg5: memref<1x16xf32, #tpu.memory_space<vmem>>, %arg6: memref<1x4x16xf32, #tpu.memory_space<vmem>>, %arg7: memref<1x4x4xf32, #tpu.memory_space<vmem>>) attributes {dimension_semantics = [#tpu.dimension_semantics<parallel>], iteration_bounds = array<i64: 8>, scalar_prefetch = 0 : i64, scratch_operands = 0 : i64, tpu.core_type = #tpu.core_type<tc>, window_params = [{transform_indices = @transform_0, window_bounds = array<i64: 1, 4, 16>}, {pipeline_mode = #tpu.pipeline_mode<synchronous>, transform_indices = @transform_1, window_bounds = array<i64: 2, 16, 24>}, {pipeline_mode = #tpu.pipeline_mode<synchronous>, transform_indices = @transform_2, window_bounds = array<i64: 2, 1, 24>}, {pipeline_mode = #tpu.pipeline_mode<synchronous>, transform_indices = @transform_3, window_bounds = array<i64: 2, 8, 16>}, {pipeline_mode = #tpu.pipeline_mode<synchronous>, transform_indices = @transform_4, window_bounds = array<i64: 1, 16>}, {transform_indices = @transform_5, window_bounds = array<i64: 1, 4, 16>}, {transform_indices = @transform_6, window_bounds = array<i64: 1, 4, 4>}]} {
    %c0 = arith.constant 0 : index
    %c0_0 = arith.constant 0 : index
    %c0_1 = arith.constant 0 : index
    %0 = vector.load %arg1[%c0, %c0_0, %c0_1] : memref<1x4x16xf32, #tpu.memory_space<vmem>>, vector<1x4x16xf32>
    %1 = vector.shape_cast %0 : vector<1x4x16xf32> to vector<4x16xf32>
    %2 = vector.shape_cast %1 : vector<4x16xf32> to vector<1x4x16xf32>
    %3 = vector.shape_cast %2 : vector<1x4x16xf32> to vector<1x4x16xf32>
    %4 = vector.broadcast %3 : vector<1x4x16xf32> to vector<2x4x16xf32>
    %c0_2 = arith.constant 0 : index
    %c0_3 = arith.constant 0 : index
    %c0_4 = arith.constant 0 : index
    %5 = vector.load %arg2[%c0_2, %c0_3, %c0_4] : memref<2x16x24xf32, #tpu.memory_space<vmem>>, vector<2x16x24xf32>
    %cst = arith.constant dense<0.000000e+00> : vector<2x4x24xf32>
    %6 = tpu.matmul %4, %5, %cst {dimension_numbers = #tpu.dot_dimension_numbers<[2], [1], [1], [2], [0, 0, 0, 1, 1, 2], [0], [0]>} : vector<2x4x16xf32>, vector<2x16x24xf32>, vector<2x4x24xf32> -> vector<2x4x24xf32>
    %c0_5 = arith.constant 0 : index
    %c0_6 = arith.constant 0 : index
    %c0_7 = arith.constant 0 : index
    %7 = vector.load %arg3[%c0_5, %c0_6, %c0_7] : memref<2x1x24xf32, #tpu.memory_space<vmem>>, vector<2x1x24xf32>
    %8 = vector.broadcast %7 : vector<2x1x24xf32> to vector<2x4x24xf32>
    %9 = arith.addf %6, %8 : vector<2x4x24xf32>
    %10 = vector.extract_strided_slice %9 {offsets = [0, 0, 0], sizes = [2, 4, 8], strides = [1, 1, 1]} : vector<2x4x24xf32> to vector<2x4x8xf32>
    %cst_8 = arith.constant 0.353553385 : f32
    %11 = vector.broadcast %cst_8 : f32 to vector<2x4x8xf32>
    %12 = arith.mulf %10, %11 : vector<2x4x8xf32>
    %13 = vector.extract_strided_slice %9 {offsets = [0, 0, 8], sizes = [2, 4, 8], strides = [1, 1, 1]} : vector<2x4x24xf32> to vector<2x4x8xf32>
    %14 = vector.extract_strided_slice %9 {offsets = [0, 0, 16], sizes = [2, 4, 8], strides = [1, 1, 1]} : vector<2x4x24xf32> to vector<2x4x8xf32>
    %cst_9 = arith.constant dense<0.000000e+00> : vector<2x4x4xf32>
    %15 = tpu.matmul %12, %13, %cst_9 {dimension_numbers = #tpu.dot_dimension_numbers<[2], [2], [1], [1], [0, 0, 0, 1, 1, 1], [0], [0]>} : vector<2x4x8xf32>, vector<2x4x8xf32>, vector<2x4x4xf32> -> vector<2x4x4xf32>
    %cst_10 = arith.constant dense<0xFF800000> : vector<2x4xf32>
    %16 = vector.multi_reduction <maximumf>, %15, %cst_10 [2] : vector<2x4x4xf32> to vector<2x4xf32>
    %17 = vector.shape_cast %16 : vector<2x4xf32> to vector<2x4x1xf32>
    %18 = vector.broadcast %17 : vector<2x4x1xf32> to vector<2x4x4xf32>
    %19 = arith.subf %15, %18 : vector<2x4x4xf32>
    %20 = math.exp %19 : vector<2x4x4xf32>
    %cst_11 = arith.constant dense<0.000000e+00> : vector<2x4xf32>
    %21 = vector.multi_reduction <add>, %20, %cst_11 [2] : vector<2x4x4xf32> to vector<2x4xf32>
    %22 = vector.shape_cast %21 : vector<2x4xf32> to vector<2x4x1xf32>
    %23 = tpu.reciprocal %22 {approx = true} : vector<2x4x1xf32> -> vector<2x4x1xf32>
    %24 = vector.broadcast %23 : vector<2x4x1xf32> to vector<2x4x4xf32>
    %25 = arith.mulf %20, %24 : vector<2x4x4xf32>
    %cst_12 = arith.constant dense<0.000000e+00> : vector<2x4x8xf32>
    %26 = tpu.matmul %25, %14, %cst_12 {dimension_numbers = #tpu.dot_dimension_numbers<[2], [1], [1], [2], [0, 0, 0, 1, 1, 2], [0], [0]>} : vector<2x4x4xf32>, vector<2x4x8xf32>, vector<2x4x8xf32> -> vector<2x4x8xf32>
    %c0_13 = arith.constant 0 : index
    %c0_14 = arith.constant 0 : index
    %c0_15 = arith.constant 0 : index
    %27 = vector.load %arg4[%c0_13, %c0_14, %c0_15] : memref<2x8x16xf32, #tpu.memory_space<vmem>>, vector<2x8x16xf32>
    %cst_16 = arith.constant dense<0.000000e+00> : vector<2x4x16xf32>
    %28 = tpu.matmul %26, %27, %cst_16 {dimension_numbers = #tpu.dot_dimension_numbers<[2], [1], [1], [2], [0, 0, 0, 1, 1, 2], [0], [0]>} : vector<2x4x8xf32>, vector<2x8x16xf32>, vector<2x4x16xf32> -> vector<2x4x16xf32>
    %cst_17 = arith.constant dense<0.000000e+00> : vector<4x16xf32>
    %29 = vector.multi_reduction <add>, %28, %cst_17 [0] : vector<2x4x16xf32> to vector<4x16xf32>
    %c0_18 = arith.constant 0 : index
    %c0_19 = arith.constant 0 : index
    %30 = vector.load %arg5[%c0_18, %c0_19] : memref<1x16xf32, #tpu.memory_space<vmem>>, vector<1x16xf32>
    %31 = vector.broadcast %30 : vector<1x16xf32> to vector<4x16xf32>
    %32 = arith.addf %29, %31 : vector<4x16xf32>
    %33 = arith.addf %32, %1 : vector<4x16xf32>
    %c0_20 = arith.constant 0 : index
    %c0_21 = arith.constant 0 : index
    %c0_22 = arith.constant 0 : index
    %34 = vector.load %arg6[%c0_20, %c0_21, %c0_22] : memref<1x4x16xf32, #tpu.memory_space<vmem>>, vector<1x4x16xf32>
    %35 = vector.shape_cast %34 : vector<1x4x16xf32> to vector<4x16xf32>
    %36 = vector.shape_cast %33 : vector<4x16xf32> to vector<1x4x16xf32>
    tpu.vector_store %arg6[%c0_20, %c0_21, %c0_22], %36 {strides = array<i32>} : memref<1x4x16xf32, #tpu.memory_space<vmem>>, vector<1x4x16xf32>,
    %cst_23 = arith.constant dense<0.000000e+00> : vector<4x4xf32>
    %37 = vector.multi_reduction <add>, %25, %cst_23 [0] : vector<2x4x4xf32> to vector<4x4xf32>
    %cst_24 = arith.constant 2.000000e+00 : f32
    %38 = vector.broadcast %cst_24 : f32 to vector<4x4xf32>
    %39 = arith.divf %37, %38 : vector<4x4xf32>
    %c0_25 = arith.constant 0 : index
    %c0_26 = arith.constant 0 : index
    %c0_27 = arith.constant 0 : index
    %40 = vector.load %arg7[%c0_25, %c0_26, %c0_27] : memref<1x4x4xf32, #tpu.memory_space<vmem>>, vector<1x4x4xf32>
    %41 = vector.shape_cast %40 : vector<1x4x4xf32> to vector<4x4xf32>
    %42 = vector.shape_cast %39 : vector<4x4xf32> to vector<1x4x4xf32>
    tpu.vector_store %arg7[%c0_25, %c0_26, %c0_27], %42 {strides = array<i32>} : memref<1x4x4xf32, #tpu.memory_space<vmem>>, vector<1x4x4xf32>,
    return
  }
  func.func @transform_0(%arg0: i32) -> (i32, i32, i32) {
    %c0_i32 = arith.constant 0 : i32
    %c0_i32_0 = arith.constant 0 : i32
    %c0_i32_1 = arith.constant 0 : i32
    return %arg0, %c0_i32, %c0_i32_0 : i32, i32, i32
  }
  func.func @transform_1(%arg0: i32) -> (i32, i32, i32) {
    %c0_i32 = arith.constant 0 : i32
    %c0_i32_0 = arith.constant 0 : i32
    %c0_i32_1 = arith.constant 0 : i32
    %c0_i32_2 = arith.constant 0 : i32
    return %c0_i32, %c0_i32_0, %c0_i32_1 : i32, i32, i32
  }
  func.func @transform_2(%arg0: i32) -> (i32, i32, i32) {
    %c0_i32 = arith.constant 0 : i32
    %c0_i32_0 = arith.constant 0 : i32
    %c0_i32_1 = arith.constant 0 : i32
    %c0_i32_2 = arith.constant 0 : i32
    return %c0_i32, %c0_i32_0, %c0_i32_1 : i32, i32, i32
  }
  func.func @transform_3(%arg0: i32) -> (i32, i32, i32) {
    %c0_i32 = arith.constant 0 : i32
    %c0_i32_0 = arith.constant 0 : i32
    %c0_i32_1 = arith.constant 0 : i32
    %c0_i32_2 = arith.constant 0 : i32
    return %c0_i32, %c0_i32_0, %c0_i32_1 : i32, i32, i32
  }
  func.func @transform_4(%arg0: i32) -> (i32, i32) {
    %c0_i32 = arith.constant 0 : i32
    %c0_i32_0 = arith.constant 0 : i32
    %c0_i32_1 = arith.constant 0 : i32
    return %c0_i32, %c0_i32_0 : i32, i32
  }
  func.func @transform_5(%arg0: i32) -> (i32, i32, i32) {
    %c0_i32 = arith.constant 0 : i32
    %c0_i32_0 = arith.constant 0 : i32
    %c0_i32_1 = arith.constant 0 : i32
    return %arg0, %c0_i32, %c0_i32_0 : i32, i32, i32
  }
  func.func @transform_6(%arg0: i32) -> (i32, i32, i32) {
    %c0_i32 = arith.constant 0 : i32
    %c0_i32_0 = arith.constant 0 : i32
    %c0_i32_1 = arith.constant 0 : i32
    return %arg0, %c0_i32, %c0_i32_0 : i32, i32, i32
  }
}

</mosaic_0001>

<llo_original>
// kernel: galr_forward.9
$region0: #{galr_forward.9}
  #allocation0 [shape = 'u32[]', space=smem, size = 0x4, offset = 0x4, fixed_abs, tag = 'smem constant byte address 0x4 - core index']
  #allocation1 [shape = 'u32[144,128]{1,0:T(1,128)}', space=vmem, size = 0x12000, scoped, tag = 'internal scratch']
  %s0 = inlined_call_operand.vmem [shape: f32[2,4,16,8], index: 0, kind: input, shape index: {}]
  %s1 = inlined_call_operand.vmem [shape: f32[8,4], index: 1, kind: input, shape index: {}]
  %s2 = inlined_call_operand.vmem [shape: f32[1,4], index: 2, kind: input, shape index: {}]
  %s3 = inlined_call_operand.vmem [shape: f32[16,1], index: 3, kind: input, shape index: {}]
  %s4 = inlined_call_operand.vmem [shape: f32[16,1], index: 4, kind: input, shape index: {}]
  %s5 = inlined_call_operand.vmem [shape: f32[4,16,4], index: 5, kind: input, shape index: {}]
  %s6 = inlined_call_operand.vmem [shape: f32[2,4,16,4], index: 6, kind: output, shape index: {}]
  %s7 = sld [smem:[#allocation0]]
  $region57: #{galr_forward.9} parent=0
    _
  %s9 = ssub.s32 1, %s7
  %s10 = scalar_select 0, %s9, %s7
  loop: start=0, step=1, limit=4
  $region2: #{galr_forward.9} parent=0 // loop_pre_header
    _
  $region3: #{galr_forward.9} parent=0 // loop_header
    %s12 = sphi 0, %s16
    %p13 = scmp.ge.s32.totalorder %s12, 4
    %s22 = sphi 0, %s24
    %s25 = sphi 0, %s22
    %s26 = sphi 0, %s25
    %s42 = sphi 0, %s26
    %s46 = sphi 0, %s46
    %s48 = sphi 0, %s46
    %s49 = sphi 0, %s48
    %s63 = sphi 0, %s49
    %s67 = sphi 0, %s67
    %s69 = sphi 0, %s67
    %s70 = sphi 0, %s69
    %s84 = sphi 0, %s70
    %s88 = sphi 0, %s88
    %s90 = sphi 0, %s88
    %s91 = sphi 0, %s90
    %s105 = sphi 0, %s91
    %s109 = sphi 0, %s109
    %s111 = sphi 0, %s109
    %s112 = sphi 0, %s111
    %s126 = sphi 0, %s112
    %s130 = sphi 0, %s130
    %s132 = sphi 0, %s130
    %s133 = sphi 0, %s132
    %s147 = sphi 0, %s133
    %s153 = sphi 0, %s155
    %s156 = sphi 0, %s153
    %s157 = sphi 0, %s156
    %s173 = sphi 0, %s157
  $region4: #{galr_forward.9} parent=0 // loop_header_branch
    %15 = sbr.rel (%p13) target = $region8
  $region5: #{galr_forward.9} parent=0 // loop_body
    %s17 = ssub.s32 %s12, 1
    %s18 = ssub.s32 %s12, 2
    %s19 = sadd.s32 %s12, 1
    %s20 = ssub.s32 %s12, %s19
    %p21 = scmp.eq.s32.totalorder %s20, 0
    %s23 = sadd.s32 %s22, 1
    %s24 = scalar_select %p21, %s22, %s23
    %p27 = pneg %p21
    %p28 = scmp.eq.s32.totalorder %s12, 1
    %p29 = por %p27, %p28
    %p30 = scmp.ne.s32.totalorder %s22, %s25
    %p31 = scmp.eq.s32.totalorder %s12, 0
    %p32 = por %p30, %p31
    %p33 = scmp.ne.s32.totalorder %s22, %s25
    %p34 = scmp.eq.s32.totalorder %s17, 1
    %p35 = por %p33, %p34
    %p36 = scmp.ne.s32.totalorder %s25, %s26
    %p37 = scmp.eq.s32.totalorder %s17, 0
    %p38 = por %p36, %p37
    %p39 = scmp.ne.s32.totalorder %s25, %s26
    %p40 = scmp.eq.s32.totalorder %s18, 1
    %p41 = por %p39, %p40
    %p43 = scmp.ne.s32.totalorder %s26, %s42
    %p44 = scmp.eq.s32.totalorder %s18, 0
    %p45 = por %p43, %p44
    %s47 = sadd.s32 %s46, 1
    %p50 = scmp.eq.s32.totalorder %s12, 1
    %p51 = scmp.ne.s32.totalorder %s46, %s48
    %p52 = scmp.eq.s32.totalorder %s12, 0
    %p53 = por %p51, %p52
    %p54 = scmp.ne.s32.totalorder %s46, %s48
    %p55 = scmp.eq.s32.totalorder %s17, 1
    %p56 = por %p54, %p55
    %p57 = scmp.ne.s32.totalorder %s48, %s49
    %p58 = scmp.eq.s32.totalorder %s17, 0
    %p59 = por %p57, %p58
    %p60 = scmp.ne.s32.totalorder %s48, %s49
    %p61 = scmp.eq.s32.totalorder %s18, 1
    %p62 = por %p60, %p61
    %p64 = scmp.ne.s32.totalorder %s49, %s63
    %p65 = scmp.eq.s32.totalorder %s18, 0
    %p66 = por %p64, %p65
    %s68 = sadd.s32 %s67, 1
    %p71 = scmp.eq.s32.totalorder %s12, 1
    %p72 = scmp.ne.s32.totalorder %s67, %s69
    %p73 = scmp.eq.s32.totalorder %s12, 0
    %p74 = por %p72, %p73
    %p75 = scmp.ne.s32.totalorder %s67, %s69
    %p76 = scmp.eq.s32.totalorder %s17, 1
    %p77 = por %p75, %p76
    %p78 = scmp.ne.s32.totalorder %s69, %s70
    %p79 = scmp.eq.s32.totalorder %s17, 0
    %p80 = por %p78, %p79
    %p81 = scmp.ne.s32.totalorder %s69, %s70
    %p82 = scmp.eq.s32.totalorder %s18, 1
    %p83 = por %p81, %p82
    %p85 = scmp.ne.s32.totalorder %s70, %s84
    %p86 = scmp.eq.s32.totalorder %s18, 0
    %p87 = por %p85, %p86
    %s89 = sadd.s32 %s88, 1
    %p92 = scmp.eq.s32.totalorder %s12, 1
    %p93 = scmp.ne.s32.totalorder %s88, %s90
    %p94 = scmp.eq.s32.totalorder %s12, 0
    %p95 = por %p93, %p94
    %p96 = scmp.ne.s32.totalorder %s88, %s90
    %p97 = scmp.eq.s32.totalorder %s17, 1
    %p98 = por %p96, %p97
    %p99 = scmp.ne.s32.totalorder %s90, %s91
    %p100 = scmp.eq.s32.totalorder %s17, 0
    %p101 = por %p99, %p100
    %p102 = scmp.ne.s32.totalorder %s90, %s91
    %p103 = scmp.eq.s32.totalorder %s18, 1
    %p104 = por %p102, %p103
    %p106 = scmp.ne.s32.totalorder %s91, %s105
    %p107 = scmp.eq.s32.totalorder %s18, 0
    %p108 = por %p106, %p107
    %s110 = sadd.s32 %s109, 1
    %p113 = scmp.eq.s32.totalorder %s12, 1
    %p114 = scmp.ne.s32.totalorder %s109, %s111
    %p115 = scmp.eq.s32.totalorder %s12, 0
    %p116 = por %p114, %p115
    %p117 = scmp.ne.s32.totalorder %s109, %s111
    %p118 = scmp.eq.s32.totalorder %s17, 1
    %p119 = por %p117, %p118
    %p120 = scmp.ne.s32.totalorder %s111, %s112
    %p121 = scmp.eq.s32.totalorder %s17, 0
    %p122 = por %p120, %p121
    %p123 = scmp.ne.s32.totalorder %s111, %s112
    %p124 = scmp.eq.s32.totalorder %s18, 1
    %p125 = por %p123, %p124
    %p127 = scmp.ne.s32.totalorder %s112, %s126
    %p128 = scmp.eq.s32.totalorder %s18, 0
    %p129 = por %p127, %p128
    %s131 = sadd.s32 %s130, 1
    %p134 = scmp.eq.s32.totalorder %s12, 1
    %p135 = scmp.ne.s32.totalorder %s130, %s132
    %p136 = scmp.eq.s32.totalorder %s12, 0
    %p137 = por %p135, %p136
    %p138 = scmp.ne.s32.totalorder %s130, %s132
    %p139 = scmp.eq.s32.totalorder %s17, 1
    %p140 = por %p138, %p139
    %p141 = scmp.ne.s32.totalorder %s132, %s133
    %p142 = scmp.eq.s32.totalorder %s17, 0
    %p143 = por %p141, %p142
    %p144 = scmp.ne.s32.totalorder %s132, %s133
    %p145 = scmp.eq.s32.totalorder %s18, 1
    %p146 = por %p144, %p145
    %p148 = scmp.ne.s32.totalorder %s133, %s147
    %p149 = scmp.eq.s32.totalorder %s18, 0
    %p150 = por %p148, %p149
    %s151 = ssub.s32 %s12, %s19
    %p152 = scmp.eq.s32.totalorder %s151, 0
    %s154 = sadd.s32 %s153, 1
    %s155 = scalar_select %p152, %s153, %s154
    %p158 = pneg %p152
    %p159 = scmp.eq.s32.totalorder %s12, 1
    %p160 = por %p158, %p159
    %p161 = scmp.ne.s32.totalorder %s153, %s156
    %p162 = scmp.eq.s32.totalorder %s12, 0
    %p163 = por %p161, %p162
    %p164 = scmp.ne.s32.totalorder %s153, %s156
    %p165 = scmp.eq.s32.totalorder %s17, 1
    %p166 = por %p164, %p165
    %p167 = scmp.ne.s32.totalorder %s156, %s157
    %p168 = scmp.eq.s32.totalorder %s17, 0
    %p169 = por %p167, %p168
    %p170 = scmp.ne.s32.totalorder %s156, %s157
    %p171 = scmp.eq.s32.totalorder %s18, 1
    %p172 = por %p170, %p171
    %p174 = scmp.ne.s32.totalorder %s157, %s173
    %p175 = scmp.eq.s32.totalorder %s18, 0
    %p176 = por %p174, %p175
    %p177 = scmp.le.s32.totalorder 1, %s12
    %p178 = scmp.lt.s32.totalorder %s12, 3
    %p179 = pnand %p177, %p178
    %p180 = pneg %p179
    // Predicated region
    $region9: #{galr_forward.9} parent=5 // pred_check
      _
    $region10: #{galr_forward.9} parent=5 // pred_check_branch
      %182 = sbr.rel (%p179) target = $region12
    $region11: #{galr_forward.9} parent=5 // pred_region
      %s183 = ssub.s32 %s12, 1
      // Predicated region
      $region13: #{galr_forward.9} parent=11 // pred_check
        %p184 = pneg %p59
      $region14: #{galr_forward.9} parent=11 // pred_check_branch
        %186 = sbr.rel (%p184) target = $region16
      $region15: #{galr_forward.9} parent=11 // pred_region
        _
      $region16: #{galr_forward.9} parent=11 // pred_fallthru
        _
      // Predicated region
      $region17: #{galr_forward.9} parent=11 // pred_check
        %p187 = pneg %p80
      $region18: #{galr_forward.9} parent=11 // pred_check_branch
        %189 = sbr.rel (%p187) target = $region20
      $region19: #{galr_forward.9} parent=11 // pred_region
        _
      $region20: #{galr_forward.9} parent=11 // pred_fallthru
        _
      // Predicated region
      $region21: #{galr_forward.9} parent=11 // pred_check
        %p190 = pneg %p101
      $region22: #{galr_forward.9} parent=11 // pred_check_branch
        %192 = sbr.rel (%p190) target = $region24
      $region23: #{galr_forward.9} parent=11 // pred_region
        _
      $region24: #{galr_forward.9} parent=11 // pred_fallthru
        _
      // Predicated region
      $region25: #{galr_forward.9} parent=11 // pred_check
        %p193 = pneg %p122
      $region26: #{galr_forward.9} parent=11 // pred_check_branch
        %195 = sbr.rel (%p193) target = $region28
      $region27: #{galr_forward.9} parent=11 // pred_region
        _
      $region28: #{galr_forward.9} parent=11 // pred_fallthru
        _
      // Predicated region
      $region29: #{galr_forward.9} parent=11 // pred_check
        %p196 = pneg %p143
      $region30: #{galr_forward.9} parent=11 // pred_check_branch
        %198 = sbr.rel (%p196) target = $region32
      $region31: #{galr_forward.9} parent=11 // pred_region
        _
      $region32: #{galr_forward.9} parent=11 // pred_fallthru
        _
    $region12: #{galr_forward.9} parent=5 // pred_fallthru
      _
    %p199 = scmp.lt.s32.totalorder %s12, 2
    // Predicated region
    $region33: #{galr_forward.9} parent=5 // pred_check
      %p200 = pneg %p199
    $region34: #{galr_forward.9} parent=5 // pred_check_branch
      %202 = sbr.rel (%p200) target = $region36
    $region35: #{galr_forward.9} parent=5 // pred_region
      // Predicated region
      $region37: #{galr_forward.9} parent=35 // pred_check
        %p203 = pneg %p32
      $region38: #{galr_forward.9} parent=35 // pred_check_branch
        %205 = sbr.rel (%p203) target = $region40
      $region39: #{galr_forward.9} parent=35 // pred_region
        %p206 = scmp.lt.s32.totalorder %s12, 1
        %s207 = scalar_select %p206, %s12, 1
        %s208 = smul.addr %s207, 8
        %s209 = smul.addr %s208, 8
        %s210 = scalar_lea.vmem %s0, %s209
      $region40: #{galr_forward.9} parent=35 // pred_fallthru
        _
    $region36: #{galr_forward.9} parent=5 // pred_fallthru
      _
    %p211 = scmp.le.s32.totalorder 1, %s12
    %p212 = scmp.lt.s32.totalorder %s12, 3
    %p213 = pnand %p211, %p212
    %p214 = pneg %p213
    // Predicated region
    $region41: #{galr_forward.9} parent=5 // pred_check
      _
    $region42: #{galr_forward.9} parent=5 // pred_check_branch
      %216 = sbr.rel (%p213) target = $region44
    $region43: #{galr_forward.9} parent=5 // pred_region
      %s217 = ssub.s32 %s12, 1
      %p218 = scmp.lt.s32.totalorder %s17, 1
      %s219 = scalar_select %p218, %s17, 1
      %s220 = smul.addr %s219, 8
      %s221 = smul.addr %s220, 8
      %s222 = scalar_lea.vmem %s0, %s221
      %p223 = pneg %p38
      %p224 = pneg %p35
      %p225 = pneg %p59
      %p226 = pneg %p56
      %p227 = pneg %p80
      %p228 = pneg %p77
      %p229 = pneg %p101
      %p230 = pneg %p98
      %p231 = pneg %p122
      %p232 = pneg %p119
      %p233 = pneg %p143
      %p234 = pneg %p140
      %p235 = pneg %p169
      %p236 = pneg %p166
      %p237 = scmp.lt.s32.totalorder %s17, 1
      %s238 = scalar_select %p237, %s17, 1
      %s239 = smul.addr %s238, 8
      %s240 = smul.addr %s239, 8
      %s241 = scalar_lea.vmem %s6, %s240
      %p242 = scmp.lt.s32.totalorder %s17, 1
      %s243 = scalar_select %p242, %s17, 1
      %s244 = smul.addr %s243, 8
      %s245 = smul.addr %s244, 8
      %s246 = scalar_lea.vmem %s0, %s245
      %p247 = scmp.lt.s32.totalorder %s17, 1
      %s248 = scalar_select %p247, %s17, 1
      %s249 = smul.addr %s248, 8
      %s250 = smul.addr %s249, 8
      %s251 = scalar_lea.vmem %s6, %s250
      %v252 = vld [vmem:[%s246] sm:$0xff]
      %v253 = vld [vmem:[%s246 + $0x8] sm:$0xff]
      %v254 = vld [vmem:[%s246 + $0x10] sm:$0xff]
      %v255 = vld [vmem:[%s246 + $0x18] sm:$0xff]
      %v256 = vld [vmem:[%s246 + $0x20] sm:$0xff]
      %v257 = vld [vmem:[%s246 + $0x28] sm:$0xff]
      %v258 = vld [vmem:[%s246 + $0x30] sm:$0xff]
      %v259 = vld [vmem:[%s246 + $0x38] sm:$0xff]
      %v260 = vld [vmem:[%s1] sm:$0xff]
      %v261 = vld [vmem:[%s2] sm:$0x1]
      %v263 = vlaneseq
      %v264 = vshrl.u32 %v263, 7
      %v265 = vsub.s32 0, %v264
      %v266 = vrot.slane %v261, %v265
      %vm268 = vcmask 64512
      %v270 = vsel %vm268, %v252, 0
      %v273 = vsel %vm268, %v253, 0
      %v276 = vsel %vm268, %v254, 0
      %v279 = vsel %vm268, %v255, 0
      %v282 = vsel %vm268, %v256, 0
      %v285 = vsel %vm268, %v257, 0
      %v288 = vsel %vm268, %v258, 0
      %v291 = vsel %vm268, %v259, 0
      %293 = vmatprep.subr.mxu0 0.0
      %294 = vmatpush1.msra.mxu0 %v260
      %295 = vmatprep.subr.mxu0 0.0
      %296 = vmatpush1.msra.mxu0 0.0
      %297 = vmatprep.subr.mxu0 0.0
      %298 = vmatpush1.msra.mxu0 0.0
      %299 = vmatprep.subr.mxu0 0.0
      %300 = vmatpush1.msra.mxu0 0.0
      %301 = vmatprep.subr.mxu0 0.0
      %302 = vmatpush1.msra.mxu0 0.0
      %303 = vmatprep.subr.mxu0 0.0
      %304 = vmatpush1.msra.mxu0 0.0
      %305 = vmatprep.subr.mxu0 0.0
      %306 = vmatpush1.msra.mxu0 0.0
      %307 = vmatprep.subr.mxu0 0.0
      %308 = vmatpush1.msra.mxu0 0.0
      %309 = vmatprep.subr.mxu0 0.0
      %310 = vmatpush1.msra.mxu0 0.0
      %311 = vmatprep.subr.mxu0 0.0
      %312 = vmatpush1.msra.mxu0 0.0
      %313 = vmatprep.subr.mxu0 0.0
      %314 = vmatpush1.msra.mxu0 0.0
      %315 = vmatprep.subr.mxu0 0.0
      %316 = vmatpush1.msra.mxu0 0.0
      %317 = vmatprep.subr.mxu0 0.0
      %318 = vmatpush1.msra.mxu0 0.0
      %319 = vmatprep.subr.mxu0 0.0
      %320 = vmatpush1.msra.mxu0 0.0
      %321 = vmatprep.subr.mxu0 0.0
      %322 = vmatpush1.msra.mxu0 0.0
      %323 = vmatprep.subr.mxu0 0.0
      %324 = vmatpush1.msra.mxu0 0.0
      %325 = vmatprep.subr.mxu0 0.0
      %326 = vmatpush1.msra.mxu0 0.0
      %327 = vmatprep.subr.mxu0 0.0
      %328 = vmatpush1.msra.mxu0 0.0
      %329 = vmatprep.subr.mxu0 0.0
      %330 = vmatpush1.msra.mxu0 0.0
      %331 = vmatprep.subr.mxu0 0.0
      %332 = vmatpush1.msra.mxu0 0.0
      %333 = vmatprep.subr.mxu0 0.0
      %334 = vmatpush1.msra.mxu0 0.0
      %335 = vmatprep.subr.mxu0 0.0
      %336 = vmatpush1.msra.mxu0 0.0
      %337 = vmatprep.subr.mxu0 0.0
      %338 = vmatpush1.msra.mxu0 0.0
      %339 = vmatprep.subr.mxu0 0.0
      %340 = vmatpush1.msra.mxu0 0.0
      %341 = vmatprep.subr.mxu0 0.0
      %342 = vmatpush1.msra.mxu0 0.0
      %343 = vmatprep.subr.mxu0 0.0
      %344 = vmatpush1.msra.mxu0 0.0
      %345 = vmatprep.subr.mxu0 0.0
      %346 = vmatpush1.msra.mxu0 0.0
      %347 = vmatprep.subr.mxu0 0.0
      %348 = vmatpush1.msra.mxu0 0.0
      %349 = vmatprep.subr.mxu0 0.0
      %350 = vmatpush1.msra.mxu0 0.0
      %351 = vmatprep.subr.mxu0 0.0
      %352 = vmatpush1.msra.mxu0 0.0
      %353 = vmatprep.subr.mxu0 0.0
      %354 = vmatpush1.msra.mxu0 0.0
      %355 = vmatprep.subr.mxu0 0.0
      %356 = vmatpush1.msra.mxu0 0.0
      %357 = vmatprep.mubr.f32.mxu0 0.0
      %358 = vmatmul.mubr.f32.gmra.mrb[0].mxu0 %v270
      %v359 = vpop.f32.mrb[0].mxu0
      %v360 = vadd.f32 %v266, %v359
      %v361 = vpop.f32.mrb[0].mxu0
      %362 = vmatprep.mubr.f32.mxu0 0.0
      %363 = vmatmul.mubr.f32.gmra.mrb[0].mxu0 %v273
      %v364 = vpop.f32.mrb[0].mxu0
      %v365 = vadd.f32 %v266, %v364
      %v366 = vpop.f32.mrb[0].mxu0
      %367 = vmatprep.mubr.f32.mxu0 0.0
      %368 = vmatmul.mubr.f32.gmra.mrb[0].mxu0 %v276
      %v369 = vpop.f32.mrb[0].mxu0
      %v370 = vadd.f32 %v266, %v369
      %v371 = vpop.f32.mrb[0].mxu0
      %372 = vmatprep.mubr.f32.mxu0 0.0
      %373 = vmatmul.mubr.f32.gmra.mrb[0].mxu0 %v279
      %v374 = vpop.f32.mrb[0].mxu0
      %v375 = vadd.f32 %v266, %v374
      %v376 = vpop.f32.mrb[0].mxu0
      %377 = vmatprep.mubr.f32.mxu0 0.0
      %378 = vmatmul.mubr.f32.gmra.mrb[0].mxu0 %v282
      %v379 = vpop.f32.mrb[0].mxu0
      %v380 = vadd.f32 %v266, %v379
      %v381 = vpop.f32.mrb[0].mxu0
      %382 = vmatprep.mubr.f32.mxu0 0.0
      %383 = vmatmul.mubr.f32.gmra.mrb[0].mxu0 %v285
      %v384 = vpop.f32.mrb[0].mxu0
      %v385 = vadd.f32 %v266, %v384
      %v386 = vpop.f32.mrb[0].mxu0
      %387 = vmatprep.mubr.f32.mxu0 0.0
      %388 = vmatmul.mubr.f32.gmra.mrb[0].mxu0 %v288
      %v389 = vpop.f32.mrb[0].mxu0
      %v390 = vadd.f32 %v266, %v389
      %v391 = vpop.f32.mrb[0].mxu0
      %392 = vmatprep.mubr.f32.mxu0 0.0
      %393 = vmatmul.mubr.f32.gmra.mrb[0].mxu0 %v291
      %v394 = vpop.f32.mrb[0].mxu0
      %v395 = vadd.f32 %v266, %v394
      %v396 = vpop.f32.mrb[0].mxu0
      %397 = vdwg.mxu0
      %vm398 = vcmask 31744
      %v399 = vsel %vm398, %v360, 0.0
      %v400 = vsel %vm398, %v365, 0.0
      %v401 = vadd.f32 %v399, %v400
      %v402 = vrot.slane %v401, 4
      %v403 = vadd.f32 %v401, %v402
      %v404 = vrot.slane %v403, 2
      %v405 = vadd.f32 %v403, %v404
      %v406 = vrot.slane %v405, 1
      %v407 = vadd.f32 %v405, %v406
      %v408 = vsel %vm398, %v370, 0.0
      %v409 = vsel %vm398, %v375, 0.0
      %v410 = vadd.f32 %v408, %v409
      %v411 = vrot.slane %v410, 4
      %v412 = vadd.f32 %v410, %v411
      %v413 = vrot.slane %v412, 2
      %v414 = vadd.f32 %v412, %v413
      %v415 = vrot.slane %v414, 1
      %v416 = vadd.f32 %v414, %v415
      %v417 = vsel %vm398, %v380, 0.0
      %v418 = vsel %vm398, %v385, 0.0
      %v419 = vadd.f32 %v417, %v418
      %v420 = vrot.slane %v419, 4
      %v421 = vadd.f32 %v419, %v420
      %v422 = vrot.slane %v421, 2
      %v423 = vadd.f32 %v421, %v422
      %v424 = vrot.slane %v423, 1
      %v425 = vadd.f32 %v423, %v424
      %v426 = vsel %vm398, %v390, 0.0
      %v427 = vsel %vm398, %v395, 0.0
      %v428 = vadd.f32 %v426, %v427
      %v429 = vrot.slane %v428, 4
      %v430 = vadd.f32 %v428, %v429
      %v431 = vrot.slane %v430, 2
      %v432 = vadd.f32 %v430, %v431
      %v433 = vrot.slane %v432, 1
      %v434 = vadd.f32 %v432, %v433
      %v435 = vrcp.pop 16.0
      %v436 = vmul.f32 %v407, %v435
      %v437 = vmul.f32 %v416, %v435
      %v438 = vmul.f32 %v425, %v435
      %v439 = vmul.f32 %v434, %v435
      %v440 = vsub.f32 %v360, %v436
      %v441 = vsub.f32 %v365, %v436
      %v442 = vsub.f32 %v370, %v437
      %v443 = vsub.f32 %v375, %v437
      %v444 = vsub.f32 %v380, %v438
      %v445 = vsub.f32 %v385, %v438
      %v446 = vsub.f32 %v390, %v439
      %v447 = vsub.f32 %v395, %v439
      %v448 = vmul.f32 %v440, %v440
      %v449 = vmul.f32 %v441, %v441
      %v450 = vmul.f32 %v442, %v442
      %v451 = vmul.f32 %v443, %v443
      %v452 = vmul.f32 %v444, %v444
      %v453 = vmul.f32 %v445, %v445
      %v454 = vmul.f32 %v446, %v446
      %v455 = vmul.f32 %v447, %v447
      %v456 = vsel %vm398, %v448, 0.0
      %v457 = vsel %vm398, %v449, 0.0
      %v458 = vadd.f32 %v456, %v457
      %v459 = vrot.slane %v458, 4
      %v460 = vadd.f32 %v458, %v459
      %v461 = vrot.slane %v460, 2
      %v462 = vadd.f32 %v460, %v461
      %v463 = vrot.slane %v462, 1
      %v464 = vadd.f32 %v462, %v463
      %v465 = vsel %vm398, %v450, 0.0
      %v466 = vsel %vm398, %v451, 0.0
      %v467 = vadd.f32 %v465, %v466
      %v468 = vrot.slane %v467, 4
      %v469 = vadd.f32 %v467, %v468
      %v470 = vrot.slane %v469, 2
      %v471 = vadd.f32 %v469, %v470
      %v472 = vrot.slane %v471, 1
      %v473 = vadd.f32 %v471, %v472
      %v474 = vsel %vm398, %v452, 0.0
      %v475 = vsel %vm398, %v453, 0.0
      %v476 = vadd.f32 %v474, %v475
      %v477 = vrot.slane %v476, 4
      %v478 = vadd.f32 %v476, %v477
      %v479 = vrot.slane %v478, 2
      %v480 = vadd.f32 %v478, %v479
      %v481 = vrot.slane %v480, 1
      %v482 = vadd.f32 %v480, %v481
      %v483 = vsel %vm398, %v454, 0.0
      %v484 = vsel %vm398, %v455, 0.0
      %v485 = vadd.f32 %v483, %v484
      %v486 = vrot.slane %v485, 4
      %v487 = vadd.f32 %v485, %v486
      %v488 = vrot.slane %v487, 2
      %v489 = vadd.f32 %v487, %v488
      %v490 = vrot.slane %v489, 1
      %v491 = vadd.f32 %v489, %v490
      %v492 = vmul.f32 %v464, %v435
      %v493 = vmul.f32 %v473, %v435
      %v494 = vmul.f32 %v482, %v435
      %v495 = vmul.f32 %v491, %v435
      %v496 = vadd.f32 %v492, 1e-12
      %v497 = vadd.f32 %v493, 1e-12
      %v498 = vadd.f32 %v494, 1e-12
      %v499 = vadd.f32 %v495, 1e-12
      %v500 = vrsqrt.pop %v496
      %v501 = vrsqrt.pop %v497
      %v502 = vrsqrt.pop %v498
      %v503 = vrsqrt.pop %v499
      %v504 = vmul.f32 %v440, %v500
      %v505 = vmul.f32 %v441, %v500
      %v506 = vmul.f32 %v442, %v501
      %v507 = vmul.f32 %v443, %v501
      %v508 = vmul.f32 %v444, %v502
      %v509 = vmul.f32 %v445, %v502
      %v510 = vmul.f32 %v446, %v503
      %v511 = vmul.f32 %v447, %v503
      %v512 = vld [vmem:[%s3] sm:$0xff]
      %v513 = vld [vmem:[%s3 + $0x8] sm:$0xff]
      %515 = vset.pattern.permute.xlu0 0
      %516 = vperm.xlu0 %515, %v512
      %v517 = vpop.permute.xlu0 %516
      %520 = vset.pattern.permute.xlu0 0
      %521 = vperm.xlu0 %520, %v513
      %v522 = vpop.permute.xlu0 %521
      %v524 = vmul.f32 %v504, %v517
      %v525 = vmul.f32 %v505, %v522
      %v526 = vmul.f32 %v506, %v517
      %v527 = vmul.f32 %v507, %v522
      %v528 = vmul.f32 %v508, %v517
      %v529 = vmul.f32 %v509, %v522
      %v530 = vmul.f32 %v510, %v517
      %v531 = vmul.f32 %v511, %v522
      %v532 = vld [vmem:[%s4] sm:$0xff]
      %v533 = vld [vmem:[%s4 + $0x8] sm:$0xff]
      %535 = vset.pattern.permute.xlu0 0
      %536 = vperm.xlu0 %535, %v532
      %v537 = vpop.permute.xlu0 %536
      %540 = vset.pattern.permute.xlu0 0
      %541 = vperm.xlu0 %540, %v533
      %v542 = vpop.permute.xlu0 %541
      %v544 = vadd.f32 %v524, %v537
      %v545 = vadd.f32 %v525, %v542
      %v546 = vadd.f32 %v526, %v537
      %v547 = vadd.f32 %v527, %v542
      %v548 = vadd.f32 %v528, %v537
      %v549 = vadd.f32 %v529, %v542
      %v550 = vadd.f32 %v530, %v537
      %v551 = vadd.f32 %v531, %v542
      %v552 = vld [vmem:[%s5] sm:$0xff]
      %v553 = vld [vmem:[%s5 + $0x8] sm:$0xff]
      %v554 = vld [vmem:[%s5 + $0x10] sm:$0xff]
      %v555 = vld [vmem:[%s5 + $0x18] sm:$0xff]
      %v556 = vld [vmem:[%s5 + $0x20] sm:$0xff]
      %v557 = vld [vmem:[%s5 + $0x28] sm:$0xff]
      %v558 = vld [vmem:[%s5 + $0x30] sm:$0xff]
      %v559 = vld [vmem:[%s5 + $0x38] sm:$0xff]
      %v560 = vadd.f32 %v544, %v552
      %v561 = vadd.f32 %v545, %v553
      %v562 = vadd.f32 %v546, %v554
      %v563 = vadd.f32 %v547, %v555
      %v564 = vadd.f32 %v548, %v556
      %v565 = vadd.f32 %v549, %v557
      %v566 = vadd.f32 %v550, %v558
      %v567 = vadd.f32 %v551, %v559
      %568 = vst.msk [vmem:[%s251] sm:$0xff] %vm398, %v560
      %569 = vst.msk [vmem:[%s251 + $0x8] sm:$0xff] %vm398, %v561
      %570 = vst.msk [vmem:[%s251 + $0x10] sm:$0xff] %vm398, %v562
      %571 = vst.msk [vmem:[%s251 + $0x18] sm:$0xff] %vm398, %v563
      %572 = vst.msk [vmem:[%s251 + $0x20] sm:$0xff] %vm398, %v564
      %573 = vst.msk [vmem:[%s251 + $0x28] sm:$0xff] %vm398, %v565
      %574 = vst.msk [vmem:[%s251 + $0x30] sm:$0xff] %vm398, %v566
      %575 = vst.msk [vmem:[%s251 + $0x38] sm:$0xff] %vm398, %v567
      %p576 = scmp.lt.s32.totalorder %s17, 1
      %s577 = scalar_select %p576, %s17, 1
      %s578 = smul.addr %s577, 8
      %s579 = smul.addr %s578, 8
      %s580 = scalar_lea.vmem %s6, %s579
      // Predicated region
      $region45: #{galr_forward.9} parent=43 // pred_check
        %p581 = pneg %p166
      $region46: #{galr_forward.9} parent=43 // pred_check_branch
        %583 = sbr.rel (%p581) target = $region48
      $region47: #{galr_forward.9} parent=43 // pred_region
        _
      $region48: #{galr_forward.9} parent=43 // pred_fallthru
        _
    $region44: #{galr_forward.9} parent=5 // pred_fallthru
      _
    %p584 = scmp.le.s32.totalorder 2, %s12
    // Predicated region
    $region49: #{galr_forward.9} parent=5 // pred_check
      %p585 = pneg %p584
    $region50: #{galr_forward.9} parent=5 // pred_check_branch
      %587 = sbr.rel (%p585) target = $region52
    $region51: #{galr_forward.9} parent=5 // pred_region
      %s588 = ssub.s32 %s12, 2
      // Predicated region
      $region53: #{galr_forward.9} parent=51 // pred_check
        %p589 = pneg %p172
      $region54: #{galr_forward.9} parent=51 // pred_check_branch
        %591 = sbr.rel (%p589) target = $region56
      $region55: #{galr_forward.9} parent=51 // pred_region
        %p592 = scmp.lt.s32.totalorder %s18, 1
        %s593 = scalar_select %p592, %s18, 1
        %s594 = smul.addr %s593, 8
        %s595 = smul.addr %s594, 8
        %s596 = scalar_lea.vmem %s6, %s595
      $region56: #{galr_forward.9} parent=51 // pred_fallthru
        _
    $region52: #{galr_forward.9} parent=5 // pred_fallthru
      _
  $region6: #{galr_forward.9} parent=0 // loop_footer
    %s16 = sadd.s32 1, %s12
  $region7: #{galr_forward.9} parent=0 // loop_footer_branch
    %11 = sbr.rel target = $region3
  $region8: #{galr_forward.9} parent=0 // loop_exit
    _

// kernel: galr_forward.8
$region0: #{galr_forward.8}
  #allocation0 [shape = 'u32[]', space=smem, size = 0x4, offset = 0x4, fixed_abs, tag = 'smem constant byte address 0x4 - core index']
  #allocation1 [shape = 'u32[144,128]{1,0:T(1,128)}', space=vmem, size = 0x12000, scoped, tag = 'internal scratch']
  #allocation2 [shape = 'f32[8,8,64]{2,1,0:T(8,128)}', space=vmem, size = 0x8000, scoped, tag = 'scratch operand']
  #allocation3 [shape = 'f32[8,8,16]{2,1,0:T(8,128)}', space=vmem, size = 0x8000, scoped, tag = 'scratch operand']
  %s0 = inlined_call_operand.vmem [shape: f32[8,8,16], index: 0, kind: input, shape index: {}]
  %s1 = inlined_call_operand.vmem [shape: f32[16,64], index: 1, kind: input, shape index: {}]
  %s2 = inlined_call_operand.vmem [shape: f32[16,64], index: 2, kind: input, shape index: {}]
  %s3 = inlined_call_operand.vmem [shape: f32[1,64], index: 3, kind: input, shape index: {}]
  %s4 = inlined_call_operand.vmem [shape: f32[16,16], index: 4, kind: input, shape index: {}]
  %s5 = inlined_call_operand.vmem [shape: f32[1,16], index: 5, kind: input, shape index: {}]
  %s6 = inlined_call_operand.vmem [shape: f32[8,8,16], index: 6, kind: output, shape index: {}]
  %s7 = sld [smem:[#allocation0]]
  $region34: #{galr_forward.8} parent=0
    _
  %s9 = ssub.s32 1, %s7
  %s10 = scalar_select 0, %s9, %s7
  // Predicated region
  $region2: #{galr_forward.8} parent=0 // pred_check
    _
  $region3: #{galr_forward.8} parent=0 // pred_check_branch
    %12 = sbr.rel (0) target = $region5
  $region4: #{galr_forward.8} parent=0 // pred_region
    _
  $region5: #{galr_forward.8} parent=0 // pred_fallthru
    _
  // Predicated region
  $region6: #{galr_forward.8} parent=0 // pred_check
    _
  $region7: #{galr_forward.8} parent=0 // pred_check_branch
    %14 = sbr.rel (0) target = $region9
  $region8: #{galr_forward.8} parent=0 // pred_region
    _
  $region9: #{galr_forward.8} parent=0 // pred_fallthru
    _
  // Predicated region
  $region10: #{galr_forward.8} parent=0 // pred_check
    _
  $region11: #{galr_forward.8} parent=0 // pred_check_branch
    %16 = sbr.rel (0) target = $region13
  $region12: #{galr_forward.8} parent=0 // pred_region
    _
  $region13: #{galr_forward.8} parent=0 // pred_fallthru
    _
  // Predicated region
  $region14: #{galr_forward.8} parent=0 // pred_check
    _
  $region15: #{galr_forward.8} parent=0 // pred_check_branch
    %18 = sbr.rel (0) target = $region17
  $region16: #{galr_forward.8} parent=0 // pred_region
    _
  $region17: #{galr_forward.8} parent=0 // pred_fallthru
    _
  // Predicated region
  $region18: #{galr_forward.8} parent=0 // pred_check
    _
  $region19: #{galr_forward.8} parent=0 // pred_check_branch
    %20 = sbr.rel (0) target = $region21
  $region20: #{galr_forward.8} parent=0 // pred_region
    _
  $region21: #{galr_forward.8} parent=0 // pred_fallthru
    _
  // Predicated region
  $region22: #{galr_forward.8} parent=0 // pred_check
    _
  $region23: #{galr_forward.8} parent=0 // pred_check_branch
    %22 = sbr.rel (0) target = $region25
  $region24: #{galr_forward.8} parent=0 // pred_region
    _
  $region25: #{galr_forward.8} parent=0 // pred_fallthru
    _
  %v23 = vld [vmem:[%s0] sm:$0xff]
  %v24 = vld [vmem:[%s0 + $0x8] sm:$0xff]
  %v25 = vld [vmem:[%s0 + $0x10] sm:$0xff]
  %v26 = vld [vmem:[%s0 + $0x18] sm:$0xff]
  %v27 = vld [vmem:[%s0 + $0x20] sm:$0xff]
  %v28 = vld [vmem:[%s0 + $0x28] sm:$0xff]
  %v29 = vld [vmem:[%s0 + $0x30] sm:$0xff]
  %v30 = vld [vmem:[%s0 + $0x38] sm:$0xff]
  %v31 = vld [vmem:[%s1] sm:$0xff]
  %v32 = vld [vmem:[%s1 + $0x8] sm:$0xff]
  %v33 = vld [vmem:[%s3] sm:$0x1]
  %v35 = vlaneseq
  %v36 = vshrl.u32 %v35, 7
  %v37 = vsub.s32 0, %v36
  %v38 = vrot.slane %v33, %v37
  %vm40 = vcmask 130048
  %v42 = vsel %vm40, %v23, 0
  %v45 = vsel %vm40, %v24, 0
  %v48 = vsel %vm40, %v25, 0
  %v51 = vsel %vm40, %v26, 0
  %v54 = vsel %vm40, %v27, 0
  %v57 = vsel %vm40, %v28, 0
  %v60 = vsel %vm40, %v29, 0
  %v63 = vsel %vm40, %v30, 0
  %65 = vmatprep.subr.mxu0 0.0
  %66 = vmatpush1.msra.mxu0 %v31
  %67 = vmatprep.subr.mxu0 0.0
  %68 = vmatpush1.msra.mxu0 %v32
  %69 = vmatprep.subr.mxu0 0.0
  %70 = vmatpush1.msra.mxu0 0.0
  %71 = vmatprep.subr.mxu0 0.0
  %72 = vmatpush1.msra.mxu0 0.0
  %73 = vmatprep.subr.mxu0 0.0
  %74 = vmatpush1.msra.mxu0 0.0
  %75 = vmatprep.subr.mxu0 0.0
  %76 = vmatpush1.msra.mxu0 0.0
  %77 = vmatprep.subr.mxu0 0.0
  %78 = vmatpush1.msra.mxu0 0.0
  %79 = vmatprep.subr.mxu0 0.0
  %80 = vmatpush1.msra.mxu0 0.0
  %81 = vmatprep.subr.mxu0 0.0
  %82 = vmatpush1.msra.mxu0 0.0
  %83 = vmatprep.subr.mxu0 0.0
  %84 = vmatpush1.msra.mxu0 0.0
  %85 = vmatprep.subr.mxu0 0.0
  %86 = vmatpush1.msra.mxu0 0.0
  %87 = vmatprep.subr.mxu0 0.0
  %88 = vmatpush1.msra.mxu0 0.0
  %89 = vmatprep.subr.mxu0 0.0
  %90 = vmatpush1.msra.mxu0 0.0
  %91 = vmatprep.subr.mxu0 0.0
  %92 = vmatpush1.msra.mxu0 0.0
  %93 = vmatprep.subr.mxu0 0.0
  %94 = vmatpush1.msra.mxu0 0.0
  %95 = vmatprep.subr.mxu0 0.0
  %96 = vmatpush1.msra.mxu0 0.0
  %97 = vmatprep.subr.mxu0 0.0
  %98 = vmatpush1.msra.mxu0 0.0
  %99 = vmatprep.subr.mxu0 0.0
  %100 = vmatpush1.msra.mxu0 0.0
  %101 = vmatprep.subr.mxu0 0.0
  %102 = vmatpush1.msra.mxu0 0.0
  %103 = vmatprep.subr.mxu0 0.0
  %104 = vmatpush1.msra.mxu0 0.0
  %105 = vmatprep.subr.mxu0 0.0
  %106 = vmatpush1.msra.mxu0 0.0
  %107 = vmatprep.subr.mxu0 0.0
  %108 = vmatpush1.msra.mxu0 0.0
  %109 = vmatprep.subr.mxu0 0.0
  %110 = vmatpush1.msra.mxu0 0.0
  %111 = vmatprep.subr.mxu0 0.0
  %112 = vmatpush1.msra.mxu0 0.0
  %113 = vmatprep.subr.mxu0 0.0
  %114 = vmatpush1.msra.mxu0 0.0
  %115 = vmatprep.subr.mxu0 0.0
  %116 = vmatpush1.msra.mxu0 0.0
  %117 = vmatprep.subr.mxu0 0.0
  %118 = vmatpush1.msra.mxu0 0.0
  %119 = vmatprep.subr.mxu0 0.0
  %120 = vmatpush1.msra.mxu0 0.0
  %121 = vmatprep.subr.mxu0 0.0
  %122 = vmatpush1.msra.mxu0 0.0
  %123 = vmatprep.subr.mxu0 0.0
  %124 = vmatpush1.msra.mxu0 0.0
  %125 = vmatprep.subr.mxu0 0.0
  %126 = vmatpush1.msra.mxu0 0.0
  %127 = vmatprep.subr.mxu0 0.0
  %128 = vmatpush1.msra.mxu0 0.0
  %129 = vmatprep.mubr.f32.mxu0 0.0
  %130 = vmatmul.mubr.f32.gmra.mrb[0].mxu0 %v42
  %v131 = vpop.f32.mrb[0].mxu0
  %v132 = vadd.f32 %v38, %v131
  %v133 = vpop.f32.mrb[0].mxu0
  %134 = vmatprep.mubr.f32.mxu0 0.0
  %135 = vmatmul.mubr.f32.gmra.mrb[0].mxu0 %v45
  %v136 = vpop.f32.mrb[0].mxu0
  %v137 = vadd.f32 %v38, %v136
  %v138 = vpop.f32.mrb[0].mxu0
  %139 = vmatprep.mubr.f32.mxu0 0.0
  %140 = vmatmul.mubr.f32.gmra.mrb[0].mxu0 %v48
  %v141 = vpop.f32.mrb[0].mxu0
  %v142 = vadd.f32 %v38, %v141
  %v143 = vpop.f32.mrb[0].mxu0
  %144 = vmatprep.mubr.f32.mxu0 0.0
  %145 = vmatmul.mubr.f32.gmra.mrb[0].mxu0 %v51
  %v146 = vpop.f32.mrb[0].mxu0
  %v147 = vadd.f32 %v38, %v146
  %v148 = vpop.f32.mrb[0].mxu0
  %149 = vmatprep.mubr.f32.mxu0 0.0
  %150 = vmatmul.mubr.f32.gmra.mrb[0].mxu0 %v54
  %v151 = vpop.f32.mrb[0].mxu0
  %v152 = vadd.f32 %v38, %v151
  %v153 = vpop.f32.mrb[0].mxu0
  %154 = vmatprep.mubr.f32.mxu0 0.0
  %155 = vmatmul.mubr.f32.gmra.mrb[0].mxu0 %v57
  %v156 = vpop.f32.mrb[0].mxu0
  %v157 = vadd.f32 %v38, %v156
  %v158 = vpop.f32.mrb[0].mxu0
  %159 = vmatprep.mubr.f32.mxu0 0.0
  %160 = vmatmul.mubr.f32.gmra.mrb[0].mxu0 %v60
  %v161 = vpop.f32.mrb[0].mxu0
  %v162 = vadd.f32 %v38, %v161
  %v163 = vpop.f32.mrb[0].mxu0
  %164 = vmatprep.mubr.f32.mxu0 0.0
  %165 = vmatmul.mubr.f32.gmra.mrb[0].mxu0 %v63
  %v166 = vpop.f32.mrb[0].mxu0
  %v167 = vadd.f32 %v38, %v166
  %v168 = vpop.f32.mrb[0].mxu0
  %169 = vdwg.mxu0
  %vm170 = vcmask 523264
  %171 = vst.msk [vmem:[#allocation2] sm:$0xff] %vm170, %v132
  %172 = vst.msk [vmem:[#allocation2 + $0x8] sm:$0xff] %vm170, %v137
  %173 = vst.msk [vmem:[#allocation2 + $0x10] sm:$0xff] %vm170, %v142
  %174 = vst.msk [vmem:[#allocation2 + $0x18] sm:$0xff] %vm170, %v147
  %175 = vst.msk [vmem:[#allocation2 + $0x20] sm:$0xff] %vm170, %v152
  %176 = vst.msk [vmem:[#allocation2 + $0x28] sm:$0xff] %vm170, %v157
  %177 = vst.msk [vmem:[#allocation2 + $0x30] sm:$0xff] %vm170, %v162
  %178 = vst.msk [vmem:[#allocation2 + $0x38] sm:$0xff] %vm170, %v167
  %v179 = vld [vmem:[#allocation2] sm:$0xff]
  %v180 = vld [vmem:[%s2] sm:$0xff]
  %v181 = vld [vmem:[%s2 + $0x8] sm:$0xff]
  %v183 = vsel %vm40, 0.0, 0
  %185 = vmatprep.subr.mxu0 0.0
  %186 = vmatpush1.msra.mxu0 %v180
  %187 = vmatprep.subr.mxu0 0.0
  %188 = vmatpush1.msra.mxu0 %v181
  %189 = vmatprep.subr.mxu0 0.0
  %190 = vmatpush1.msra.mxu0 0.0
  %191 = vmatprep.subr.mxu0 0.0
  %192 = vmatpush1.msra.mxu0 0.0
  %193 = vmatprep.subr.mxu0 0.0
  %194 = vmatpush1.msra.mxu0 0.0
  %195 = vmatprep.subr.mxu0 0.0
  %196 = vmatpush1.msra.mxu0 0.0
  %197 = vmatprep.subr.mxu0 0.0
  %198 = vmatpush1.msra.mxu0 0.0
  %199 = vmatprep.subr.mxu0 0.0
  %200 = vmatpush1.msra.mxu0 0.0
  %201 = vmatprep.subr.mxu0 0.0
  %202 = vmatpush1.msra.mxu0 0.0
  %203 = vmatprep.subr.mxu0 0.0
  %204 = vmatpush1.msra.mxu0 0.0
  %205 = vmatprep.subr.mxu0 0.0
  %206 = vmatpush1.msra.mxu0 0.0
  %207 = vmatprep.subr.mxu0 0.0
  %208 = vmatpush1.msra.mxu0 0.0
  %209 = vmatprep.subr.mxu0 0.0
  %210 = vmatpush1.msra.mxu0 0.0
  %211 = vmatprep.subr.mxu0 0.0
  %212 = vmatpush1.msra.mxu0 0.0
  %213 = vmatprep.subr.mxu0 0.0
  %214 = vmatpush1.msra.mxu0 0.0
  %215 = vmatprep.subr.mxu0 0.0
  %216 = vmatpush1.msra.mxu0 0.0
  %217 = vmatprep.subr.mxu0 0.0
  %218 = vmatpush1.msra.mxu0 0.0
  %219 = vmatprep.subr.mxu0 0.0
  %220 = vmatpush1.msra.mxu0 0.0
  %221 = vmatprep.subr.mxu0 0.0
  %222 = vmatpush1.msra.mxu0 0.0
  %223 = vmatprep.subr.mxu0 0.0
  %224 = vmatpush1.msra.mxu0 0.0
  %225 = vmatprep.subr.mxu0 0.0
  %226 = vmatpush1.msra.mxu0 0.0
  %227 = vmatprep.subr.mxu0 0.0
  %228 = vmatpush1.msra.mxu0 0.0
  %229 = vmatprep.subr.mxu0 0.0
  %230 = vmatpush1.msra.mxu0 0.0
  %231 = vmatprep.subr.mxu0 0.0
  %232 = vmatpush1.msra.mxu0 0.0
  %233 = vmatprep.subr.mxu0 0.0
  %234 = vmatpush1.msra.mxu0 0.0
  %235 = vmatprep.subr.mxu0 0.0
  %236 = vmatpush1.msra.mxu0 0.0
  %237 = vmatprep.subr.mxu0 0.0
  %238 = vmatpush1.msra.mxu0 0.0
  %239 = vmatprep.subr.mxu0 0.0
  %240 = vmatpush1.msra.mxu0 0.0
  %241 = vmatprep.subr.mxu0 0.0
  %242 = vmatpush1.msra.mxu0 0.0
  %243 = vmatprep.subr.mxu0 0.0
  %244 = vmatpush1.msra.mxu0 0.0
  %245 = vmatprep.subr.mxu0 0.0
  %246 = vmatpush1.msra.mxu0 0.0
  %247 = vmatprep.subr.mxu0 0.0
  %248 = vmatpush1.msra.mxu0 0.0
  %249 = vmatprep.mubr.f32.mxu0 0.0
  %250 = vmatmul.mubr.f32.gmra.mrb[0].mxu0 %v183
  %v251 = vpop.f32.mrb[0].mxu0
  %v252 = vadd.f32 0.0, %v251
  %v253 = vpop.f32.mrb[0].mxu0
  %254 = vdwg.mxu0
  %v255 = vadd.f32 %v179, %v252
  %v256 = vxor.u32 %v255, 2147483648
  %v257 = vmul.f32 %v256, 1.442695
  %v258 = vpow.pop %v257
  %v259 = vadd.f32 %v258, 1.0
  %v260 = vrcp.pop %v259
  %v261 = vmul.f32 1.0, %v260
  %v262 = vtanh.pop %v255
  %v263 = vmul.f32 %v261, 0.0
  %265 = vrot.lane.b32.xlu0 %v262, 96
  %v266 = vpop.permute.xlu0 %265
  %v268 = vmul.f32 %v261, %v266
  %270 = vrot.lane.b32.xlu0 %v268, 16
  %v271 = vpop.permute.xlu0 %270
  %v273 = vadd.f32 %v263, %v271
  %v274 = vtanh.pop %v273
  %276 = vrot.lane.b32.xlu0 %v274, 32
  %v277 = vpop.permute.xlu0 %276
  %v279 = vmul.f32 %v261, %v277
  %281 = vrot.lane.b32.xlu0 %v279, 80
  %v282 = vpop.permute.xlu0 %281
  %284 = vst.msk [vmem:[#allocation3] sm:$0xff] %vm40, %v282
  %s285 = scalar_lea.vmem [#allocation2], 8
  %v286 = vld [vmem:[%s285] sm:$0xff]
  %v287 = vld [vmem:[%s2] sm:$0xff]
  %v288 = vld [vmem:[%s2 + $0x8] sm:$0xff]
  %v289 = vsel %vm40, %v282, 0
  %291 = vmatprep.subr.mxu0 0.0
  %292 = vmatpush1.msra.mxu0 %v287
  %293 = vmatprep.subr.mxu0 0.0
  %294 = vmatpush1.msra.mxu0 %v288
  %295 = vmatprep.subr.mxu0 0.0
  %296 = vmatpush1.msra.mxu0 0.0
  %297 = vmatprep.subr.mxu0 0.0
  %298 = vmatpush1.msra.mxu0 0.0
  %299 = vmatprep.subr.mxu0 0.0
  %300 = vmatpush1.msra.mxu0 0.0
  %301 = vmatprep.subr.mxu0 0.0
  %302 = vmatpush1.msra.mxu0 0.0
  %303 = vmatprep.subr.mxu0 0.0
  %304 = vmatpush1.msra.mxu0 0.0
  %305 = vmatprep.subr.mxu0 0.0
  %306 = vmatpush1.msra.mxu0 0.0
  %307 = vmatprep.subr.mxu0 0.0
  %308 = vmatpush1.msra.mxu0 0.0
  %309 = vmatprep.subr.mxu0 0.0
  %310 = vmatpush1.msra.mxu0 0.0
  %311 = vmatprep.subr.mxu0 0.0
  %312 = vmatpush1.msra.mxu0 0.0
  %313 = vmatprep.subr.mxu0 0.0
  %314 = vmatpush1.msra.mxu0 0.0
  %315 = vmatprep.subr.mxu0 0.0
  %316 = vmatpush1.msra.mxu0 0.0
  %317 = vmatprep.subr.mxu0 0.0
  %318 = vmatpush1.msra.mxu0 0.0
  %319 = vmatprep.subr.mxu0 0.0
  %320 = vmatpush1.msra.mxu0 0.0
  %321 = vmatprep.subr.mxu0 0.0
  %322 = vmatpush1.msra.mxu0 0.0
  %323 = vmatprep.subr.mxu0 0.0
  %324 = vmatpush1.msra.mxu0 0.0
  %325 = vmatprep.subr.mxu0 0.0
  %326 = vmatpush1.msra.mxu0 0.0
  %327 = vmatprep.subr.mxu0 0.0
  %328 = vmatpush1.msra.mxu0 0.0
  %329 = vmatprep.subr.mxu0 0.0
  %330 = vmatpush1.msra.mxu0 0.0
  %331 = vmatprep.subr.mxu0 0.0
  %332 = vmatpush1.msra.mxu0 0.0
  %333 = vmatprep.subr.mxu0 0.0
  %334 = vmatpush1.msra.mxu0 0.0
  %335 = vmatprep.subr.mxu0 0.0
  %336 = vmatpush1.msra.mxu0 0.0
  %337 = vmatprep.subr.mxu0 0.0
  %338 = vmatpush1.msra.mxu0 0.0
  %339 = vmatprep.subr.mxu0 0.0
  %340 = vmatpush1.msra.mxu0 0.0
  %341 = vmatprep.subr.mxu0 0.0
  %342 = vmatpush1.msra.mxu0 0.0
  %343 = vmatprep.subr.mxu0 0.0
  %344 = vmatpush1.msra.mxu0 0.0
  %345 = vmatprep.subr.mxu0 0.0
  %346 = vmatpush1.msra.mxu0 0.0
  %347 = vmatprep.subr.mxu0 0.0
  %348 = vmatpush1.msra.mxu0 0.0
  %349 = vmatprep.subr.mxu0 0.0
  %350 = vmatpush1.msra.mxu0 0.0
  %351 = vmatprep.subr.mxu0 0.0
  %352 = vmatpush1.msra.mxu0 0.0
  %353 = vmatprep.subr.mxu0 0.0
  %354 = vmatpush1.msra.mxu0 0.0
  %355 = vmatprep.mubr.f32.mxu0 0.0
  %356 = vmatmul.mubr.f32.gmra.mrb[0].mxu0 %v289
  %v357 = vpop.f32.mrb[0].mxu0
  %v358 = vadd.f32 0.0, %v357
  %v359 = vpop.f32.mrb[0].mxu0
  %360 = vdwg.mxu0
  %v361 = vadd.f32 %v286, %v358
  %v362 = vxor.u32 %v361, 2147483648
  %v363 = vmul.f32 %v362, 1.442695
  %v364 = vpow.pop %v363
  %v365 = vadd.f32 %v364, 1.0
  %v366 = vrcp.pop %v365
  %v367 = vmul.f32 1.0, %v366
  %v368 = vtanh.pop %v361
  %v369 = vmul.f32 %v367, %v273
  %371 = vrot.lane.b32.xlu0 %v368, 96
  %v372 = vpop.permute.xlu0 %371
  %v374 = vmul.f32 %v367, %v372
  %376 = vrot.lane.b32.xlu0 %v374, 16
  %v377 = vpop.permute.xlu0 %376
  %v379 = vadd.f32 %v369, %v377
  %v380 = vtanh.pop %v379
  %382 = vrot.lane.b32.xlu0 %v380, 32
  %v383 = vpop.permute.xlu0 %382
  %v385 = vmul.f32 %v367, %v383
  %387 = vrot.lane.b32.xlu0 %v385, 80
  %v388 = vpop.permute.xlu0 %387
  %s390 = scalar_lea.vmem [#allocation3], 8
  %391 = vst.msk [vmem:[%s390] sm:$0xff] %vm40, %v388
  %s392 = scalar_lea.vmem [#allocation2], 16
  %v393 = vld [vmem:[%s392] sm:$0xff]
  %v394 = vld [vmem:[%s2] sm:$0xff]
  %v395 = vld [vmem:[%s2 + $0x8] sm:$0xff]
  %v396 = vsel %vm40, %v388, 0
  %398 = vmatprep.subr.mxu0 0.0
  %399 = vmatpush1.msra.mxu0 %v394
  %400 = vmatprep.subr.mxu0 0.0
  %401 = vmatpush1.msra.mxu0 %v395
  %402 = vmatprep.subr.mxu0 0.0
  %403 = vmatpush1.msra.mxu0 0.0
  %404 = vmatprep.subr.mxu0 0.0
  %405 = vmatpush1.msra.mxu0 0.0
  %406 = vmatprep.subr.mxu0 0.0
  %407 = vmatpush1.msra.mxu0 0.0
  %408 = vmatprep.subr.mxu0 0.0
  %409 = vmatpush1.msra.mxu0 0.0
  %410 = vmatprep.subr.mxu0 0.0
  %411 = vmatpush1.msra.mxu0 0.0
  %412 = vmatprep.subr.mxu0 0.0
  %413 = vmatpush1.msra.mxu0 0.0
  %414 = vmatprep.subr.mxu0 0.0
  %415 = vmatpush1.msra.mxu0 0.0
  %416 = vmatprep.subr.mxu0 0.0
  %417 = vmatpush1.msra.mxu0 0.0
  %418 = vmatprep.subr.mxu0 0.0
  %419 = vmatpush1.msra.mxu0 0.0
  %420 = vmatprep.subr.mxu0 0.0
  %421 = vmatpush1.msra.mxu0 0.0
  %422 = vmatprep.subr.mxu0 0.0
  %423 = vmatpush1.msra.mxu0 0.0
  %424 = vmatprep.subr.mxu0 0.0
  %425 = vmatpush1.msra.mxu0 0.0
  %426 = vmatprep.subr.mxu0 0.0
  %427 = vmatpush1.msra.mxu0 0.0
  %428 = vmatprep.subr.mxu0 0.0
  %429 = vmatpush1.msra.mxu0 0.0
  %430 = vmatprep.subr.mxu0 0.0
  %431 = vmatpush1.msra.mxu0 0.0
  %432 = vmatprep.subr.mxu0 0.0
  %433 = vmatpush1.msra.mxu0 0.0
  %434 = vmatprep.subr.mxu0 0.0
  %435 = vmatpush1.msra.mxu0 0.0
  %436 = vmatprep.subr.mxu0 0.0
  %437 = vmatpush1.msra.mxu0 0.0
  %438 = vmatprep.subr.mxu0 0.0
  %439 = vmatpush1.msra.mxu0 0.0
  %440 = vmatprep.subr.mxu0 0.0
  %441 = vmatpush1.msra.mxu0 0.0
  %442 = vmatprep.subr.mxu0 0.0
  %443 = vmatpush1.msra.mxu0 0.0
  %444 = vmatprep.subr.mxu0 0.0
  %445 = vmatpush1.msra.mxu0 0.0
  %446 = vmatprep.subr.mxu0 0.0
  %447 = vmatpush1.msra.mxu0 0.0
  %448 = vmatprep.subr.mxu0 0.0
  %449 = vmatpush1.msra.mxu0 0.0
  %450 = vmatprep.subr.mxu0 0.0
  %451 = vmatpush1.msra.mxu0 0.0
  %452 = vmatprep.subr.mxu0 0.0
  %453 = vmatpush1.msra.mxu0 0.0
  %454 = vmatprep.subr.mxu0 0.0
  %455 = vmatpush1.msra.mxu0 0.0
  %456 = vmatprep.subr.mxu0 0.0
  %457 = vmatpush1.msra.mxu0 0.0
  %458 = vmatprep.subr.mxu0 0.0
  %459 = vmatpush1.msra.mxu0 0.0
  %460 = vmatprep.subr.mxu0 0.0
  %461 = vmatpush1.msra.mxu0 0.0
  %462 = vmatprep.mubr.f32.mxu0 0.0
  %463 = vmatmul.mubr.f32.gmra.mrb[0].mxu0 %v396
  %v464 = vpop.f32.mrb[0].mxu0
  %v465 = vadd.f32 0.0, %v464
  %v466 = vpop.f32.mrb[0].mxu0
  %467 = vdwg.mxu0
  %v468 = vadd.f32 %v393, %v465
  %v469 = vxor.u32 %v468, 2147483648
  %v470 = vmul.f32 %v469, 1.442695
  %v471 = vpow.pop %v470
  %v472 = vadd.f32 %v471, 1.0
  %v473 = vrcp.pop %v472
  %v474 = vmul.f32 1.0, %v473
  %v475 = vtanh.pop %v468
  %v476 = vmul.f32 %v474, %v379
  %478 = vrot.lane.b32.xlu0 %v475, 96
  %v479 = vpop.permute.xlu0 %478
  %v481 = vmul.f32 %v474, %v479
  %483 = vrot.lane.b32.xlu0 %v481, 16
  %v484 = vpop.permute.xlu0 %483
  %v486 = vadd.f32 %v476, %v484
  %v487 = vtanh.pop %v486
  %489 = vrot.lane.b32.xlu0 %v487, 32
  %v490 = vpop.permute.xlu0 %489
  %v492 = vmul.f32 %v474, %v490
  %494 = vrot.lane.b32.xlu0 %v492, 80
  %v495 = vpop.permute.xlu0 %494
  %s497 = scalar_lea.vmem [#allocation3], 16
  %498 = vst.msk [vmem:[%s497] sm:$0xff] %vm40, %v495
  %s499 = scalar_lea.vmem [#allocation2], 24
  %v500 = vld [vmem:[%s499] sm:$0xff]
  %v501 = vld [vmem:[%s2] sm:$0xff]
  %v502 = vld [vmem:[%s2 + $0x8] sm:$0xff]
  %v503 = vsel %vm40, %v495, 0
  %505 = vmatprep.subr.mxu0 0.0
  %506 = vmatpush1.msra.mxu0 %v501
  %507 = vmatprep.subr.mxu0 0.0
  %508 = vmatpush1.msra.mxu0 %v502
  %509 = vmatprep.subr.mxu0 0.0
  %510 = vmatpush1.msra.mxu0 0.0
  %511 = vmatprep.subr.mxu0 0.0
  %512 = vmatpush1.msra.mxu0 0.0
  %513 = vmatprep.subr.mxu0 0.0
  %514 = vmatpush1.msra.mxu0 0.0
  %515 = vmatprep.subr.mxu0 0.0
  %516 = vmatpush1.msra.mxu0 0.0
  %517 = vmatprep.subr.mxu0 0.0
  %518 = vmatpush1.msra.mxu0 0.0
  %519 = vmatprep.subr.mxu0 0.0
  %520 = vmatpush1.msra.mxu0 0.0
  %521 = vmatprep.subr.mxu0 0.0
  %522 = vmatpush1.msra.mxu0 0.0
  %523 = vmatprep.subr.mxu0 0.0
  %524 = vmatpush1.msra.mxu0 0.0
  %525 = vmatprep.subr.mxu0 0.0
  %526 = vmatpush1.msra.mxu0 0.0
  %527 = vmatprep.subr.mxu0 0.0
  %528 = vmatpush1.msra.mxu0 0.0
  %529 = vmatprep.subr.mxu0 0.0
  %530 = vmatpush1.msra.mxu0 0.0
  %531 = vmatprep.subr.mxu0 0.0
  %532 = vmatpush1.msra.mxu0 0.0
  %533 = vmatprep.subr.mxu0 0.0
  %534 = vmatpush1.msra.mxu0 0.0
  %535 = vmatprep.subr.mxu0 0.0
  %536 = vmatpush1.msra.mxu0 0.0
  %537 = vmatprep.subr.mxu0 0.0
  %538 = vmatpush1.msra.mxu0 0.0
  %539 = vmatprep.subr.mxu0 0.0
  %540 = vmatpush1.msra.mxu0 0.0
  %541 = vmatprep.subr.mxu0 0.0
  %542 = vmatpush1.msra.mxu0 0.0
  %543 = vmatprep.subr.mxu0 0.0
  %544 = vmatpush1.msra.mxu0 0.0
  %545 = vmatprep.subr.mxu0 0.0
  %546 = vmatpush1.msra.mxu0 0.0
  %547 = vmatprep.subr.mxu0 0.0
  %548 = vmatpush1.msra.mxu0 0.0
  %549 = vmatprep.subr.mxu0 0.0
  %550 = vmatpush1.msra.mxu0 0.0
  %551 = vmatprep.subr.mxu0 0.0
  %552 = vmatpush1.msra.mxu0 0.0
  %553 = vmatprep.subr.mxu0 0.0
  %554 = vmatpush1.msra.mxu0 0.0
  %555 = vmatprep.subr.mxu0 0.0
  %556 = vmatpush1.msra.mxu0 0.0
  %557 = vmatprep.subr.mxu0 0.0
  %558 = vmatpush1.msra.mxu0 0.0
  %559 = vmatprep.subr.mxu0 0.0
  %560 = vmatpush1.msra.mxu0 0.0
  %561 = vmatprep.subr.mxu0 0.0
  %562 = vmatpush1.msra.mxu0 0.0
  %563 = vmatprep.subr.mxu0 0.0
  %564 = vmatpush1.msra.mxu0 0.0
  %565 = vmatprep.subr.mxu0 0.0
  %566 = vmatpush1.msra.mxu0 0.0
  %567 = vmatprep.subr.mxu0 0.0
  %568 = vmatpush1.msra.mxu0 0.0
  %569 = vmatprep.mubr.f32.mxu0 0.0
  %570 = vmatmul.mubr.f32.gmra.mrb[0].mxu0 %v503
  %v571 = vpop.f32.mrb[0].mxu0
  %v572 = vadd.f32 0.0, %v571
  %v573 = vpop.f32.mrb[0].mxu0
  %574 = vdwg.mxu0
  %v575 = vadd.f32 %v500, %v572
  %v576 = vxor.u32 %v575, 2147483648
  %v577 = vmul.f32 %v576, 1.442695
  %v578 = vpow.pop %v577
  %v579 = vadd.f32 %v578, 1.0
  %v580 = vrcp.pop %v579
  %v581 = vmul.f32 1.0, %v580
  %v582 = vtanh.pop %v575
  %v583 = vmul.f32 %v581, %v486
  %585 = vrot.lane.b32.xlu0 %v582, 96
  %v586 = vpop.permute.xlu0 %585
  %v588 = vmul.f32 %v581, %v586
  %590 = vrot.lane.b32.xlu0 %v588, 16
  %v591 = vpop.permute.xlu0 %590
  %v593 = vadd.f32 %v583, %v591
  %v594 = vtanh.pop %v593
  %596 = vrot.lane.b32.xlu0 %v594, 32
  %v597 = vpop.permute.xlu0 %596
  %v599 = vmul.f32 %v581, %v597
  %601 = vrot.lane.b32.xlu0 %v599, 80
  %v602 = vpop.permute.xlu0 %601
  %s604 = scalar_lea.vmem [#allocation3], 24
  %605 = vst.msk [vmem:[%s604] sm:$0xff] %vm40, %v602
  %s606 = scalar_lea.vmem [#allocation2], 32
  %v607 = vld [vmem:[%s606] sm:$0xff]
  %v608 = vld [vmem:[%s2] sm:$0xff]
  %v609 = vld [vmem:[%s2 + $0x8] sm:$0xff]
  %v610 = vsel %vm40, %v602, 0
  %612 = vmatprep.subr.mxu0 0.0
  %613 = vmatpush1.msra.mxu0 %v608
  %614 = vmatprep.subr.mxu0 0.0
  %615 = vmatpush1.msra.mxu0 %v609
  %616 = vmatprep.subr.mxu0 0.0
  %617 = vmatpush1.msra.mxu0 0.0
  %618 = vmatprep.subr.mxu0 0.0
  %619 = vmatpush1.msra.mxu0 0.0
  %620 = vmatprep.subr.mxu0 0.0
  %621 = vmatpush1.msra.mxu0 0.0
  %622 = vmatprep.subr.mxu0 0.0
  %623 = vmatpush1.msra.mxu0 0.0
  %624 = vmatprep.subr.mxu0 0.0
  %625 = vmatpush1.msra.mxu0 0.0
  %626 = vmatprep.subr.mxu0 0.0
  %627 = vmatpush1.msra.mxu0 0.0
  %628 = vmatprep.subr.mxu0 0.0
  %629 = vmatpush1.msra.mxu0 0.0
  %630 = vmatprep.subr.mxu0 0.0
  %631 = vmatpush1.msra.mxu0 0.0
  %632 = vmatprep.subr.mxu0 0.0
  %633 = vmatpush1.msra.mxu0 0.0
  %634 = vmatprep.subr.mxu0 0.0
  %635 = vmatpush1.msra.mxu0 0.0
  %636 = vmatprep.subr.mxu0 0.0
  %637 = vmatpush1.msra.mxu0 0.0
  %638 = vmatprep.subr.mxu0 0.0
  %639 = vmatpush1.msra.mxu0 0.0
  %640 = vmatprep.subr.mxu0 0.0
  %641 = vmatpush1.msra.mxu0 0.0
  %642 = vmatprep.subr.mxu0 0.0
  %643 = vmatpush1.msra.mxu0 0.0
  %644 = vmatprep.subr.mxu0 0.0
  %645 = vmatpush1.msra.mxu0 0.0
  %646 = vmatprep.subr.mxu0 0.0
  %647 = vmatpush1.msra.mxu0 0.0
  %648 = vmatprep.subr.mxu0 0.0
  %649 = vmatpush1.msra.mxu0 0.0
  %650 = vmatprep.subr.mxu0 0.0
  %651 = vmatpush1.msra.mxu0 0.0
  %652 = vmatprep.subr.mxu0 0.0
  %653 = vmatpush1.msra.mxu0 0.0
  %654 = vmatprep.subr.mxu0 0.0
  %655 = vmatpush1.msra.mxu0 0.0
  %656 = vmatprep.subr.mxu0 0.0
  %657 = vmatpush1.msra.mxu0 0.0
  %658 = vmatprep.subr.mxu0 0.0
  %659 = vmatpush1.msra.mxu0 0.0
  %660 = vmatprep.subr.mxu0 0.0
  %661 = vmatpush1.msra.mxu0 0.0
  %662 = vmatprep.subr.mxu0 0.0
  %663 = vmatpush1.msra.mxu0 0.0
  %664 = vmatprep.subr.mxu0 0.0
  %665 = vmatpush1.msra.mxu0 0.0
  %666 = vmatprep.subr.mxu0 0.0
  %667 = vmatpush1.msra.mxu0 0.0
  %668 = vmatprep.subr.mxu0 0.0
  %669 = vmatpush1.msra.mxu0 0.0
  %670 = vmatprep.subr.mxu0 0.0
  %671 = vmatpush1.msra.mxu0 0.0
  %672 = vmatprep.subr.mxu0 0.0
  %673 = vmatpush1.msra.mxu0 0.0
  %674 = vmatprep.subr.mxu0 0.0
  %675 = vmatpush1.msra.mxu0 0.0
  %676 = vmatprep.mubr.f32.mxu0 0.0
  %677 = vmatmul.mubr.f32.gmra.mrb[0].mxu0 %v610
  %v678 = vpop.f32.mrb[0].mxu0
  %v679 = vadd.f32 0.0, %v678
  %v680 = vpop.f32.mrb[0].mxu0
  %681 = vdwg.mxu0
  %v682 = vadd.f32 %v607, %v679
  %v683 = vxor.u32 %v682, 2147483648
  %v684 = vmul.f32 %v683, 1.442695
  %v685 = vpow.pop %v684
  %v686 = vadd.f32 %v685, 1.0
  %v687 = vrcp.pop %v686
  %v688 = vmul.f32 1.0, %v687
  %v689 = vtanh.pop %v682
  %v690 = vmul.f32 %v688, %v593
  %692 = vrot.lane.b32.xlu0 %v689, 96
  %v693 = vpop.permute.xlu0 %692
  %v695 = vmul.f32 %v688, %v693
  %697 = vrot.lane.b32.xlu0 %v695, 16
  %v698 = vpop.permute.xlu0 %697
  %v700 = vadd.f32 %v690, %v698
  %v701 = vtanh.pop %v700
  %703 = vrot.lane.b32.xlu0 %v701, 32
  %v704 = vpop.permute.xlu0 %703
  %v706 = vmul.f32 %v688, %v704
  %708 = vrot.lane.b32.xlu0 %v706, 80
  %v709 = vpop.permute.xlu0 %708
  %s711 = scalar_lea.vmem [#allocation3], 32
  %712 = vst.msk [vmem:[%s711] sm:$0xff] %vm40, %v709
  %s713 = scalar_lea.vmem [#allocation2], 40
  %v714 = vld [vmem:[%s713] sm:$0xff]
  %v715 = vld [vmem:[%s2] sm:$0xff]
  %v716 = vld [vmem:[%s2 + $0x8] sm:$0xff]
  %v717 = vsel %vm40, %v709, 0
  %719 = vmatprep.subr.mxu0 0.0
  %720 = vmatpush1.msra.mxu0 %v715
  %721 = vmatprep.subr.mxu0 0.0
  %722 = vmatpush1.msra.mxu0 %v716
  %723 = vmatprep.subr.mxu0 0.0
  %724 = vmatpush1.msra.mxu0 0.0
  %725 = vmatprep.subr.mxu0 0.0
  %726 = vmatpush1.msra.mxu0 0.0
  %727 = vmatprep.subr.mxu0 0.0
  %728 = vmatpush1.msra.mxu0 0.0
  %729 = vmatprep.subr.mxu0 0.0
  %730 = vmatpush1.msra.mxu0 0.0
  %731 = vmatprep.subr.mxu0 0.0
  %732 = vmatpush1.msra.mxu0 0.0
  %733 = vmatprep.subr.mxu0 0.0
  %734 = vmatpush1.msra.mxu0 0.0
  %735 = vmatprep.subr.mxu0 0.0
  %736 = vmatpush1.msra.mxu0 0.0
  %737 = vmatprep.subr.mxu0 0.0
  %738 = vmatpush1.msra.mxu0 0.0
  %739 = vmatprep.subr.mxu0 0.0
  %740 = vmatpush1.msra.mxu0 0.0
  %741 = vmatprep.subr.mxu0 0.0
  %742 = vmatpush1.msra.mxu0 0.0
  %743 = vmatprep.subr.mxu0 0.0
  %744 = vmatpush1.msra.mxu0 0.0
  %745 = vmatprep.subr.mxu0 0.0
  %746 = vmatpush1.msra.mxu0 0.0
  %747 = vmatprep.subr.mxu0 0.0
  %748 = vmatpush1.msra.mxu0 0.0
  %749 = vmatprep.subr.mxu0 0.0
  %750 = vmatpush1.msra.mxu0 0.0
  %751 = vmatprep.subr.mxu0 0.0
  %752 = vmatpush1.msra.mxu0 0.0
  %753 = vmatprep.subr.mxu0 0.0
  %754 = vmatpush1.msra.mxu0 0.0
  %755 = vmatprep.subr.mxu0 0.0
  %756 = vmatpush1.msra.mxu0 0.0
  %757 = vmatprep.subr.mxu0 0.0
  %758 = vmatpush1.msra.mxu0 0.0
  %759 = vmatprep.subr.mxu0 0.0
  %760 = vmatpush1.msra.mxu0 0.0
  %761 = vmatprep.subr.mxu0 0.0
  %762 = vmatpush1.msra.mxu0 0.0
  %763 = vmatprep.subr.mxu0 0.0
  %764 = vmatpush1.msra.mxu0 0.0
  %765 = vmatprep.subr.mxu0 0.0
  %766 = vmatpush1.msra.mxu0 0.0
  %767 = vmatprep.subr.mxu0 0.0
  %768 = vmatpush1.msra.mxu0 0.0
  %769 = vmatprep.subr.mxu0 0.0
  %770 = vmatpush1.msra.mxu0 0.0
  %771 = vmatprep.subr.mxu0 0.0
  %772 = vmatpush1.msra.mxu0 0.0
  %773 = vmatprep.subr.mxu0 0.0
  %774 = vmatpush1.msra.mxu0 0.0
  %775 = vmatprep.subr.mxu0 0.0
  %776 = vmatpush1.msra.mxu0 0.0
  %777 = vmatprep.subr.mxu0 0.0
  %778 = vmatpush1.msra.mxu0 0.0
  %779 = vmatprep.subr.mxu0 0.0
  %780 = vmatpush1.msra.mxu0 0.0
  %781 = vmatprep.subr.mxu0 0.0
  %782 = vmatpush1.msra.mxu0 0.0
  %783 = vmatprep.mubr.f32.mxu0 0.0
  %784 = vmatmul.mubr.f32.gmra.mrb[0].mxu0 %v717
  %v785 = vpop.f32.mrb[0].mxu0
  %v786 = vadd.f32 0.0, %v785
  %v787 = vpop.f32.mrb[0].mxu0
  %788 = vdwg.mxu0
  %v789 = vadd.f32 %v714, %v786
  %v790 = vxor.u32 %v789, 2147483648
  %v791 = vmul.f32 %v790, 1.442695
  %v792 = vpow.pop %v791
  %v793 = vadd.f32 %v792, 1.0
  %v794 = vrcp.pop %v793
  %v795 = vmul.f32 1.0, %v794
  %v796 = vtanh.pop %v789
  %v797 = vmul.f32 %v795, %v700
  %799 = vrot.lane.b32.xlu0 %v796, 96
  %v800 = vpop.permute.xlu0 %799
  %v802 = vmul.f32 %v795, %v800
  %804 = vrot.lane.b32.xlu0 %v802, 16
  %v805 = vpop.permute.xlu0 %804
  %v807 = vadd.f32 %v797, %v805
  %v808 = vtanh.pop %v807
  %810 = vrot.lane.b32.xlu0 %v808, 32
  %v811 = vpop.permute.xlu0 %810
  %v813 = vmul.f32 %v795, %v811
  %815 = vrot.lane.b32.xlu0 %v813, 80
  %v816 = vpop.permute.xlu0 %815
  %s818 = scalar_lea.vmem [#allocation3], 40
  %819 = vst.msk [vmem:[%s818] sm:$0xff] %vm40, %v816
  %s820 = scalar_lea.vmem [#allocation2], 48
  %v821 = vld [vmem:[%s820] sm:$0xff]
  %v822 = vld [vmem:[%s2] sm:$0xff]
  %v823 = vld [vmem:[%s2 + $0x8] sm:$0xff]
  %v824 = vsel %vm40, %v816, 0
  %826 = vmatprep.subr.mxu0 0.0
  %827 = vmatpush1.msra.mxu0 %v822
  %828 = vmatprep.subr.mxu0 0.0
  %829 = vmatpush1.msra.mxu0 %v823
  %830 = vmatprep.subr.mxu0 0.0
  %831 = vmatpush1.msra.mxu0 0.0
  %832 = vmatprep.subr.mxu0 0.0
  %833 = vmatpush1.msra.mxu0 0.0
  %834 = vmatprep.subr.mxu0 0.0
  %835 = vmatpush1.msra.mxu0 0.0
  %836 = vmatprep.subr.mxu0 0.0
  %837 = vmatpush1.msra.mxu0 0.0
  %838 = vmatprep.subr.mxu0 0.0
  %839 = vmatpush1.msra.mxu0 0.0
  %840 = vmatprep.subr.mxu0 0.0
  %841 = vmatpush1.msra.mxu0 0.0
  %842 = vmatprep.subr.mxu0 0.0
  %843 = vmatpush1.msra.mxu0 0.0
  %844 = vmatprep.subr.mxu0 0.0
  %845 = vmatpush1.msra.mxu0 0.0
  %846 = vmatprep.subr.mxu0 0.0
  %847 = vmatpush1.msra.mxu0 0.0
  %848 = vmatprep.subr.mxu0 0.0
  %849 = vmatpush1.msra.mxu0 0.0
  %850 = vmatprep.subr.mxu0 0.0
  %851 = vmatpush1.msra.mxu0 0.0
  %852 = vmatprep.subr.mxu0 0.0
  %853 = vmatpush1.msra.mxu0 0.0
  %854 = vmatprep.subr.mxu0 0.0
  %855 = vmatpush1.msra.mxu0 0.0
  %856 = vmatprep.subr.mxu0 0.0
  %857 = vmatpush1.msra.mxu0 0.0
  %858 = vmatprep.subr.mxu0 0.0
  %859 = vmatpush1.msra.mxu0 0.0
  %860 = vmatprep.subr.mxu0 0.0
  %861 = vmatpush1.msra.mxu0 0.0
  %862 = vmatprep.subr.mxu0 0.0
  %863 = vmatpush1.msra.mxu0 0.0
  %864 = vmatprep.subr.mxu0 0.0
  %865 = vmatpush1.msra.mxu0 0.0
  %866 = vmatprep.subr.mxu0 0.0
  %867 = vmatpush1.msra.mxu0 0.0
  %868 = vmatprep.subr.mxu0 0.0
  %869 = vmatpush1.msra.mxu0 0.0
  %870 = vmatprep.subr.mxu0 0.0
  %871 = vmatpush1.msra.mxu0 0.0
  %872 = vmatprep.subr.mxu0 0.0
  %873 = vmatpush1.msra.mxu0 0.0
  %874 = vmatprep.subr.mxu0 0.0
  %875 = vmatpush1.msra.mxu0 0.0
  %876 = vmatprep.subr.mxu0 0.0
  %877 = vmatpush1.msra.mxu0 0.0
  %878 = vmatprep.subr.mxu0 0.0
  %879 = vmatpush1.msra.mxu0 0.0
  %880 = vmatprep.subr.mxu0 0.0
  %881 = vmatpush1.msra.mxu0 0.0
  %882 = vmatprep.subr.mxu0 0.0
  %883 = vmatpush1.msra.mxu0 0.0
  %884 = vmatprep.subr.mxu0 0.0
  %885 = vmatpush1.msra.mxu0 0.0
  %886 = vmatprep.subr.mxu0 0.0
  %887 = vmatpush1.msra.mxu0 0.0
  %888 = vmatprep.subr.mxu0 0.0
  %889 = vmatpush1.msra.mxu0 0.0
  %890 = vmatprep.mubr.f32.mxu0 0.0
  %891 = vmatmul.mubr.f32.gmra.mrb[0].mxu0 %v824
  %v892 = vpop.f32.mrb[0].mxu0
  %v893 = vadd.f32 0.0, %v892
  %v894 = vpop.f32.mrb[0].mxu0
  %895 = vdwg.mxu0
  %v896 = vadd.f32 %v821, %v893
  %v897 = vxor.u32 %v896, 2147483648
  %v898 = vmul.f32 %v897, 1.442695
  %v899 = vpow.pop %v898
  %v900 = vadd.f32 %v899, 1.0
  %v901 = vrcp.pop %v900
  %v902 = vmul.f32 1.0, %v901
  %v903 = vtanh.pop %v896
  %v904 = vmul.f32 %v902, %v807
  %906 = vrot.lane.b32.xlu0 %v903, 96
  %v907 = vpop.permute.xlu0 %906
  %v909 = vmul.f32 %v902, %v907
  %911 = vrot.lane.b32.xlu0 %v909, 16
  %v912 = vpop.permute.xlu0 %911
  %v914 = vadd.f32 %v904, %v912
  %v915 = vtanh.pop %v914
  %917 = vrot.lane.b32.xlu0 %v915, 32
  %v918 = vpop.permute.xlu0 %917
  %v920 = vmul.f32 %v902, %v918
  %922 = vrot.lane.b32.xlu0 %v920, 80
  %v923 = vpop.permute.xlu0 %922
  %s925 = scalar_lea.vmem [#allocation3], 48
  %926 = vst.msk [vmem:[%s925] sm:$0xff] %vm40, %v923
  %s927 = scalar_lea.vmem [#allocation2], 56
  %v928 = vld [vmem:[%s927] sm:$0xff]
  %v929 = vld [vmem:[%s2] sm:$0xff]
  %v930 = vld [vmem:[%s2 + $0x8] sm:$0xff]
  %v931 = vsel %vm40, %v923, 0
  %933 = vmatprep.subr.mxu0 0.0
  %934 = vmatpush1.msra.mxu0 %v929
  %935 = vmatprep.subr.mxu0 0.0
  %936 = vmatpush1.msra.mxu0 %v930
  %937 = vmatprep.subr.mxu0 0.0
  %938 = vmatpush1.msra.mxu0 0.0
  %939 = vmatprep.subr.mxu0 0.0
  %940 = vmatpush1.msra.mxu0 0.0
  %941 = vmatprep.subr.mxu0 0.0
  %942 = vmatpush1.msra.mxu0 0.0
  %943 = vmatprep.subr.mxu0 0.0
  %944 = vmatpush1.msra.mxu0 0.0
  %945 = vmatprep.subr.mxu0 0.0
  %946 = vmatpush1.msra.mxu0 0.0
  %947 = vmatprep.subr.mxu0 0.0
  %948 = vmatpush1.msra.mxu0 0.0
  %949 = vmatprep.subr.mxu0 0.0
  %950 = vmatpush1.msra.mxu0 0.0
  %951 = vmatprep.subr.mxu0 0.0
  %952 = vmatpush1.msra.mxu0 0.0
  %953 = vmatprep.subr.mxu0 0.0
  %954 = vmatpush1.msra.mxu0 0.0
  %955 = vmatprep.subr.mxu0 0.0
  %956 = vmatpush1.msra.mxu0 0.0
  %957 = vmatprep.subr.mxu0 0.0
  %958 = vmatpush1.msra.mxu0 0.0
  %959 = vmatprep.subr.mxu0 0.0
  %960 = vmatpush1.msra.mxu0 0.0
  %961 = vmatprep.subr.mxu0 0.0
  %962 = vmatpush1.msra.mxu0 0.0
  %963 = vmatprep.subr.mxu0 0.0
  %964 = vmatpush1.msra.mxu0 0.0
  %965 = vmatprep.subr.mxu0 0.0
  %966 = vmatpush1.msra.mxu0 0.0
  %967 = vmatprep.subr.mxu0 0.0
  %968 = vmatpush1.msra.mxu0 0.0
  %969 = vmatprep.subr.mxu0 0.0
  %970 = vmatpush1.msra.mxu0 0.0
  %971 = vmatprep.subr.mxu0 0.0
  %972 = vmatpush1.msra.mxu0 0.0
  %973 = vmatprep.subr.mxu0 0.0
  %974 = vmatpush1.msra.mxu0 0.0
  %975 = vmatprep.subr.mxu0 0.0
  %976 = vmatpush1.msra.mxu0 0.0
  %977 = vmatprep.subr.mxu0 0.0
  %978 = vmatpush1.msra.mxu0 0.0
  %979 = vmatprep.subr.mxu0 0.0
  %980 = vmatpush1.msra.mxu0 0.0
  %981 = vmatprep.subr.mxu0 0.0
  %982 = vmatpush1.msra.mxu0 0.0
  %983 = vmatprep.subr.mxu0 0.0
  %984 = vmatpush1.msra.mxu0 0.0
  %985 = vmatprep.subr.mxu0 0.0
  %986 = vmatpush1.msra.mxu0 0.0
  %987 = vmatprep.subr.mxu0 0.0
  %988 = vmatpush1.msra.mxu0 0.0
  %989 = vmatprep.subr.mxu0 0.0
  %990 = vmatpush1.msra.mxu0 0.0
  %991 = vmatprep.subr.mxu0 0.0
  %992 = vmatpush1.msra.mxu0 0.0
  %993 = vmatprep.subr.mxu0 0.0
  %994 = vmatpush1.msra.mxu0 0.0
  %995 = vmatprep.subr.mxu0 0.0
  %996 = vmatpush1.msra.mxu0 0.0
  %997 = vmatprep.mubr.f32.mxu0 0.0
  %998 = vmatmul.mubr.f32.gmra.mrb[0].mxu0 %v931
  %v999 = vpop.f32.mrb[0].mxu0
  %v1000 = vadd.f32 0.0, %v999
  %v1001 = vpop.f32.mrb[0].mxu0
  %1002 = vdwg.mxu0
  %v1003 = vadd.f32 %v928, %v1000
  %v1004 = vxor.u32 %v1003, 2147483648
  %v1005 = vmul.f32 %v1004, 1.442695
  %v1006 = vpow.pop %v1005
  %v1007 = vadd.f32 %v1006, 1.0
  %v1008 = vrcp.pop %v1007
  %v1009 = vmul.f32 1.0, %v1008
  %v1010 = vtanh.pop %v1003
  %v1011 = vmul.f32 %v1009, %v914
  %1013 = vrot.lane.b32.xlu0 %v1010, 96
  %v1014 = vpop.permute.xlu0 %1013
  %v1016 = vmul.f32 %v1009, %v1014
  %1018 = vrot.lane.b32.xlu0 %v1016, 16
  %v1019 = vpop.permute.xlu0 %1018
  %v1021 = vadd.f32 %v1011, %v1019
  %v1022 = vtanh.pop %v1021
  %1024 = vrot.lane.b32.xlu0 %v1022, 32
  %v1025 = vpop.permute.xlu0 %1024
  %v1027 = vmul.f32 %v1009, %v1025
  %1029 = vrot.lane.b32.xlu0 %v1027, 80
  %v1030 = vpop.permute.xlu0 %1029
  %s1032 = scalar_lea.vmem [#allocation3], 56
  %1033 = vst.msk [vmem:[%s1032] sm:$0xff] %vm40, %v1030
  %v1034 = vld [vmem:[#allocation3] sm:$0xff]
  %v1035 = vld [vmem:[#allocation3 + $0x8] sm:$0xff]
  %v1036 = vld [vmem:[#allocation3 + $0x10] sm:$0xff]
  %v1037 = vld [vmem:[#allocation3 + $0x18] sm:$0xff]
  %v1038 = vld [vmem:[#allocation3 + $0x20] sm:$0xff]
  %v1039 = vld [vmem:[#allocation3 + $0x28] sm:$0xff]
  %v1040 = vld [vmem:[#allocation3 + $0x30] sm:$0xff]
  %v1041 = vld [vmem:[#allocation3 + $0x38] sm:$0xff]
  %v1042 = vld [vmem:[%s4] sm:$0xff]
  %v1043 = vld [vmem:[%s4 + $0x8] sm:$0xff]
  %v1044 = vld [vmem:[%s5] sm:$0x1]
  %v1046 = vlaneseq
  %v1047 = vshrl.u32 %v1046, 7
  %v1048 = vsub.s32 0, %v1047
  %v1049 = vrot.slane %v1044, %v1048
  %v1052 = vsel %vm40, %v1034, 0
  %v1055 = vsel %vm40, %v1035, 0
  %v1058 = vsel %vm40, %v1036, 0
  %v1061 = vsel %vm40, %v1037, 0
  %v1064 = vsel %vm40, %v1038, 0
  %v1067 = vsel %vm40, %v1039, 0
  %v1070 = vsel %vm40, %v1040, 0
  %v1073 = vsel %vm40, %v1041, 0
  %1075 = vmatprep.subr.mxu0 0.0
  %1076 = vmatpush1.msra.mxu0 %v1042
  %1077 = vmatprep.subr.mxu0 0.0
  %1078 = vmatpush1.msra.mxu0 %v1043
  %1079 = vmatprep.subr.mxu0 0.0
  %1080 = vmatpush1.msra.mxu0 0.0
  %1081 = vmatprep.subr.mxu0 0.0
  %1082 = vmatpush1.msra.mxu0 0.0
  %1083 = vmatprep.subr.mxu0 0.0
  %1084 = vmatpush1.msra.mxu0 0.0
  %1085 = vmatprep.subr.mxu0 0.0
  %1086 = vmatpush1.msra.mxu0 0.0
  %1087 = vmatprep.subr.mxu0 0.0
  %1088 = vmatpush1.msra.mxu0 0.0
  %1089 = vmatprep.subr.mxu0 0.0
  %1090 = vmatpush1.msra.mxu0 0.0
  %1091 = vmatprep.subr.mxu0 0.0
  %1092 = vmatpush1.msra.mxu0 0.0
  %1093 = vmatprep.subr.mxu0 0.0
  %1094 = vmatpush1.msra.mxu0 0.0
  %1095 = vmatprep.subr.mxu0 0.0
  %1096 = vmatpush1.msra.mxu0 0.0
  %1097 = vmatprep.subr.mxu0 0.0
  %1098 = vmatpush1.msra.mxu0 0.0
  %1099 = vmatprep.subr.mxu0 0.0
  %1100 = vmatpush1.msra.mxu0 0.0
  %1101 = vmatprep.subr.mxu0 0.0
  %1102 = vmatpush1.msra.mxu0 0.0
  %1103 = vmatprep.subr.mxu0 0.0
  %1104 = vmatpush1.msra.mxu0 0.0
  %1105 = vmatprep.subr.mxu0 0.0
  %1106 = vmatpush1.msra.mxu0 0.0
  %1107 = vmatprep.subr.mxu0 0.0
  %1108 = vmatpush1.msra.mxu0 0.0
  %1109 = vmatprep.subr.mxu0 0.0
  %1110 = vmatpush1.msra.mxu0 0.0
  %1111 = vmatprep.subr.mxu0 0.0
  %1112 = vmatpush1.msra.mxu0 0.0
  %1113 = vmatprep.subr.mxu0 0.0
  %1114 = vmatpush1.msra.mxu0 0.0
  %1115 = vmatprep.subr.mxu0 0.0
  %1116 = vmatpush1.msra.mxu0 0.0
  %1117 = vmatprep.subr.mxu0 0.0
  %1118 = vmatpush1.msra.mxu0 0.0
  %1119 = vmatprep.subr.mxu0 0.0
  %1120 = vmatpush1.msra.mxu0 0.0
  %1121 = vmatprep.subr.mxu0 0.0
  %1122 = vmatpush1.msra.mxu0 0.0
  %1123 = vmatprep.subr.mxu0 0.0
  %1124 = vmatpush1.msra.mxu0 0.0
  %1125 = vmatprep.subr.mxu0 0.0
  %1126 = vmatpush1.msra.mxu0 0.0
  %1127 = vmatprep.subr.mxu0 0.0
  %1128 = vmatpush1.msra.mxu0 0.0
  %1129 = vmatprep.subr.mxu0 0.0
  %1130 = vmatpush1.msra.mxu0 0.0
  %1131 = vmatprep.subr.mxu0 0.0
  %1132 = vmatpush1.msra.mxu0 0.0
  %1133 = vmatprep.subr.mxu0 0.0
  %1134 = vmatpush1.msra.mxu0 0.0
  %1135 = vmatprep.subr.mxu0 0.0
  %1136 = vmatpush1.msra.mxu0 0.0
  %1137 = vmatprep.subr.mxu0 0.0
  %1138 = vmatpush1.msra.mxu0 0.0
  %1139 = vmatprep.mubr.f32.mxu0 0.0
  %1140 = vmatmul.mubr.f32.gmra.mrb[0].mxu0 %v1052
  %v1141 = vpop.f32.mrb[0].mxu0
  %v1142 = vadd.f32 %v1049, %v1141
  %v1143 = vpop.f32.mrb[0].mxu0
  %1144 = vmatprep.mubr.f32.mxu0 0.0
  %1145 = vmatmul.mubr.f32.gmra.mrb[0].mxu0 %v1055
  %v1146 = vpop.f32.mrb[0].mxu0
  %v1147 = vadd.f32 %v1049, %v1146
  %v1148 = vpop.f32.mrb[0].mxu0
  %1149 = vmatprep.mubr.f32.mxu0 0.0
  %1150 = vmatmul.mubr.f32.gmra.mrb[0].mxu0 %v1058
  %v1151 = vpop.f32.mrb[0].mxu0
  %v1152 = vadd.f32 %v1049, %v1151
  %v1153 = vpop.f32.mrb[0].mxu0
  %1154 = vmatprep.mubr.f32.mxu0 0.0
  %1155 = vmatmul.mubr.f32.gmra.mrb[0].mxu0 %v1061
  %v1156 = vpop.f32.mrb[0].mxu0
  %v1157 = vadd.f32 %v1049, %v1156
  %v1158 = vpop.f32.mrb[0].mxu0
  %1159 = vmatprep.mubr.f32.mxu0 0.0
  %1160 = vmatmul.mubr.f32.gmra.mrb[0].mxu0 %v1064
  %v1161 = vpop.f32.mrb[0].mxu0
  %v1162 = vadd.f32 %v1049, %v1161
  %v1163 = vpop.f32.mrb[0].mxu0
  %1164 = vmatprep.mubr.f32.mxu0 0.0
  %1165 = vmatmul.mubr.f32.gmra.mrb[0].mxu0 %v1067
  %v1166 = vpop.f32.mrb[0].mxu0
  %v1167 = vadd.f32 %v1049, %v1166
  %v1168 = vpop.f32.mrb[0].mxu0
  %1169 = vmatprep.mubr.f32.mxu0 0.0
  %1170 = vmatmul.mubr.f32.gmra.mrb[0].mxu0 %v1070
  %v1171 = vpop.f32.mrb[0].mxu0
  %v1172 = vadd.f32 %v1049, %v1171
  %v1173 = vpop.f32.mrb[0].mxu0
  %1174 = vmatprep.mubr.f32.mxu0 0.0
  %1175 = vmatmul.mubr.f32.gmra.mrb[0].mxu0 %v1073
  %v1176 = vpop.f32.mrb[0].mxu0
  %v1177 = vadd.f32 %v1049, %v1176
  %v1178 = vpop.f32.mrb[0].mxu0
  %1179 = vdwg.mxu0
  %1180 = vst.msk [vmem:[%s6] sm:$0xff] %vm40, %v1142
  %1181 = vst.msk [vmem:[%s6 + $0x8] sm:$0xff] %vm40, %v1147
  %1182 = vst.msk [vmem:[%s6 + $0x10] sm:$0xff] %vm40, %v1152
  %1183 = vst.msk [vmem:[%s6 + $0x18] sm:$0xff] %vm40, %v1157
  %1184 = vst.msk [vmem:[%s6 + $0x20] sm:$0xff] %vm40, %v1162
  %1185 = vst.msk [vmem:[%s6 + $0x28] sm:$0xff] %vm40, %v1167
  %1186 = vst.msk [vmem:[%s6 + $0x30] sm:$0xff] %vm40, %v1172
  %1187 = vst.msk [vmem:[%s6 + $0x38] sm:$0xff] %vm40, %v1177
  // Predicated region
  $region26: #{galr_forward.8} parent=0 // pred_check
    _
  $region27: #{galr_forward.8} parent=0 // pred_check_branch
    %1189 = sbr.rel (0) target = $region29
  $region28: #{galr_forward.8} parent=0 // pred_region
    _
  $region29: #{galr_forward.8} parent=0 // pred_fallthru
    _
  // Predicated region
  $region30: #{galr_forward.8} parent=0 // pred_check
    _
  $region31: #{galr_forward.8} parent=0 // pred_check_branch
    %1191 = sbr.rel (0) target = $region33
  $region32: #{galr_forward.8} parent=0 // pred_region
    _
  $region33: #{galr_forward.8} parent=0 // pred_fallthru
    _

// kernel: galr_forward.10
$region0: #{galr_forward.10}
  #allocation0 [shape = 'u32[]', space=smem, size = 0x4, offset = 0x4, fixed_abs, tag = 'smem constant byte address 0x4 - core index']
  #allocation1 [shape = 'u32[144,128]{1,0:T(1,128)}', space=vmem, size = 0x12000, scoped, tag = 'internal scratch']
  %s0 = inlined_call_operand.vmem [shape: f32[8,4,16], index: 0, kind: input, shape index: {}]
  %s1 = inlined_call_operand.vmem [shape: f32[2,16,24], index: 1, kind: input, shape index: {}]
  %s2 = inlined_call_operand.vmem [shape: f32[2,1,24], index: 2, kind: input, shape index: {}]
  %s3 = inlined_call_operand.vmem [shape: f32[2,8,16], index: 3, kind: input, shape index: {}]
  %s4 = inlined_call_operand.vmem [shape: f32[1,16], index: 4, kind: input, shape index: {}]
  %s5 = inlined_call_operand.vmem [shape: f32[8,4,16], index: 5, kind: output, shape index: {0}]
  %s6 = inlined_call_operand.hbm [shape: f32[8,4,4], index: 6, kind: output, shape index: {1}]
  %7 = xla_tuple %s5, %s6
  %s8 = sld [smem:[#allocation0]]
  $region61: #{galr_forward.10} parent=0
    _
  %s10 = ssub.s32 1, %s8
  %s11 = scalar_select 0, %s10, %s8
  $region1: #{galr_forward.10} parent=0
    #allocation2 [shape = 'u8[4096]{0}', space=vmem, size = 0x1000, scoped, tag = 'output window, operand 1']
    #allocation3 [shape = 's32[2]{0}', space=sflag, size = 0x8, scoped, tag = 'scoped memory for galr_forward.10']
    %12 = vsyncpa [#allocation3], 0
    %s13 = scalar_lea.sflag [#allocation3], 1
    %14 = vsyncpa %s13, 0
    loop: start=0, step=1, limit=10
    $region2: #{galr_forward.10} parent=1 // loop_pre_header
      _
    $region3: #{galr_forward.10} parent=1 // loop_header
      %s16 = sphi 0, %s20
      %p17 = scmp.ge.s32.totalorder %s16, 10
      %s26 = sphi 0, %s28
      %s29 = sphi 0, %s26
      %s30 = sphi 0, %s29
      %s46 = sphi 0, %s30
      %s50 = sphi 0, %s50
      %s52 = sphi 0, %s50
      %s53 = sphi 0, %s52
      %s67 = sphi 0, %s53
      %s71 = sphi 0, %s71
      %s73 = sphi 0, %s71
      %s74 = sphi 0, %s73
      %s88 = sphi 0, %s74
      %s92 = sphi 0, %s92
      %s94 = sphi 0, %s92
      %s95 = sphi 0, %s94
      %s109 = sphi 0, %s95
      %s113 = sphi 0, %s113
      %s115 = sphi 0, %s113
      %s116 = sphi 0, %s115
      %s130 = sphi 0, %s116
      %s136 = sphi 0, %s138
      %s139 = sphi 0, %s136
      %s140 = sphi 0, %s139
      %s156 = sphi 0, %s140
      %s162 = sphi 0, %s164
      %s165 = sphi 0, %s162
      %s166 = sphi 0, %s165
      %s182 = sphi 0, %s166
    $region4: #{galr_forward.10} parent=1 // loop_header_branch
      %19 = sbr.rel (%p17) target = $region8
    $region5: #{galr_forward.10} parent=1 // loop_body
      %s21 = ssub.s32 %s16, 1
      %s22 = ssub.s32 %s16, 2
      %s23 = sadd.s32 %s16, 1
      %s24 = ssub.s32 %s16, %s23
      %p25 = scmp.eq.s32.totalorder %s24, 0
      %s27 = sadd.s32 %s26, 1
      %s28 = scalar_select %p25, %s26, %s27
      %p31 = pneg %p25
      %p32 = scmp.eq.s32.totalorder %s16, 7
      %p33 = por %p31, %p32
      %p34 = scmp.ne.s32.totalorder %s26, %s29
      %p35 = scmp.eq.s32.totalorder %s16, 0
      %p36 = por %p34, %p35
      %p37 = scmp.ne.s32.totalorder %s26, %s29
      %p38 = scmp.eq.s32.totalorder %s21, 7
      %p39 = por %p37, %p38
      %p40 = scmp.ne.s32.totalorder %s29, %s30
      %p41 = scmp.eq.s32.totalorder %s21, 0
      %p42 = por %p40, %p41
      %p43 = scmp.ne.s32.totalorder %s29, %s30
      %p44 = scmp.eq.s32.totalorder %s22, 7
      %p45 = por %p43, %p44
      %p47 = scmp.ne.s32.totalorder %s30, %s46
      %p48 = scmp.eq.s32.totalorder %s22, 0
      %p49 = por %p47, %p48
      %s51 = sadd.s32 %s50, 1
      %p54 = scmp.eq.s32.totalorder %s16, 7
      %p55 = scmp.ne.s32.totalorder %s50, %s52
      %p56 = scmp.eq.s32.totalorder %s16, 0
      %p57 = por %p55, %p56
      %p58 = scmp.ne.s32.totalorder %s50, %s52
      %p59 = scmp.eq.s32.totalorder %s21, 7
      %p60 = por %p58, %p59
      %p61 = scmp.ne.s32.totalorder %s52, %s53
      %p62 = scmp.eq.s32.totalorder %s21, 0
      %p63 = por %p61, %p62
      %p64 = scmp.ne.s32.totalorder %s52, %s53
      %p65 = scmp.eq.s32.totalorder %s22, 7
      %p66 = por %p64, %p65
      %p68 = scmp.ne.s32.totalorder %s53, %s67
      %p69 = scmp.eq.s32.totalorder %s22, 0
      %p70 = por %p68, %p69
      %s72 = sadd.s32 %s71, 1
      %p75 = scmp.eq.s32.totalorder %s16, 7
      %p76 = scmp.ne.s32.totalorder %s71, %s73
      %p77 = scmp.eq.s32.totalorder %s16, 0
      %p78 = por %p76, %p77
      %p79 = scmp.ne.s32.totalorder %s71, %s73
      %p80 = scmp.eq.s32.totalorder %s21, 7
      %p81 = por %p79, %p80
      %p82 = scmp.ne.s32.totalorder %s73, %s74
      %p83 = scmp.eq.s32.totalorder %s21, 0
      %p84 = por %p82, %p83
      %p85 = scmp.ne.s32.totalorder %s73, %s74
      %p86 = scmp.eq.s32.totalorder %s22, 7
      %p87 = por %p85, %p86
      %p89 = scmp.ne.s32.totalorder %s74, %s88
      %p90 = scmp.eq.s32.totalorder %s22, 0
      %p91 = por %p89, %p90
      %s93 = sadd.s32 %s92, 1
      %p96 = scmp.eq.s32.totalorder %s16, 7
      %p97 = scmp.ne.s32.totalorder %s92, %s94
      %p98 = scmp.eq.s32.totalorder %s16, 0
      %p99 = por %p97, %p98
      %p100 = scmp.ne.s32.totalorder %s92, %s94
      %p101 = scmp.eq.s32.totalorder %s21, 7
      %p102 = por %p100, %p101
      %p103 = scmp.ne.s32.totalorder %s94, %s95
      %p104 = scmp.eq.s32.totalorder %s21, 0
      %p105 = por %p103, %p104
      %p106 = scmp.ne.s32.totalorder %s94, %s95
      %p107 = scmp.eq.s32.totalorder %s22, 7
      %p108 = por %p106, %p107
      %p110 = scmp.ne.s32.totalorder %s95, %s109
      %p111 = scmp.eq.s32.totalorder %s22, 0
      %p112 = por %p110, %p111
      %s114 = sadd.s32 %s113, 1
      %p117 = scmp.eq.s32.totalorder %s16, 7
      %p118 = scmp.ne.s32.totalorder %s113, %s115
      %p119 = scmp.eq.s32.totalorder %s16, 0
      %p120 = por %p118, %p119
      %p121 = scmp.ne.s32.totalorder %s113, %s115
      %p122 = scmp.eq.s32.totalorder %s21, 7
      %p123 = por %p121, %p122
      %p124 = scmp.ne.s32.totalorder %s115, %s116
      %p125 = scmp.eq.s32.totalorder %s21, 0
      %p126 = por %p124, %p125
      %p127 = scmp.ne.s32.totalorder %s115, %s116
      %p128 = scmp.eq.s32.totalorder %s22, 7
      %p129 = por %p127, %p128
      %p131 = scmp.ne.s32.totalorder %s116, %s130
      %p132 = scmp.eq.s32.totalorder %s22, 0
      %p133 = por %p131, %p132
      %s134 = ssub.s32 %s16, %s23
      %p135 = scmp.eq.s32.totalorder %s134, 0
      %s137 = sadd.s32 %s136, 1
      %s138 = scalar_select %p135, %s136, %s137
      %p141 = pneg %p135
      %p142 = scmp.eq.s32.totalorder %s16, 7
      %p143 = por %p141, %p142
      %p144 = scmp.ne.s32.totalorder %s136, %s139
      %p145 = scmp.eq.s32.totalorder %s16, 0
      %p146 = por %p144, %p145
      %p147 = scmp.ne.s32.totalorder %s136, %s139
      %p148 = scmp.eq.s32.totalorder %s21, 7
      %p149 = por %p147, %p148
      %p150 = scmp.ne.s32.totalorder %s139, %s140
      %p151 = scmp.eq.s32.totalorder %s21, 0
      %p152 = por %p150, %p151
      %p153 = scmp.ne.s32.totalorder %s139, %s140
      %p154 = scmp.eq.s32.totalorder %s22, 7
      %p155 = por %p153, %p154
      %p157 = scmp.ne.s32.totalorder %s140, %s156
      %p158 = scmp.eq.s32.totalorder %s22, 0
      %p159 = por %p157, %p158
      %s160 = ssub.s32 %s16, %s23
      %p161 = scmp.eq.s32.totalorder %s160, 0
      %s163 = sadd.s32 %s162, 1
      %s164 = scalar_select %p161, %s162, %s163
      %p167 = pneg %p161
      %p168 = scmp.eq.s32.totalorder %s16, 7
      %p169 = por %p167, %p168
      %p170 = scmp.ne.s32.totalorder %s162, %s165
      %p171 = scmp.eq.s32.totalorder %s16, 0
      %p172 = por %p170, %p171
      %p173 = scmp.ne.s32.totalorder %s162, %s165
      %p174 = scmp.eq.s32.totalorder %s21, 7
      %p175 = por %p173, %p174
      %p176 = scmp.ne.s32.totalorder %s165, %s166
      %p177 = scmp.eq.s32.totalorder %s21, 0
      %p178 = por %p176, %p177
      %p179 = scmp.ne.s32.totalorder %s165, %s166
      %p180 = scmp.eq.s32.totalorder %s22, 7
      %p181 = por %p179, %p180
      %p183 = scmp.ne.s32.totalorder %s166, %s182
      %p184 = scmp.eq.s32.totalorder %s22, 0
      %p185 = por %p183, %p184
      %p186 = scmp.le.s32.totalorder 1, %s16
      %p187 = scmp.lt.s32.totalorder %s16, 9
      %p188 = pnand %p186, %p187
      %p189 = pneg %p188
      // Predicated region
      $region9: #{galr_forward.10} parent=5 // pred_check
        _
      $region10: #{galr_forward.10} parent=5 // pred_check_branch
        %191 = sbr.rel (%p188) target = $region12
      $region11: #{galr_forward.10} parent=5 // pred_region
        %s192 = ssub.s32 %s16, 1
        // Predicated region
        $region13: #{galr_forward.10} parent=11 // pred_check
          %p193 = pneg %p63
        $region14: #{galr_forward.10} parent=11 // pred_check_branch
          %195 = sbr.rel (%p193) target = $region16
        $region15: #{galr_forward.10} parent=11 // pred_region
          _
        $region16: #{galr_forward.10} parent=11 // pred_fallthru
          _
        // Predicated region
        $region17: #{galr_forward.10} parent=11 // pred_check
          %p196 = pneg %p84
        $region18: #{galr_forward.10} parent=11 // pred_check_branch
          %198 = sbr.rel (%p196) target = $region20
        $region19: #{galr_forward.10} parent=11 // pred_region
          _
        $region20: #{galr_forward.10} parent=11 // pred_fallthru
          _
        // Predicated region
        $region21: #{galr_forward.10} parent=11 // pred_check
          %p199 = pneg %p105
        $region22: #{galr_forward.10} parent=11 // pred_check_branch
          %201 = sbr.rel (%p199) target = $region24
        $region23: #{galr_forward.10} parent=11 // pred_region
          _
        $region24: #{galr_forward.10} parent=11 // pred_fallthru
          _
        // Predicated region
        $region25: #{galr_forward.10} parent=11 // pred_check
          %p202 = pneg %p126
        $region26: #{galr_forward.10} parent=11 // pred_check_branch
          %204 = sbr.rel (%p202) target = $region28
        $region27: #{galr_forward.10} parent=11 // pred_region
          _
        $region28: #{galr_forward.10} parent=11 // pred_fallthru
          _
      $region12: #{galr_forward.10} parent=5 // pred_fallthru
        _
      %p205 = scmp.lt.s32.totalorder %s16, 8
      // Predicated region
      $region29: #{galr_forward.10} parent=5 // pred_check
        %p206 = pneg %p205
      $region30: #{galr_forward.10} parent=5 // pred_check_branch
        %208 = sbr.rel (%p206) target = $region32
      $region31: #{galr_forward.10} parent=5 // pred_region
        // Predicated region
        $region33: #{galr_forward.10} parent=31 // pred_check
          %p209 = pneg %p36
        $region34: #{galr_forward.10} parent=31 // pred_check_branch
          %211 = sbr.rel (%p209) target = $region36
        $region35: #{galr_forward.10} parent=31 // pred_region
          %p212 = scmp.lt.s32.totalorder %s16, 7
          %s213 = scalar_select %p212, %s16, 7
          %s214 = smul.addr %s213, 4
          %s215 = scalar_lea.vmem %s0, %s214
        $region36: #{galr_forward.10} parent=31 // pred_fallthru
          _
      $region32: #{galr_forward.10} parent=5 // pred_fallthru
        _
      %p216 = scmp.le.s32.totalorder 1, %s16
      %p217 = scmp.lt.s32.totalorder %s16, 9
      %p218 = pnand %p216, %p217
      %p219 = pneg %p218
      // Predicated region
      $region37: #{galr_forward.10} parent=5 // pred_check
        _
      $region38: #{galr_forward.10} parent=5 // pred_check_branch
        %221 = sbr.rel (%p218) target = $region40
      $region39: #{galr_forward.10} parent=5 // pred_region
        %s222 = ssub.s32 %s16, 1
        %p223 = scmp.lt.s32.totalorder %s21, 7
        %s224 = scalar_select %p223, %s21, 7
        %s225 = smul.addr %s224, 4
        %s226 = scalar_lea.vmem %s0, %s225
        %p227 = pneg %p42
        %p228 = pneg %p39
        %p229 = pneg %p63
        %p230 = pneg %p60
        %p231 = pneg %p84
        %p232 = pneg %p81
        %p233 = pneg %p105
        %p234 = pneg %p102
        %p235 = pneg %p126
        %p236 = pneg %p123
        %p237 = pneg %p152
        %p238 = pneg %p149
        %p239 = scmp.lt.s32.totalorder %s21, 7
        %s240 = scalar_select %p239, %s21, 7
        %s241 = smul.addr %s240, 4
        %s242 = scalar_lea.vmem %s5, %s241
        %p243 = pneg %p178
        %p244 = pneg %p175
        %s245 = sand.u32 %s165, 1
        %s246 = scalar_lea.sflag [#allocation3], %s245
        %s247 = sand.u32 %s165, 1
        %s248 = smul.addr %s247, 4
        %s249 = scalar_lea.vmem [#allocation2], %s248
        %p250 = scmp.lt.s32.totalorder %s21, 7
        %s251 = scalar_select %p250, %s21, 7
        %s252 = smul.addr %s251, 4
        %s253 = scalar_lea.vmem %s0, %s252
        %p254 = scmp.lt.s32.totalorder %s21, 7
        %s255 = scalar_select %p254, %s21, 7
        %s256 = smul.addr %s255, 4
        %s257 = scalar_lea.vmem %s5, %s256
        %v258 = vld [vmem:[%s253] sm:$0xf]
        %v259 = vld [vmem:[%s1] sm:$0xff]
        %v260 = vld [vmem:[%s1 + $0x8] sm:$0xff]
        %v261 = vld [vmem:[%s1 + $0x10] sm:$0xff]
        %v262 = vld [vmem:[%s1 + $0x18] sm:$0xff]
        %v263 = vld [vmem:[%s2] sm:$0x1]
        %v264 = vld [vmem:[%s2 + $0x1] sm:$0x1]
        %v267 = vlaneseq
        %v268 = vshrl.u32 %v267, 7
        %v269 = vsub.s32 0, %v268
        %v270 = vrot.slane %v263, %v269
        %v271 = vlaneseq
        %v272 = vshrl.u32 %v271, 7
        %v273 = vsub.s32 0, %v272
        %v274 = vrot.slane %v264, %v273
        %vm277 = vcmask 130048
        %v279 = vsel %vm277, %v258, 0
        %281 = vmatprep.subr.mxu0 0.0
        %282 = vmatpush1.msra.mxu0 %v259
        %283 = vmatprep.subr.mxu0 0.0
        %284 = vmatpush1.msra.mxu0 %v260
        %285 = vmatprep.subr.mxu0 0.0
        %286 = vmatpush1.msra.mxu0 0.0
        %287 = vmatprep.subr.mxu0 0.0
        %288 = vmatpush1.msra.mxu0 0.0
        %289 = vmatprep.subr.mxu0 0.0
        %290 = vmatpush1.msra.mxu0 0.0
        %291 = vmatprep.subr.mxu0 0.0
        %292 = vmatpush1.msra.mxu0 0.0
        %293 = vmatprep.subr.mxu0 0.0
        %294 = vmatpush1.msra.mxu0 0.0
        %295 = vmatprep.subr.mxu0 0.0
        %296 = vmatpush1.msra.mxu0 0.0
        %297 = vmatprep.subr.mxu0 0.0
        %298 = vmatpush1.msra.mxu0 0.0
        %299 = vmatprep.subr.mxu0 0.0
        %300 = vmatpush1.msra.mxu0 0.0
        %301 = vmatprep.subr.mxu0 0.0
        %302 = vmatpush1.msra.mxu0 0.0
        %303 = vmatprep.subr.mxu0 0.0
        %304 = vmatpush1.msra.mxu0 0.0
        %305 = vmatprep.subr.mxu0 0.0
        %306 = vmatpush1.msra.mxu0 0.0
        %307 = vmatprep.subr.mxu0 0.0
        %308 = vmatpush1.msra.mxu0 0.0
        %309 = vmatprep.subr.mxu0 0.0
        %310 = vmatpush1.msra.mxu0 0.0
        %311 = vmatprep.subr.mxu0 0.0
        %312 = vmatpush1.msra.mxu0 0.0
        %313 = vmatprep.subr.mxu0 0.0
        %314 = vmatpush1.msra.mxu0 0.0
        %315 = vmatprep.subr.mxu0 0.0
        %316 = vmatpush1.msra.mxu0 0.0
        %317 = vmatprep.subr.mxu0 0.0
        %318 = vmatpush1.msra.mxu0 0.0
        %319 = vmatprep.subr.mxu0 0.0
        %320 = vmatpush1.msra.mxu0 0.0
        %321 = vmatprep.subr.mxu0 0.0
        %322 = vmatpush1.msra.mxu0 0.0
        %323 = vmatprep.subr.mxu0 0.0
        %324 = vmatpush1.msra.mxu0 0.0
        %325 = vmatprep.subr.mxu0 0.0
        %326 = vmatpush1.msra.mxu0 0.0
        %327 = vmatprep.subr.mxu0 0.0
        %328 = vmatpush1.msra.mxu0 0.0
        %329 = vmatprep.subr.mxu0 0.0
        %330 = vmatpush1.msra.mxu0 0.0
        %331 = vmatprep.subr.mxu0 0.0
        %332 = vmatpush1.msra.mxu0 0.0
        %333 = vmatprep.subr.mxu0 0.0
        %334 = vmatpush1.msra.mxu0 0.0
        %335 = vmatprep.subr.mxu0 0.0
        %336 = vmatpush1.msra.mxu0 0.0
        %337 = vmatprep.subr.mxu0 0.0
        %338 = vmatpush1.msra.mxu0 0.0
        %339 = vmatprep.subr.mxu0 0.0
        %340 = vmatpush1.msra.mxu0 0.0
        %341 = vmatprep.subr.mxu0 0.0
        %342 = vmatpush1.msra.mxu0 0.0
        %343 = vmatprep.subr.mxu0 0.0
        %344 = vmatpush1.msra.mxu0 0.0
        %345 = vmatprep.mubr.f32.mxu0 0.0
        %346 = vmatmul.mubr.f32.gmra.mrb[0].mxu0 %v279
        %v347 = vpop.f32.mrb[0].mxu0
        %v348 = vadd.f32 %v270, %v347
        %v349 = vpop.f32.mrb[0].mxu0
        %350 = vdwg.mxu0
        %351 = vmatprep.subr.mxu0 0.0
        %352 = vmatpush1.msra.mxu0 %v261
        %353 = vmatprep.subr.mxu0 0.0
        %354 = vmatpush1.msra.mxu0 %v262
        %355 = vmatprep.subr.mxu0 0.0
        %356 = vmatpush1.msra.mxu0 0.0
        %357 = vmatprep.subr.mxu0 0.0
        %358 = vmatpush1.msra.mxu0 0.0
        %359 = vmatprep.subr.mxu0 0.0
        %360 = vmatpush1.msra.mxu0 0.0
        %361 = vmatprep.subr.mxu0 0.0
        %362 = vmatpush1.msra.mxu0 0.0
        %363 = vmatprep.subr.mxu0 0.0
        %364 = vmatpush1.msra.mxu0 0.0
        %365 = vmatprep.subr.mxu0 0.0
        %366 = vmatpush1.msra.mxu0 0.0
        %367 = vmatprep.subr.mxu0 0.0
        %368 = vmatpush1.msra.mxu0 0.0
        %369 = vmatprep.subr.mxu0 0.0
        %370 = vmatpush1.msra.mxu0 0.0
        %371 = vmatprep.subr.mxu0 0.0
        %372 = vmatpush1.msra.mxu0 0.0
        %373 = vmatprep.subr.mxu0 0.0
        %374 = vmatpush1.msra.mxu0 0.0
        %375 = vmatprep.subr.mxu0 0.0
        %376 = vmatpush1.msra.mxu0 0.0
        %377 = vmatprep.subr.mxu0 0.0
        %378 = vmatpush1.msra.mxu0 0.0
        %379 = vmatprep.subr.mxu0 0.0
        %380 = vmatpush1.msra.mxu0 0.0
        %381 = vmatprep.subr.mxu0 0.0
        %382 = vmatpush1.msra.mxu0 0.0
        %383 = vmatprep.subr.mxu0 0.0
        %384 = vmatpush1.msra.mxu0 0.0
        %385 = vmatprep.subr.mxu0 0.0
        %386 = vmatpush1.msra.mxu0 0.0
        %387 = vmatprep.subr.mxu0 0.0
        %388 = vmatpush1.msra.mxu0 0.0
        %389 = vmatprep.subr.mxu0 0.0
        %390 = vmatpush1.msra.mxu0 0.0
        %391 = vmatprep.subr.mxu0 0.0
        %392 = vmatpush1.msra.mxu0 0.0
        %393 = vmatprep.subr.mxu0 0.0
        %394 = vmatpush1.msra.mxu0 0.0
        %395 = vmatprep.subr.mxu0 0.0
        %396 = vmatpush1.msra.mxu0 0.0
        %397 = vmatprep.subr.mxu0 0.0
        %398 = vmatpush1.msra.mxu0 0.0
        %399 = vmatprep.subr.mxu0 0.0
        %400 = vmatpush1.msra.mxu0 0.0
        %401 = vmatprep.subr.mxu0 0.0
        %402 = vmatpush1.msra.mxu0 0.0
        %403 = vmatprep.subr.mxu0 0.0
        %404 = vmatpush1.msra.mxu0 0.0
        %405 = vmatprep.subr.mxu0 0.0
        %406 = vmatpush1.msra.mxu0 0.0
        %407 = vmatprep.subr.mxu0 0.0
        %408 = vmatpush1.msra.mxu0 0.0
        %409 = vmatprep.subr.mxu0 0.0
        %410 = vmatpush1.msra.mxu0 0.0
        %411 = vmatprep.subr.mxu0 0.0
        %412 = vmatpush1.msra.mxu0 0.0
        %413 = vmatprep.subr.mxu0 0.0
        %414 = vmatpush1.msra.mxu0 0.0
        %415 = vmatprep.mubr.f32.mxu0 0.0
        %416 = vmatmul.mubr.f32.gmra.mrb[0].mxu0 %v279
        %v417 = vpop.f32.mrb[0].mxu0
        %v418 = vadd.f32 %v274, %v417
        %v419 = vpop.f32.mrb[0].mxu0
        %420 = vdwg.mxu0
        %v421 = vmul.f32 %v348, 0.35355338
        %v422 = vmul.f32 %v418, 0.35355338
        %424 = vrot.lane.b32.xlu0 %v348, 120
        %v425 = vpop.permute.xlu0 %424
        %vm426 = vcmask 64512
        %v428 = vsel %vm426, %v421, 0
        %v430 = vsel %vm426, %v425, 0
        %432 = vmatprep.subr.mxu0 0.0
        %433 = vmatpush1.xpose.msra.mxu0 %v430
        %434 = vmatprep.subr.mxu0 0.0
        %435 = vmatpush1.xpose.msra.mxu0 0.0
        %436 = vmatprep.subr.mxu0 0.0
        %437 = vmatpush1.xpose.msra.mxu0 0.0
        %438 = vmatprep.subr.mxu0 0.0
        %439 = vmatpush1.xpose.msra.mxu0 0.0
        %440 = vmatprep.subr.mxu0 0.0
        %441 = vmatpush1.xpose.msra.mxu0 0.0
        %442 = vmatprep.subr.mxu0 0.0
        %443 = vmatpush1.xpose.msra.mxu0 0.0
        %444 = vmatprep.subr.mxu0 0.0
        %445 = vmatpush1.xpose.msra.mxu0 0.0
        %446 = vmatprep.subr.mxu0 0.0
        %447 = vmatpush1.xpose.msra.mxu0 0.0
        %448 = vmatprep.subr.mxu0 0.0
        %449 = vmatpush1.xpose.msra.mxu0 0.0
        %450 = vmatprep.subr.mxu0 0.0
        %451 = vmatpush1.xpose.msra.mxu0 0.0
        %452 = vmatprep.subr.mxu0 0.0
        %453 = vmatpush1.xpose.msra.mxu0 0.0
        %454 = vmatprep.subr.mxu0 0.0
        %455 = vmatpush1.xpose.msra.mxu0 0.0
        %456 = vmatprep.subr.mxu0 0.0
        %457 = vmatpush1.xpose.msra.mxu0 0.0
        %458 = vmatprep.subr.mxu0 0.0
        %459 = vmatpush1.xpose.msra.mxu0 0.0
        %460 = vmatprep.subr.mxu0 0.0
        %461 = vmatpush1.xpose.msra.mxu0 0.0
        %462 = vmatprep.subr.mxu0 0.0
        %463 = vmatpush1.xpose.msra.mxu0 0.0
        %464 = vmatprep.subr.mxu0 0.0
        %465 = vmatpush1.xpose.msra.mxu0 0.0
        %466 = vmatprep.subr.mxu0 0.0
        %467 = vmatpush1.xpose.msra.mxu0 0.0
        %468 = vmatprep.subr.mxu0 0.0
        %469 = vmatpush1.xpose.msra.mxu0 0.0
        %470 = vmatprep.subr.mxu0 0.0
        %471 = vmatpush1.xpose.msra.mxu0 0.0
        %472 = vmatprep.subr.mxu0 0.0
        %473 = vmatpush1.xpose.msra.mxu0 0.0
        %474 = vmatprep.subr.mxu0 0.0
        %475 = vmatpush1.xpose.msra.mxu0 0.0
        %476 = vmatprep.subr.mxu0 0.0
        %477 = vmatpush1.xpose.msra.mxu0 0.0
        %478 = vmatprep.subr.mxu0 0.0
        %479 = vmatpush1.xpose.msra.mxu0 0.0
        %480 = vmatprep.subr.mxu0 0.0
        %481 = vmatpush1.xpose.msra.mxu0 0.0
        %482 = vmatprep.subr.mxu0 0.0
        %483 = vmatpush1.xpose.msra.mxu0 0.0
        %484 = vmatprep.subr.mxu0 0.0
        %485 = vmatpush1.xpose.msra.mxu0 0.0
        %486 = vmatprep.subr.mxu0 0.0
        %487 = vmatpush1.xpose.msra.mxu0 0.0
        %488 = vmatprep.subr.mxu0 0.0
        %489 = vmatpush1.xpose.msra.mxu0 0.0
        %490 = vmatprep.subr.mxu0 0.0
        %491 = vmatpush1.xpose.msra.mxu0 0.0
        %492 = vmatprep.subr.mxu0 0.0
        %493 = vmatpush1.xpose.msra.mxu0 0.0
        %494 = vmatprep.subr.mxu0 0.0
        %495 = vmatpush1.xpose.msra.mxu0 0.0
        %496 = vmatprep.mubr.f32.mxu0 0.0
        %497 = vmatmul.mubr.f32.gmra.mrb[0].mxu0 %v428
        %v498 = vpop.f32.mrb[0].mxu0
        %v499 = vadd.f32 0.0, %v498
        %v500 = vpop.f32.mrb[0].mxu0
        %501 = vdwg.mxu0
        %503 = vrot.lane.b32.xlu0 %v418, 120
        %v504 = vpop.permute.xlu0 %503
        %v506 = vsel %vm426, %v422, 0
        %v508 = vsel %vm426, %v504, 0
        %510 = vmatprep.subr.mxu0 0.0
        %511 = vmatpush1.xpose.msra.mxu0 %v508
        %512 = vmatprep.subr.mxu0 0.0
        %513 = vmatpush1.xpose.msra.mxu0 0.0
        %514 = vmatprep.subr.mxu0 0.0
        %515 = vmatpush1.xpose.msra.mxu0 0.0
        %516 = vmatprep.subr.mxu0 0.0
        %517 = vmatpush1.xpose.msra.mxu0 0.0
        %518 = vmatprep.subr.mxu0 0.0
        %519 = vmatpush1.xpose.msra.mxu0 0.0
        %520 = vmatprep.subr.mxu0 0.0
        %521 = vmatpush1.xpose.msra.mxu0 0.0
        %522 = vmatprep.subr.mxu0 0.0
        %523 = vmatpush1.xpose.msra.mxu0 0.0
        %524 = vmatprep.subr.mxu0 0.0
        %525 = vmatpush1.xpose.msra.mxu0 0.0
        %526 = vmatprep.subr.mxu0 0.0
        %527 = vmatpush1.xpose.msra.mxu0 0.0
        %528 = vmatprep.subr.mxu0 0.0
        %529 = vmatpush1.xpose.msra.mxu0 0.0
        %530 = vmatprep.subr.mxu0 0.0
        %531 = vmatpush1.xpose.msra.mxu0 0.0
        %532 = vmatprep.subr.mxu0 0.0
        %533 = vmatpush1.xpose.msra.mxu0 0.0
        %534 = vmatprep.subr.mxu0 0.0
        %535 = vmatpush1.xpose.msra.mxu0 0.0
        %536 = vmatprep.subr.mxu0 0.0
        %537 = vmatpush1.xpose.msra.mxu0 0.0
        %538 = vmatprep.subr.mxu0 0.0
        %539 = vmatpush1.xpose.msra.mxu0 0.0
        %540 = vmatprep.subr.mxu0 0.0
        %541 = vmatpush1.xpose.msra.mxu0 0.0
        %542 = vmatprep.subr.mxu0 0.0
        %543 = vmatpush1.xpose.msra.mxu0 0.0
        %544 = vmatprep.subr.mxu0 0.0
        %545 = vmatpush1.xpose.msra.mxu0 0.0
        %546 = vmatprep.subr.mxu0 0.0
        %547 = vmatpush1.xpose.msra.mxu0 0.0
        %548 = vmatprep.subr.mxu0 0.0
        %549 = vmatpush1.xpose.msra.mxu0 0.0
        %550 = vmatprep.subr.mxu0 0.0
        %551 = vmatpush1.xpose.msra.mxu0 0.0
        %552 = vmatprep.subr.mxu0 0.0
        %553 = vmatpush1.xpose.msra.mxu0 0.0
        %554 = vmatprep.subr.mxu0 0.0
        %555 = vmatpush1.xpose.msra.mxu0 0.0
        %556 = vmatprep.subr.mxu0 0.0
        %557 = vmatpush1.xpose.msra.mxu0 0.0
        %558 = vmatprep.subr.mxu0 0.0
        %559 = vmatpush1.xpose.msra.mxu0 0.0
        %560 = vmatprep.subr.mxu0 0.0
        %561 = vmatpush1.xpose.msra.mxu0 0.0
        %562 = vmatprep.subr.mxu0 0.0
        %563 = vmatpush1.xpose.msra.mxu0 0.0
        %564 = vmatprep.subr.mxu0 0.0
        %565 = vmatpush1.xpose.msra.mxu0 0.0
        %566 = vmatprep.subr.mxu0 0.0
        %567 = vmatpush1.xpose.msra.mxu0 0.0
        %568 = vmatprep.subr.mxu0 0.0
        %569 = vmatpush1.xpose.msra.mxu0 0.0
        %570 = vmatprep.subr.mxu0 0.0
        %571 = vmatpush1.xpose.msra.mxu0 0.0
        %572 = vmatprep.subr.mxu0 0.0
        %573 = vmatpush1.xpose.msra.mxu0 0.0
        %574 = vmatprep.mubr.f32.mxu0 0.0
        %575 = vmatmul.mubr.f32.gmra.mrb[0].mxu0 %v506
        %v576 = vpop.f32.mrb[0].mxu0
        %v577 = vadd.f32 0.0, %v576
        %v578 = vpop.f32.mrb[0].mxu0
        %579 = vdwg.mxu0
        %vm580 = vcmask 27648
        %v581 = vsel %vm580, %v499, -inf
        %582 = vmax.xlane.f32.xlu0 %v581
        %v583 = vpop.xlane.xlu0 %582
        %v584 = vsel %vm580, %v577, -inf
        %585 = vmax.xlane.f32.xlu0 %v584
        %v586 = vpop.xlane.xlu0 %585
        %v587 = vsub.f32 %v499, %v583
        %v588 = vsub.f32 %v577, %v586
        %v589 = vmul.f32 %v587, 1.442695
        %v590 = vpow.pop %v589
        %v591 = vmul.f32 %v588, 1.442695
        %v592 = vpow.pop %v591
        %v593 = vsel %vm580, %v590, 0.0
        %594 = vadd.xlane.f32.xlu0 %v593
        %v595 = vpop.xlane.xlu0 %594
        %v596 = vsel %vm580, %v592, 0.0
        %597 = vadd.xlane.f32.xlu0 %v596
        %v598 = vpop.xlane.xlu0 %597
        %v599 = vrcp.pop %v595
        %v600 = vrcp.pop %v598
        %v601 = vmul.f32 %v590, %v599
        %v602 = vmul.f32 %v592, %v600
        %603 = vrot.lane.b32.xlu0 %v348, 112
        %v604 = vpop.permute.xlu0 %603
        %vm605 = vcmask 31744
        %v607 = vsel %vm605, %v601, 0
        %vm609 = vcmask 1043456
        %v610 = vsel %vm609, %v604, 0
        %612 = vmatprep.subr.mxu0 0.0
        %613 = vmatpush1.msra.mxu0 %v610
        %614 = vmatprep.subr.mxu0 0.0
        %615 = vmatpush1.msra.mxu0 0.0
        %616 = vmatprep.subr.mxu0 0.0
        %617 = vmatpush1.msra.mxu0 0.0
        %618 = vmatprep.subr.mxu0 0.0
        %619 = vmatpush1.msra.mxu0 0.0
        %620 = vmatprep.subr.mxu0 0.0
        %621 = vmatpush1.msra.mxu0 0.0
        %622 = vmatprep.subr.mxu0 0.0
        %623 = vmatpush1.msra.mxu0 0.0
        %624 = vmatprep.subr.mxu0 0.0
        %625 = vmatpush1.msra.mxu0 0.0
        %626 = vmatprep.subr.mxu0 0.0
        %627 = vmatpush1.msra.mxu0 0.0
        %628 = vmatprep.subr.mxu0 0.0
        %629 = vmatpush1.msra.mxu0 0.0
        %630 = vmatprep.subr.mxu0 0.0
        %631 = vmatpush1.msra.mxu0 0.0
        %632 = vmatprep.subr.mxu0 0.0
        %633 = vmatpush1.msra.mxu0 0.0
        %634 = vmatprep.subr.mxu0 0.0
        %635 = vmatpush1.msra.mxu0 0.0
        %636 = vmatprep.subr.mxu0 0.0
        %637 = vmatpush1.msra.mxu0 0.0
        %638 = vmatprep.subr.mxu0 0.0
        %639 = vmatpush1.msra.mxu0 0.0
        %640 = vmatprep.subr.mxu0 0.0
        %641 = vmatpush1.msra.mxu0 0.0
        %642 = vmatprep.subr.mxu0 0.0
        %643 = vmatpush1.msra.mxu0 0.0
        %644 = vmatprep.subr.mxu0 0.0
        %645 = vmatpush1.msra.mxu0 0.0
        %646 = vmatprep.subr.mxu0 0.0
        %647 = vmatpush1.msra.mxu0 0.0
        %648 = vmatprep.subr.mxu0 0.0
        %649 = vmatpush1.msra.mxu0 0.0
        %650 = vmatprep.subr.mxu0 0.0
        %651 = vmatpush1.msra.mxu0 0.0
        %652 = vmatprep.subr.mxu0 0.0
        %653 = vmatpush1.msra.mxu0 0.0
        %654 = vmatprep.subr.mxu0 0.0
        %655 = vmatpush1.msra.mxu0 0.0
        %656 = vmatprep.subr.mxu0 0.0
        %657 = vmatpush1.msra.mxu0 0.0
        %658 = vmatprep.subr.mxu0 0.0
        %659 = vmatpush1.msra.mxu0 0.0
        %660 = vmatprep.subr.mxu0 0.0
        %661 = vmatpush1.msra.mxu0 0.0
        %662 = vmatprep.subr.mxu0 0.0
        %663 = vmatpush1.msra.mxu0 0.0
        %664 = vmatprep.subr.mxu0 0.0
        %665 = vmatpush1.msra.mxu0 0.0
        %666 = vmatprep.subr.mxu0 0.0
        %667 = vmatpush1.msra.mxu0 0.0
        %668 = vmatprep.subr.mxu0 0.0
        %669 = vmatpush1.msra.mxu0 0.0
        %670 = vmatprep.subr.mxu0 0.0
        %671 = vmatpush1.msra.mxu0 0.0
        %672 = vmatprep.subr.mxu0 0.0
        %673 = vmatpush1.msra.mxu0 0.0
        %674 = vmatprep.subr.mxu0 0.0
        %675 = vmatpush1.msra.mxu0 0.0
        %676 = vmatprep.mubr.f32.mxu0 0.0
        %677 = vmatmul.mubr.f32.gmra.mrb[0].mxu0 %v607
        %v678 = vpop.f32.mrb[0].mxu0
        %v679 = vadd.f32 0.0, %v678
        %v680 = vpop.f32.mrb[0].mxu0
        %681 = vdwg.mxu0
        %682 = vrot.lane.b32.xlu0 %v418, 112
        %v683 = vpop.permute.xlu0 %682
        %v685 = vsel %vm605, %v602, 0
        %v687 = vsel %vm609, %v683, 0
        %689 = vmatprep.subr.mxu0 0.0
        %690 = vmatpush1.msra.mxu0 %v687
        %691 = vmatprep.subr.mxu0 0.0
        %692 = vmatpush1.msra.mxu0 0.0
        %693 = vmatprep.subr.mxu0 0.0
        %694 = vmatpush1.msra.mxu0 0.0
        %695 = vmatprep.subr.mxu0 0.0
        %696 = vmatpush1.msra.mxu0 0.0
        %697 = vmatprep.subr.mxu0 0.0
        %698 = vmatpush1.msra.mxu0 0.0
        %699 = vmatprep.subr.mxu0 0.0
        %700 = vmatpush1.msra.mxu0 0.0
        %701 = vmatprep.subr.mxu0 0.0
        %702 = vmatpush1.msra.mxu0 0.0
        %703 = vmatprep.subr.mxu0 0.0
        %704 = vmatpush1.msra.mxu0 0.0
        %705 = vmatprep.subr.mxu0 0.0
        %706 = vmatpush1.msra.mxu0 0.0
        %707 = vmatprep.subr.mxu0 0.0
        %708 = vmatpush1.msra.mxu0 0.0
        %709 = vmatprep.subr.mxu0 0.0
        %710 = vmatpush1.msra.mxu0 0.0
        %711 = vmatprep.subr.mxu0 0.0
        %712 = vmatpush1.msra.mxu0 0.0
        %713 = vmatprep.subr.mxu0 0.0
        %714 = vmatpush1.msra.mxu0 0.0
        %715 = vmatprep.subr.mxu0 0.0
        %716 = vmatpush1.msra.mxu0 0.0
        %717 = vmatprep.subr.mxu0 0.0
        %718 = vmatpush1.msra.mxu0 0.0
        %719 = vmatprep.subr.mxu0 0.0
        %720 = vmatpush1.msra.mxu0 0.0
        %721 = vmatprep.subr.mxu0 0.0
        %722 = vmatpush1.msra.mxu0 0.0
        %723 = vmatprep.subr.mxu0 0.0
        %724 = vmatpush1.msra.mxu0 0.0
        %725 = vmatprep.subr.mxu0 0.0
        %726 = vmatpush1.msra.mxu0 0.0
        %727 = vmatprep.subr.mxu0 0.0
        %728 = vmatpush1.msra.mxu0 0.0
        %729 = vmatprep.subr.mxu0 0.0
        %730 = vmatpush1.msra.mxu0 0.0
        %731 = vmatprep.subr.mxu0 0.0
        %732 = vmatpush1.msra.mxu0 0.0
        %733 = vmatprep.subr.mxu0 0.0
        %734 = vmatpush1.msra.mxu0 0.0
        %735 = vmatprep.subr.mxu0 0.0
        %736 = vmatpush1.msra.mxu0 0.0
        %737 = vmatprep.subr.mxu0 0.0
        %738 = vmatpush1.msra.mxu0 0.0
        %739 = vmatprep.subr.mxu0 0.0
        %740 = vmatpush1.msra.mxu0 0.0
        %741 = vmatprep.subr.mxu0 0.0
        %742 = vmatpush1.msra.mxu0 0.0
        %743 = vmatprep.subr.mxu0 0.0
        %744 = vmatpush1.msra.mxu0 0.0
        %745 = vmatprep.subr.mxu0 0.0
        %746 = vmatpush1.msra.mxu0 0.0
        %747 = vmatprep.subr.mxu0 0.0
        %748 = vmatpush1.msra.mxu0 0.0
        %749 = vmatprep.subr.mxu0 0.0
        %750 = vmatpush1.msra.mxu0 0.0
        %751 = vmatprep.subr.mxu0 0.0
        %752 = vmatpush1.msra.mxu0 0.0
        %753 = vmatprep.mubr.f32.mxu0 0.0
        %754 = vmatmul.mubr.f32.gmra.mrb[0].mxu0 %v685
        %v755 = vpop.f32.mrb[0].mxu0
        %v756 = vadd.f32 0.0, %v755
        %v757 = vpop.f32.mrb[0].mxu0
        %758 = vdwg.mxu0
        %v759 = vld [vmem:[%s3] sm:$0xff]
        %v760 = vld [vmem:[%s3 + $0x8] sm:$0xff]
        %v762 = vsel %vm426, %v679, 0
        %764 = vmatprep.subr.mxu0 0.0
        %765 = vmatpush1.msra.mxu0 %v759
        %766 = vmatprep.subr.mxu0 0.0
        %767 = vmatpush1.msra.mxu0 0.0
        %768 = vmatprep.subr.mxu0 0.0
        %769 = vmatpush1.msra.mxu0 0.0
        %770 = vmatprep.subr.mxu0 0.0
        %771 = vmatpush1.msra.mxu0 0.0
        %772 = vmatprep.subr.mxu0 0.0
        %773 = vmatpush1.msra.mxu0 0.0
        %774 = vmatprep.subr.mxu0 0.0
        %775 = vmatpush1.msra.mxu0 0.0
        %776 = vmatprep.subr.mxu0 0.0
        %777 = vmatpush1.msra.mxu0 0.0
        %778 = vmatprep.subr.mxu0 0.0
        %779 = vmatpush1.msra.mxu0 0.0
        %780 = vmatprep.subr.mxu0 0.0
        %781 = vmatpush1.msra.mxu0 0.0
        %782 = vmatprep.subr.mxu0 0.0
        %783 = vmatpush1.msra.mxu0 0.0
        %784 = vmatprep.subr.mxu0 0.0
        %785 = vmatpush1.msra.mxu0 0.0
        %786 = vmatprep.subr.mxu0 0.0
        %787 = vmatpush1.msra.mxu0 0.0
        %788 = vmatprep.subr.mxu0 0.0
        %789 = vmatpush1.msra.mxu0 0.0
        %790 = vmatprep.subr.mxu0 0.0
        %791 = vmatpush1.msra.mxu0 0.0
        %792 = vmatprep.subr.mxu0 0.0
        %793 = vmatpush1.msra.mxu0 0.0
        %794 = vmatprep.subr.mxu0 0.0
        %795 = vmatpush1.msra.mxu0 0.0
        %796 = vmatprep.subr.mxu0 0.0
        %797 = vmatpush1.msra.mxu0 0.0
        %798 = vmatprep.subr.mxu0 0.0
        %799 = vmatpush1.msra.mxu0 0.0
        %800 = vmatprep.subr.mxu0 0.0
        %801 = vmatpush1.msra.mxu0 0.0
        %802 = vmatprep.subr.mxu0 0.0
        %803 = vmatpush1.msra.mxu0 0.0
        %804 = vmatprep.subr.mxu0 0.0
        %805 = vmatpush1.msra.mxu0 0.0
        %806 = vmatprep.subr.mxu0 0.0
        %807 = vmatpush1.msra.mxu0 0.0
        %808 = vmatprep.subr.mxu0 0.0
        %809 = vmatpush1.msra.mxu0 0.0
        %810 = vmatprep.subr.mxu0 0.0
        %811 = vmatpush1.msra.mxu0 0.0
        %812 = vmatprep.subr.mxu0 0.0
        %813 = vmatpush1.msra.mxu0 0.0
        %814 = vmatprep.subr.mxu0 0.0
        %815 = vmatpush1.msra.mxu0 0.0
        %816 = vmatprep.subr.mxu0 0.0
        %817 = vmatpush1.msra.mxu0 0.0
        %818 = vmatprep.subr.mxu0 0.0
        %819 = vmatpush1.msra.mxu0 0.0
        %820 = vmatprep.subr.mxu0 0.0
        %821 = vmatpush1.msra.mxu0 0.0
        %822 = vmatprep.subr.mxu0 0.0
        %823 = vmatpush1.msra.mxu0 0.0
        %824 = vmatprep.subr.mxu0 0.0
        %825 = vmatpush1.msra.mxu0 0.0
        %826 = vmatprep.subr.mxu0 0.0
        %827 = vmatpush1.msra.mxu0 0.0
        %828 = vmatprep.mubr.f32.mxu0 0.0
        %829 = vmatmul.mubr.f32.gmra.mrb[0].mxu0 %v762
        %v830 = vpop.f32.mrb[0].mxu0
        %v831 = vadd.f32 0.0, %v830
        %v832 = vpop.f32.mrb[0].mxu0
        %833 = vdwg.mxu0
        %v835 = vsel %vm426, %v756, 0
        %837 = vmatprep.subr.mxu0 0.0
        %838 = vmatpush1.msra.mxu0 %v760
        %839 = vmatprep.subr.mxu0 0.0
        %840 = vmatpush1.msra.mxu0 0.0
        %841 = vmatprep.subr.mxu0 0.0
        %842 = vmatpush1.msra.mxu0 0.0
        %843 = vmatprep.subr.mxu0 0.0
        %844 = vmatpush1.msra.mxu0 0.0
        %845 = vmatprep.subr.mxu0 0.0
        %846 = vmatpush1.msra.mxu0 0.0
        %847 = vmatprep.subr.mxu0 0.0
        %848 = vmatpush1.msra.mxu0 0.0
        %849 = vmatprep.subr.mxu0 0.0
        %850 = vmatpush1.msra.mxu0 0.0
        %851 = vmatprep.subr.mxu0 0.0
        %852 = vmatpush1.msra.mxu0 0.0
        %853 = vmatprep.subr.mxu0 0.0
        %854 = vmatpush1.msra.mxu0 0.0
        %855 = vmatprep.subr.mxu0 0.0
        %856 = vmatpush1.msra.mxu0 0.0
        %857 = vmatprep.subr.mxu0 0.0
        %858 = vmatpush1.msra.mxu0 0.0
        %859 = vmatprep.subr.mxu0 0.0
        %860 = vmatpush1.msra.mxu0 0.0
        %861 = vmatprep.subr.mxu0 0.0
        %862 = vmatpush1.msra.mxu0 0.0
        %863 = vmatprep.subr.mxu0 0.0
        %864 = vmatpush1.msra.mxu0 0.0
        %865 = vmatprep.subr.mxu0 0.0
        %866 = vmatpush1.msra.mxu0 0.0
        %867 = vmatprep.subr.mxu0 0.0
        %868 = vmatpush1.msra.mxu0 0.0
        %869 = vmatprep.subr.mxu0 0.0
        %870 = vmatpush1.msra.mxu0 0.0
        %871 = vmatprep.subr.mxu0 0.0
        %872 = vmatpush1.msra.mxu0 0.0
        %873 = vmatprep.subr.mxu0 0.0
        %874 = vmatpush1.msra.mxu0 0.0
        %875 = vmatprep.subr.mxu0 0.0
        %876 = vmatpush1.msra.mxu0 0.0
        %877 = vmatprep.subr.mxu0 0.0
        %878 = vmatpush1.msra.mxu0 0.0
        %879 = vmatprep.subr.mxu0 0.0
        %880 = vmatpush1.msra.mxu0 0.0
        %881 = vmatprep.subr.mxu0 0.0
        %882 = vmatpush1.msra.mxu0 0.0
        %883 = vmatprep.subr.mxu0 0.0
        %884 = vmatpush1.msra.mxu0 0.0
        %885 = vmatprep.subr.mxu0 0.0
        %886 = vmatpush1.msra.mxu0 0.0
        %887 = vmatprep.subr.mxu0 0.0
        %888 = vmatpush1.msra.mxu0 0.0
        %889 = vmatprep.subr.mxu0 0.0
        %890 = vmatpush1.msra.mxu0 0.0
        %891 = vmatprep.subr.mxu0 0.0
        %892 = vmatpush1.msra.mxu0 0.0
        %893 = vmatprep.subr.mxu0 0.0
        %894 = vmatpush1.msra.mxu0 0.0
        %895 = vmatprep.subr.mxu0 0.0
        %896 = vmatpush1.msra.mxu0 0.0
        %897 = vmatprep.subr.mxu0 0.0
        %898 = vmatpush1.msra.mxu0 0.0
        %899 = vmatprep.subr.mxu0 0.0
        %900 = vmatpush1.msra.mxu0 0.0
        %901 = vmatprep.mubr.f32.mxu0 0.0
        %902 = vmatmul.mubr.f32.gmra.mrb[0].mxu0 %v835
        %v903 = vpop.f32.mrb[0].mxu0
        %v904 = vadd.f32 0.0, %v903
        %v905 = vpop.f32.mrb[0].mxu0
        %906 = vdwg.mxu0
        %vm907 = vcmask 125952
        %v908 = vsel %vm907, %v831, 0.0
        %v909 = vsel %vm907, %v904, 0.0
        %v910 = vadd.f32 %v908, %v909
        %v911 = vld [vmem:[%s4] sm:$0x1]
        %v913 = vlaneseq
        %v914 = vshrl.u32 %v913, 7
        %v915 = vsub.s32 0, %v914
        %v916 = vrot.slane %v911, %v915
        %v918 = vadd.f32 %v910, %v916
        %v919 = vadd.f32 %v918, %v258
        %920 = vst.msk [vmem:[%s257] sm:$0xf] %vm907, %v919
        %v921 = vsel %vm580, %v601, 0.0
        %v922 = vsel %vm580, %v602, 0.0
        %v923 = vadd.f32 %v921, %v922
        %v924 = vrcp.pop 2.0
        %v925 = vmul.f32 %v923, %v924
        %926 = vst.msk [vmem:[%s249] sm:$0xf] %vm580, %v925
        %p927 = scmp.lt.s32.totalorder %s21, 7
        %s928 = scalar_select %p927, %s21, 7
        %s929 = smul.addr %s928, 4
        %s930 = scalar_lea.vmem %s5, %s929
        %s931 = sand.u32 %s165, 1
        %s932 = scalar_lea.sflag [#allocation3], %s931
        %s933 = sand.u32 %s165, 1
        %s934 = smul.addr %s933, 4
        %s935 = scalar_lea.vmem [#allocation2], %s934
        // Predicated region
        $region41: #{galr_forward.10} parent=39 // pred_check
          %p936 = pneg %p149
        $region42: #{galr_forward.10} parent=39 // pred_check_branch
          %938 = sbr.rel (%p936) target = $region44
        $region43: #{galr_forward.10} parent=39 // pred_region
          _
        $region44: #{galr_forward.10} parent=39 // pred_fallthru
          _
        // Predicated region
        $region45: #{galr_forward.10} parent=39 // pred_check
          %p939 = pneg %p175
        $region46: #{galr_forward.10} parent=39 // pred_check_branch
          %941 = sbr.rel (%p939) target = $region48
        $region47: #{galr_forward.10} parent=39 // pred_region
          %s943 = ssub.s32 64, 64
          %944 = vsyncadd %s932, %s943
          %s945 = smul.addr %s21, 64
          %s946 = scalar_lea.hbm %s6, %s945
          %s948 = sshll.u32 %s935, 4
          %s949 = int_to_ptr.vmem [resolvable:$true] %s948
          %951 = dma.vmem_to_hbm [thread:$0]  %s949, 64, %s946, %s932
        $region48: #{galr_forward.10} parent=39 // pred_fallthru
          _
      $region40: #{galr_forward.10} parent=5 // pred_fallthru
        _
      %p952 = scmp.le.s32.totalorder 2, %s16
      // Predicated region
      $region49: #{galr_forward.10} parent=5 // pred_check
        %p953 = pneg %p952
      $region50: #{galr_forward.10} parent=5 // pred_check_branch
        %955 = sbr.rel (%p953) target = $region52
      $region51: #{galr_forward.10} parent=5 // pred_region
        %s956 = ssub.s32 %s16, 2
        // Predicated region
        $region53: #{galr_forward.10} parent=51 // pred_check
          %p957 = pneg %p155
        $region54: #{galr_forward.10} parent=51 // pred_check_branch
          %959 = sbr.rel (%p957) target = $region56
        $region55: #{galr_forward.10} parent=51 // pred_region
          %p960 = scmp.lt.s32.totalorder %s22, 7
          %s961 = scalar_select %p960, %s22, 7
          %s962 = smul.addr %s961, 4
          %s963 = scalar_lea.vmem %s5, %s962
        $region56: #{galr_forward.10} parent=51 // pred_fallthru
          _
        // Predicated region
        $region57: #{galr_forward.10} parent=51 // pred_check
          %p964 = pneg %p181
        $region58: #{galr_forward.10} parent=51 // pred_check_branch
          %966 = sbr.rel (%p964) target = $region60
        $region59: #{galr_forward.10} parent=51 // pred_region
          %s967 = sand.u32 %s166, 1
          %s968 = scalar_lea.sflag [#allocation3], %s967
          %s969 = sand.u32 %s166, 1
          %s970 = smul.addr %s969, 4
          %s971 = scalar_lea.vmem [#allocation2], %s970
          %972 = dma.done %s968, 64
        $region60: #{galr_forward.10} parent=51 // pred_fallthru
          _
      $region52: #{galr_forward.10} parent=5 // pred_fallthru
        _
    $region6: #{galr_forward.10} parent=1 // loop_footer
      %s20 = sadd.s32 1, %s16
    $region7: #{galr_forward.10} parent=1 // loop_footer_branch
      %15 = sbr.rel target = $region3
    $region8: #{galr_forward.10} parent=1 // loop_exit
      _
    %973 = vsyncpa [#allocation3], 1
    %s974 = scalar_lea.sflag [#allocation3], 1
    %975 = vsyncpa %s974, 1

// kernel: galr_forward.11
$region0: #{galr_forward.11}
  #allocation0 [shape = 'u32[]', space=smem, size = 0x4, offset = 0x4, fixed_abs, tag = 'smem constant byte address 0x4 - core index']
  #allocation1 [shape = 'u32[144,128]{1,0:T(1,128)}', space=vmem, size = 0x12000, scoped, tag = 'internal scratch']
  %s0 = inlined_call_operand.vmem [shape: f32[128,4], index: 0, kind: input, shape index: {}]
  %s1 = inlined_call_operand.vmem [shape: f32[4,8], index: 1, kind: input, shape index: {}]
  %s2 = inlined_call_operand.vmem [shape: f32[1,8], index: 2, kind: input, shape index: {}]
  %s3 = inlined_call_operand.vmem [shape: f32[128,8], index: 3, kind: input, shape index: {}]
  %s4 = inlined_call_operand.vmem [shape: f32[128,8], index: 4, kind: output, shape index: {}]
  %s5 = sld [smem:[#allocation0]]
  $region26: #{galr_forward.11} parent=0
    _
  %s7 = ssub.s32 1, %s5
  %s8 = scalar_select 0, %s7, %s5
  // Predicated region
  $region2: #{galr_forward.11} parent=0 // pred_check
    _
  $region3: #{galr_forward.11} parent=0 // pred_check_branch
    %10 = sbr.rel (0) target = $region5
  $region4: #{galr_forward.11} parent=0 // pred_region
    _
  $region5: #{galr_forward.11} parent=0 // pred_fallthru
    _
  // Predicated region
  $region6: #{galr_forward.11} parent=0 // pred_check
    _
  $region7: #{galr_forward.11} parent=0 // pred_check_branch
    %12 = sbr.rel (0) target = $region9
  $region8: #{galr_forward.11} parent=0 // pred_region
    _
  $region9: #{galr_forward.11} parent=0 // pred_fallthru
    _
  // Predicated region
  $region10: #{galr_forward.11} parent=0 // pred_check
    _
  $region11: #{galr_forward.11} parent=0 // pred_check_branch
    %14 = sbr.rel (0) target = $region13
  $region12: #{galr_forward.11} parent=0 // pred_region
    _
  $region13: #{galr_forward.11} parent=0 // pred_fallthru
    _
  // Predicated region
  $region14: #{galr_forward.11} parent=0 // pred_check
    _
  $region15: #{galr_forward.11} parent=0 // pred_check_branch
    %16 = sbr.rel (0) target = $region17
  $region16: #{galr_forward.11} parent=0 // pred_region
    _
  $region17: #{galr_forward.11} parent=0 // pred_fallthru
    _
  %v17 = vld [vmem:[%s0] sm:$0xff]
  %v18 = vld [vmem:[%s0 + $0x8] sm:$0xff]
  %v19 = vld [vmem:[%s0 + $0x10] sm:$0xff]
  %v20 = vld [vmem:[%s0 + $0x18] sm:$0xff]
  %v21 = vld [vmem:[%s0 + $0x20] sm:$0xff]
  %v22 = vld [vmem:[%s0 + $0x28] sm:$0xff]
  %v23 = vld [vmem:[%s0 + $0x30] sm:$0xff]
  %v24 = vld [vmem:[%s0 + $0x38] sm:$0xff]
  %v25 = vld [vmem:[%s0 + $0x40] sm:$0xff]
  %v26 = vld [vmem:[%s0 + $0x48] sm:$0xff]
  %v27 = vld [vmem:[%s0 + $0x50] sm:$0xff]
  %v28 = vld [vmem:[%s0 + $0x58] sm:$0xff]
  %v29 = vld [vmem:[%s0 + $0x60] sm:$0xff]
  %v30 = vld [vmem:[%s0 + $0x68] sm:$0xff]
  %v31 = vld [vmem:[%s0 + $0x70] sm:$0xff]
  %v32 = vld [vmem:[%s0 + $0x78] sm:$0xff]
  %v33 = vld [vmem:[%s1] sm:$0xf]
  %v34 = vld [vmem:[%s2] sm:$0x1]
  %v36 = vlaneseq
  %v37 = vshrl.u32 %v36, 7
  %v38 = vsub.s32 0, %v37
  %v39 = vrot.slane %v34, %v38
  %vm41 = vcmask 31744
  %v43 = vsel %vm41, %v17, 0
  %v46 = vsel %vm41, %v18, 0
  %v49 = vsel %vm41, %v19, 0
  %v52 = vsel %vm41, %v20, 0
  %v55 = vsel %vm41, %v21, 0
  %v58 = vsel %vm41, %v22, 0
  %v61 = vsel %vm41, %v23, 0
  %v64 = vsel %vm41, %v24, 0
  %v67 = vsel %vm41, %v25, 0
  %v70 = vsel %vm41, %v26, 0
  %v73 = vsel %vm41, %v27, 0
  %v76 = vsel %vm41, %v28, 0
  %v79 = vsel %vm41, %v29, 0
  %v82 = vsel %vm41, %v30, 0
  %v85 = vsel %vm41, %v31, 0
  %v88 = vsel %vm41, %v32, 0
  %vm90 = vcmask 1043456
  %v92 = vsel %vm90, %v33, 0
  %94 = vmatprep.subr.mxu0 0.0
  %95 = vmatpush1.msra.mxu0 %v92
  %96 = vmatprep.subr.mxu0 0.0
  %97 = vmatpush1.msra.mxu0 0.0
  %98 = vmatprep.subr.mxu0 0.0
  %99 = vmatpush1.msra.mxu0 0.0
  %100 = vmatprep.subr.mxu0 0.0
  %101 = vmatpush1.msra.mxu0 0.0
  %102 = vmatprep.subr.mxu0 0.0
  %103 = vmatpush1.msra.mxu0 0.0
  %104 = vmatprep.subr.mxu0 0.0
  %105 = vmatpush1.msra.mxu0 0.0
  %106 = vmatprep.subr.mxu0 0.0
  %107 = vmatpush1.msra.mxu0 0.0
  %108 = vmatprep.subr.mxu0 0.0
  %109 = vmatpush1.msra.mxu0 0.0
  %110 = vmatprep.subr.mxu0 0.0
  %111 = vmatpush1.msra.mxu0 0.0
  %112 = vmatprep.subr.mxu0 0.0
  %113 = vmatpush1.msra.mxu0 0.0
  %114 = vmatprep.subr.mxu0 0.0
  %115 = vmatpush1.msra.mxu0 0.0
  %116 = vmatprep.subr.mxu0 0.0
  %117 = vmatpush1.msra.mxu0 0.0
  %118 = vmatprep.subr.mxu0 0.0
  %119 = vmatpush1.msra.mxu0 0.0
  %120 = vmatprep.subr.mxu0 0.0
  %121 = vmatpush1.msra.mxu0 0.0
  %122 = vmatprep.subr.mxu0 0.0
  %123 = vmatpush1.msra.mxu0 0.0
  %124 = vmatprep.subr.mxu0 0.0
  %125 = vmatpush1.msra.mxu0 0.0
  %126 = vmatprep.subr.mxu0 0.0
  %127 = vmatpush1.msra.mxu0 0.0
  %128 = vmatprep.subr.mxu0 0.0
  %129 = vmatpush1.msra.mxu0 0.0
  %130 = vmatprep.subr.mxu0 0.0
  %131 = vmatpush1.msra.mxu0 0.0
  %132 = vmatprep.subr.mxu0 0.0
  %133 = vmatpush1.msra.mxu0 0.0
  %134 = vmatprep.subr.mxu0 0.0
  %135 = vmatpush1.msra.mxu0 0.0
  %136 = vmatprep.subr.mxu0 0.0
  %137 = vmatpush1.msra.mxu0 0.0
  %138 = vmatprep.subr.mxu0 0.0
  %139 = vmatpush1.msra.mxu0 0.0
  %140 = vmatprep.subr.mxu0 0.0
  %141 = vmatpush1.msra.mxu0 0.0
  %142 = vmatprep.subr.mxu0 0.0
  %143 = vmatpush1.msra.mxu0 0.0
  %144 = vmatprep.subr.mxu0 0.0
  %145 = vmatpush1.msra.mxu0 0.0
  %146 = vmatprep.subr.mxu0 0.0
  %147 = vmatpush1.msra.mxu0 0.0
  %148 = vmatprep.subr.mxu0 0.0
  %149 = vmatpush1.msra.mxu0 0.0
  %150 = vmatprep.subr.mxu0 0.0
  %151 = vmatpush1.msra.mxu0 0.0
  %152 = vmatprep.subr.mxu0 0.0
  %153 = vmatpush1.msra.mxu0 0.0
  %154 = vmatprep.subr.mxu0 0.0
  %155 = vmatpush1.msra.mxu0 0.0
  %156 = vmatprep.subr.mxu0 0.0
  %157 = vmatpush1.msra.mxu0 0.0
  %158 = vmatprep.mubr.f32.mxu0 0.0
  %159 = vmatmul.mubr.f32.gmra.mrb[0].mxu0 %v43
  %v160 = vpop.f32.mrb[0].mxu0
  %v161 = vadd.f32 %v39, %v160
  %v162 = vpop.f32.mrb[0].mxu0
  %163 = vmatprep.mubr.f32.mxu0 0.0
  %164 = vmatmul.mubr.f32.gmra.mrb[0].mxu0 %v46
  %v165 = vpop.f32.mrb[0].mxu0
  %v166 = vadd.f32 %v39, %v165
  %v167 = vpop.f32.mrb[0].mxu0
  %168 = vmatprep.mubr.f32.mxu0 0.0
  %169 = vmatmul.mubr.f32.gmra.mrb[0].mxu0 %v49
  %v170 = vpop.f32.mrb[0].mxu0
  %v171 = vadd.f32 %v39, %v170
  %v172 = vpop.f32.mrb[0].mxu0
  %173 = vmatprep.mubr.f32.mxu0 0.0
  %174 = vmatmul.mubr.f32.gmra.mrb[0].mxu0 %v52
  %v175 = vpop.f32.mrb[0].mxu0
  %v176 = vadd.f32 %v39, %v175
  %v177 = vpop.f32.mrb[0].mxu0
  %178 = vmatprep.mubr.f32.mxu0 0.0
  %179 = vmatmul.mubr.f32.gmra.mrb[0].mxu0 %v55
  %v180 = vpop.f32.mrb[0].mxu0
  %v181 = vadd.f32 %v39, %v180
  %v182 = vpop.f32.mrb[0].mxu0
  %183 = vmatprep.mubr.f32.mxu0 0.0
  %184 = vmatmul.mubr.f32.gmra.mrb[0].mxu0 %v58
  %v185 = vpop.f32.mrb[0].mxu0
  %v186 = vadd.f32 %v39, %v185
  %v187 = vpop.f32.mrb[0].mxu0
  %188 = vmatprep.mubr.f32.mxu0 0.0
  %189 = vmatmul.mubr.f32.gmra.mrb[0].mxu0 %v61
  %v190 = vpop.f32.mrb[0].mxu0
  %v191 = vadd.f32 %v39, %v190
  %v192 = vpop.f32.mrb[0].mxu0
  %193 = vmatprep.mubr.f32.mxu0 0.0
  %194 = vmatmul.mubr.f32.gmra.mrb[0].mxu0 %v64
  %v195 = vpop.f32.mrb[0].mxu0
  %v196 = vadd.f32 %v39, %v195
  %v197 = vpop.f32.mrb[0].mxu0
  %198 = vmatprep.mubr.f32.mxu0 0.0
  %199 = vmatmul.mubr.f32.gmra.mrb[0].mxu0 %v67
  %v200 = vpop.f32.mrb[0].mxu0
  %v201 = vadd.f32 %v39, %v200
  %v202 = vpop.f32.mrb[0].mxu0
  %203 = vmatprep.mubr.f32.mxu0 0.0
  %204 = vmatmul.mubr.f32.gmra.mrb[0].mxu0 %v70
  %v205 = vpop.f32.mrb[0].mxu0
  %v206 = vadd.f32 %v39, %v205
  %v207 = vpop.f32.mrb[0].mxu0
  %208 = vmatprep.mubr.f32.mxu0 0.0
  %209 = vmatmul.mubr.f32.gmra.mrb[0].mxu0 %v73
  %v210 = vpop.f32.mrb[0].mxu0
  %v211 = vadd.f32 %v39, %v210
  %v212 = vpop.f32.mrb[0].mxu0
  %213 = vmatprep.mubr.f32.mxu0 0.0
  %214 = vmatmul.mubr.f32.gmra.mrb[0].mxu0 %v76
  %v215 = vpop.f32.mrb[0].mxu0
  %v216 = vadd.f32 %v39, %v215
  %v217 = vpop.f32.mrb[0].mxu0
  %218 = vmatprep.mubr.f32.mxu0 0.0
  %219 = vmatmul.mubr.f32.gmra.mrb[0].mxu0 %v79
  %v220 = vpop.f32.mrb[0].mxu0
  %v221 = vadd.f32 %v39, %v220
  %v222 = vpop.f32.mrb[0].mxu0
  %223 = vmatprep.mubr.f32.mxu0 0.0
  %224 = vmatmul.mubr.f32.gmra.mrb[0].mxu0 %v82
  %v225 = vpop.f32.mrb[0].mxu0
  %v226 = vadd.f32 %v39, %v225
  %v227 = vpop.f32.mrb[0].mxu0
  %228 = vmatprep.mubr.f32.mxu0 0.0
  %229 = vmatmul.mubr.f32.gmra.mrb[0].mxu0 %v85
  %v230 = vpop.f32.mrb[0].mxu0
  %v231 = vadd.f32 %v39, %v230
  %v232 = vpop.f32.mrb[0].mxu0
  %233 = vmatprep.mubr.f32.mxu0 0.0
  %234 = vmatmul.mubr.f32.gmra.mrb[0].mxu0 %v88
  %v235 = vpop.f32.mrb[0].mxu0
  %v236 = vadd.f32 %v39, %v235
  %v237 = vpop.f32.mrb[0].mxu0
  %238 = vdwg.mxu0
  %v239 = vld [vmem:[%s3] sm:$0xff]
  %v240 = vld [vmem:[%s3 + $0x8] sm:$0xff]
  %v241 = vld [vmem:[%s3 + $0x10] sm:$0xff]
  %v242 = vld [vmem:[%s3 + $0x18] sm:$0xff]
  %v243 = vld [vmem:[%s3 + $0x20] sm:$0xff]
  %v244 = vld [vmem:[%s3 + $0x28] sm:$0xff]
  %v245 = vld [vmem:[%s3 + $0x30] sm:$0xff]
  %v246 = vld [vmem:[%s3 + $0x38] sm:$0xff]
  %v247 = vld [vmem:[%s3 + $0x40] sm:$0xff]
  %v248 = vld [vmem:[%s3 + $0x48] sm:$0xff]
  %v249 = vld [vmem:[%s3 + $0x50] sm:$0xff]
  %v250 = vld [vmem:[%s3 + $0x58] sm:$0xff]
  %v251 = vld [vmem:[%s3 + $0x60] sm:$0xff]
  %v252 = vld [vmem:[%s3 + $0x68] sm:$0xff]
  %v253 = vld [vmem:[%s3 + $0x70] sm:$0xff]
  %v254 = vld [vmem:[%s3 + $0x78] sm:$0xff]
  %v255 = vadd.f32 %v161, %v239
  %v256 = vadd.f32 %v166, %v240
  %v257 = vadd.f32 %v171, %v241
  %v258 = vadd.f32 %v176, %v242
  %v259 = vadd.f32 %v181, %v243
  %v260 = vadd.f32 %v186, %v244
  %v261 = vadd.f32 %v191, %v245
  %v262 = vadd.f32 %v196, %v246
  %v263 = vadd.f32 %v201, %v247
  %v264 = vadd.f32 %v206, %v248
  %v265 = vadd.f32 %v211, %v249
  %v266 = vadd.f32 %v216, %v250
  %v267 = vadd.f32 %v221, %v251
  %v268 = vadd.f32 %v226, %v252
  %v269 = vadd.f32 %v231, %v253
  %v270 = vadd.f32 %v236, %v254
  %vm271 = vcmask 64512
  %272 = vst.msk [vmem:[%s4] sm:$0xff] %vm271, %v255
  %273 = vst.msk [vmem:[%s4 + $0x8] sm:$0xff] %vm271, %v256
  %274 = vst.msk [vmem:[%s4 + $0x10] sm:$0xff] %vm271, %v257
  %275 = vst.msk [vmem:[%s4 + $0x18] sm:$0xff] %vm271, %v258
  %276 = vst.msk [vmem:[%s4 + $0x20] sm:$0xff] %vm271, %v259
  %277 = vst.msk [vmem:[%s4 + $0x28] sm:$0xff] %vm271, %v260
  %278 = vst.msk [vmem:[%s4 + $0x30] sm:$0xff] %vm271, %v261
  %279 = vst.msk [vmem:[%s4 + $0x38] sm:$0xff] %vm271, %v262
  %280 = vst.msk [vmem:[%s4 + $0x40] sm:$0xff] %vm271, %v263
  %281 = vst.msk [vmem:[%s4 + $0x48] sm:$0xff] %vm271, %v264
  %282 = vst.msk [vmem:[%s4 + $0x50] sm:$0xff] %vm271, %v265
  %283 = vst.msk [vmem:[%s4 + $0x58] sm:$0xff] %vm271, %v266
  %284 = vst.msk [vmem:[%s4 + $0x60] sm:$0xff] %vm271, %v267
  %285 = vst.msk [vmem:[%s4 + $0x68] sm:$0xff] %vm271, %v268
  %286 = vst.msk [vmem:[%s4 + $0x70] sm:$0xff] %vm271, %v269
  %287 = vst.msk [vmem:[%s4 + $0x78] sm:$0xff] %vm271, %v270
  // Predicated region
  $region18: #{galr_forward.11} parent=0 // pred_check
    _
  $region19: #{galr_forward.11} parent=0 // pred_check_branch
    %289 = sbr.rel (0) target = $region21
  $region20: #{galr_forward.11} parent=0 // pred_region
    _
  $region21: #{galr_forward.11} parent=0 // pred_fallthru
    _
  // Predicated region
  $region22: #{galr_forward.11} parent=0 // pred_check
    _
  $region23: #{galr_forward.11} parent=0 // pred_check_branch
    %291 = sbr.rel (0) target = $region25
  $region24: #{galr_forward.11} parent=0 // pred_region
    _
  $region25: #{galr_forward.11} parent=0 // pred_fallthru
    _

// kernel: galr_forward.14
$region0: #{galr_forward.14}
  #allocation0 [shape = 'u32[]', space=smem, size = 0x4, offset = 0x4, fixed_abs, tag = 'smem constant byte address 0x4 - core index']
  #allocation1 [shape = 'u32[144,128]{1,0:T(1,128)}', space=vmem, size = 0x12000, scoped, tag = 'internal scratch']
  %s0 = inlined_call_operand.vmem [shape: f32[8,4,16], index: 0, kind: input, shape index: {}]
  %s1 = inlined_call_operand.vmem [shape: f32[2,16,24], index: 1, kind: input, shape index: {}]
  %s2 = inlined_call_operand.vmem [shape: f32[2,1,24], index: 2, kind: input, shape index: {}]
  %s3 = inlined_call_operand.vmem [shape: f32[2,8,16], index: 3, kind: input, shape index: {}]
  %s4 = inlined_call_operand.vmem [shape: f32[1,16], index: 4, kind: input, shape index: {}]
  %s5 = inlined_call_operand.vmem [shape: f32[8,4,16], index: 5, kind: output, shape index: {0}]
  %s6 = inlined_call_operand.vmem [shape: f32[8,4,4], index: 6, kind: output, shape index: {1}]
  %7 = xla_tuple %s5, %s6
  %s8 = sld [smem:[#allocation0]]
  $region61: #{galr_forward.14} parent=0
    _
  %s10 = ssub.s32 1, %s8
  %s11 = scalar_select 0, %s10, %s8
  loop: start=0, step=1, limit=10
  $region2: #{galr_forward.14} parent=0 // loop_pre_header
    _
  $region3: #{galr_forward.14} parent=0 // loop_header
    %s13 = sphi 0, %s17
    %p14 = scmp.ge.s32.totalorder %s13, 10
    %s23 = sphi 0, %s25
    %s26 = sphi 0, %s23
    %s27 = sphi 0, %s26
    %s43 = sphi 0, %s27
    %s47 = sphi 0, %s47
    %s49 = sphi 0, %s47
    %s50 = sphi 0, %s49
    %s64 = sphi 0, %s50
    %s68 = sphi 0, %s68
    %s70 = sphi 0, %s68
    %s71 = sphi 0, %s70
    %s85 = sphi 0, %s71
    %s89 = sphi 0, %s89
    %s91 = sphi 0, %s89
    %s92 = sphi 0, %s91
    %s106 = sphi 0, %s92
    %s110 = sphi 0, %s110
    %s112 = sphi 0, %s110
    %s113 = sphi 0, %s112
    %s127 = sphi 0, %s113
    %s133 = sphi 0, %s135
    %s136 = sphi 0, %s133
    %s137 = sphi 0, %s136
    %s153 = sphi 0, %s137
    %s159 = sphi 0, %s161
    %s162 = sphi 0, %s159
    %s163 = sphi 0, %s162
    %s179 = sphi 0, %s163
  $region4: #{galr_forward.14} parent=0 // loop_header_branch
    %16 = sbr.rel (%p14) target = $region8
  $region5: #{galr_forward.14} parent=0 // loop_body
    %s18 = ssub.s32 %s13, 1
    %s19 = ssub.s32 %s13, 2
    %s20 = sadd.s32 %s13, 1
    %s21 = ssub.s32 %s13, %s20
    %p22 = scmp.eq.s32.totalorder %s21, 0
    %s24 = sadd.s32 %s23, 1
    %s25 = scalar_select %p22, %s23, %s24
    %p28 = pneg %p22
    %p29 = scmp.eq.s32.totalorder %s13, 7
    %p30 = por %p28, %p29
    %p31 = scmp.ne.s32.totalorder %s23, %s26
    %p32 = scmp.eq.s32.totalorder %s13, 0
    %p33 = por %p31, %p32
    %p34 = scmp.ne.s32.totalorder %s23, %s26
    %p35 = scmp.eq.s32.totalorder %s18, 7
    %p36 = por %p34, %p35
    %p37 = scmp.ne.s32.totalorder %s26, %s27
    %p38 = scmp.eq.s32.totalorder %s18, 0
    %p39 = por %p37, %p38
    %p40 = scmp.ne.s32.totalorder %s26, %s27
    %p41 = scmp.eq.s32.totalorder %s19, 7
    %p42 = por %p40, %p41
    %p44 = scmp.ne.s32.totalorder %s27, %s43
    %p45 = scmp.eq.s32.totalorder %s19, 0
    %p46 = por %p44, %p45
    %s48 = sadd.s32 %s47, 1
    %p51 = scmp.eq.s32.totalorder %s13, 7
    %p52 = scmp.ne.s32.totalorder %s47, %s49
    %p53 = scmp.eq.s32.totalorder %s13, 0
    %p54 = por %p52, %p53
    %p55 = scmp.ne.s32.totalorder %s47, %s49
    %p56 = scmp.eq.s32.totalorder %s18, 7
    %p57 = por %p55, %p56
    %p58 = scmp.ne.s32.totalorder %s49, %s50
    %p59 = scmp.eq.s32.totalorder %s18, 0
    %p60 = por %p58, %p59
    %p61 = scmp.ne.s32.totalorder %s49, %s50
    %p62 = scmp.eq.s32.totalorder %s19, 7
    %p63 = por %p61, %p62
    %p65 = scmp.ne.s32.totalorder %s50, %s64
    %p66 = scmp.eq.s32.totalorder %s19, 0
    %p67 = por %p65, %p66
    %s69 = sadd.s32 %s68, 1
    %p72 = scmp.eq.s32.totalorder %s13, 7
    %p73 = scmp.ne.s32.totalorder %s68, %s70
    %p74 = scmp.eq.s32.totalorder %s13, 0
    %p75 = por %p73, %p74
    %p76 = scmp.ne.s32.totalorder %s68, %s70
    %p77 = scmp.eq.s32.totalorder %s18, 7
    %p78 = por %p76, %p77
    %p79 = scmp.ne.s32.totalorder %s70, %s71
    %p80 = scmp.eq.s32.totalorder %s18, 0
    %p81 = por %p79, %p80
    %p82 = scmp.ne.s32.totalorder %s70, %s71
    %p83 = scmp.eq.s32.totalorder %s19, 7
    %p84 = por %p82, %p83
    %p86 = scmp.ne.s32.totalorder %s71, %s85
    %p87 = scmp.eq.s32.totalorder %s19, 0
    %p88 = por %p86, %p87
    %s90 = sadd.s32 %s89, 1
    %p93 = scmp.eq.s32.totalorder %s13, 7
    %p94 = scmp.ne.s32.totalorder %s89, %s91
    %p95 = scmp.eq.s32.totalorder %s13, 0
    %p96 = por %p94, %p95
    %p97 = scmp.ne.s32.totalorder %s89, %s91
    %p98 = scmp.eq.s32.totalorder %s18, 7
    %p99 = por %p97, %p98
    %p100 = scmp.ne.s32.totalorder %s91, %s92
    %p101 = scmp.eq.s32.totalorder %s18, 0
    %p102 = por %p100, %p101
    %p103 = scmp.ne.s32.totalorder %s91, %s92
    %p104 = scmp.eq.s32.totalorder %s19, 7
    %p105 = por %p103, %p104
    %p107 = scmp.ne.s32.totalorder %s92, %s106
    %p108 = scmp.eq.s32.totalorder %s19, 0
    %p109 = por %p107, %p108
    %s111 = sadd.s32 %s110, 1
    %p114 = scmp.eq.s32.totalorder %s13, 7
    %p115 = scmp.ne.s32.totalorder %s110, %s112
    %p116 = scmp.eq.s32.totalorder %s13, 0
    %p117 = por %p115, %p116
    %p118 = scmp.ne.s32.totalorder %s110, %s112
    %p119 = scmp.eq.s32.totalorder %s18, 7
    %p120 = por %p118, %p119
    %p121 = scmp.ne.s32.totalorder %s112, %s113
    %p122 = scmp.eq.s32.totalorder %s18, 0
    %p123 = por %p121, %p122
    %p124 = scmp.ne.s32.totalorder %s112, %s113
    %p125 = scmp.eq.s32.totalorder %s19, 7
    %p126 = por %p124, %p125
    %p128 = scmp.ne.s32.totalorder %s113, %s127
    %p129 = scmp.eq.s32.totalorder %s19, 0
    %p130 = por %p128, %p129
    %s131 = ssub.s32 %s13, %s20
    %p132 = scmp.eq.s32.totalorder %s131, 0
    %s134 = sadd.s32 %s133, 1
    %s135 = scalar_select %p132, %s133, %s134
    %p138 = pneg %p132
    %p139 = scmp.eq.s32.totalorder %s13, 7
    %p140 = por %p138, %p139
    %p141 = scmp.ne.s32.totalorder %s133, %s136
    %p142 = scmp.eq.s32.totalorder %s13, 0
    %p143 = por %p141, %p142
    %p144 = scmp.ne.s32.totalorder %s133, %s136
    %p145 = scmp.eq.s32.totalorder %s18, 7
    %p146 = por %p144, %p145
    %p147 = scmp.ne.s32.totalorder %s136, %s137
    %p148 = scmp.eq.s32.totalorder %s18, 0
    %p149 = por %p147, %p148
    %p150 = scmp.ne.s32.totalorder %s136, %s137
    %p151 = scmp.eq.s32.totalorder %s19, 7
    %p152 = por %p150, %p151
    %p154 = scmp.ne.s32.totalorder %s137, %s153
    %p155 = scmp.eq.s32.totalorder %s19, 0
    %p156 = por %p154, %p155
    %s157 = ssub.s32 %s13, %s20
    %p158 = scmp.eq.s32.totalorder %s157, 0
    %s160 = sadd.s32 %s159, 1
    %s161 = scalar_select %p158, %s159, %s160
    %p164 = pneg %p158
    %p165 = scmp.eq.s32.totalorder %s13, 7
    %p166 = por %p164, %p165
    %p167 = scmp.ne.s32.totalorder %s159, %s162
    %p168 = scmp.eq.s32.totalorder %s13, 0
    %p169 = por %p167, %p168
    %p170 = scmp.ne.s32.totalorder %s159, %s162
    %p171 = scmp.eq.s32.totalorder %s18, 7
    %p172 = por %p170, %p171
    %p173 = scmp.ne.s32.totalorder %s162, %s163
    %p174 = scmp.eq.s32.totalorder %s18, 0
    %p175 = por %p173, %p174
    %p176 = scmp.ne.s32.totalorder %s162, %s163
    %p177 = scmp.eq.s32.totalorder %s19, 7
    %p178 = por %p176, %p177
    %p180 = scmp.ne.s32.totalorder %s163, %s179
    %p181 = scmp.eq.s32.totalorder %s19, 0
    %p182 = por %p180, %p181
    %p183 = scmp.le.s32.totalorder 1, %s13
    %p184 = scmp.lt.s32.totalorder %s13, 9
    %p185 = pnand %p183, %p184
    %p186 = pneg %p185
    // Predicated region
    $region9: #{galr_forward.14} parent=5 // pred_check
      _
    $region10: #{galr_forward.14} parent=5 // pred_check_branch
      %188 = sbr.rel (%p185) target = $region12
    $region11: #{galr_forward.14} parent=5 // pred_region
      %s189 = ssub.s32 %s13, 1
      // Predicated region
      $region13: #{galr_forward.14} parent=11 // pred_check
        %p190 = pneg %p60
      $region14: #{galr_forward.14} parent=11 // pred_check_branch
        %192 = sbr.rel (%p190) target = $region16
      $region15: #{galr_forward.14} parent=11 // pred_region
        _
      $region16: #{galr_forward.14} parent=11 // pred_fallthru
        _
      // Predicated region
      $region17: #{galr_forward.14} parent=11 // pred_check
        %p193 = pneg %p81
      $region18: #{galr_forward.14} parent=11 // pred_check_branch
        %195 = sbr.rel (%p193) target = $region20
      $region19: #{galr_forward.14} parent=11 // pred_region
        _
      $region20: #{galr_forward.14} parent=11 // pred_fallthru
        _
      // Predicated region
      $region21: #{galr_forward.14} parent=11 // pred_check
        %p196 = pneg %p102
      $region22: #{galr_forward.14} parent=11 // pred_check_branch
        %198 = sbr.rel (%p196) target = $region24
      $region23: #{galr_forward.14} parent=11 // pred_region
        _
      $region24: #{galr_forward.14} parent=11 // pred_fallthru
        _
      // Predicated region
      $region25: #{galr_forward.14} parent=11 // pred_check
        %p199 = pneg %p123
      $region26: #{galr_forward.14} parent=11 // pred_check_branch
        %201 = sbr.rel (%p199) target = $region28
      $region27: #{galr_forward.14} parent=11 // pred_region
        _
      $region28: #{galr_forward.14} parent=11 // pred_fallthru
        _
    $region12: #{galr_forward.14} parent=5 // pred_fallthru
      _
    %p202 = scmp.lt.s32.totalorder %s13, 8
    // Predicated region
    $region29: #{galr_forward.14} parent=5 // pred_check
      %p203 = pneg %p202
    $region30: #{galr_forward.14} parent=5 // pred_check_branch
      %205 = sbr.rel (%p203) target = $region32
    $region31: #{galr_forward.14} parent=5 // pred_region
      // Predicated region
      $region33: #{galr_forward.14} parent=31 // pred_check
        %p206 = pneg %p33
      $region34: #{galr_forward.14} parent=31 // pred_check_branch
        %208 = sbr.rel (%p206) target = $region36
      $region35: #{galr_forward.14} parent=31 // pred_region
        %p209 = scmp.lt.s32.totalorder %s13, 7
        %s210 = scalar_select %p209, %s13, 7
        %s211 = smul.addr %s210, 4
        %s212 = scalar_lea.vmem %s0, %s211
      $region36: #{galr_forward.14} parent=31 // pred_fallthru
        _
    $region32: #{galr_forward.14} parent=5 // pred_fallthru
      _
    %p213 = scmp.le.s32.totalorder 1, %s13
    %p214 = scmp.lt.s32.totalorder %s13, 9
    %p215 = pnand %p213, %p214
    %p216 = pneg %p215
    // Predicated region
    $region37: #{galr_forward.14} parent=5 // pred_check
      _
    $region38: #{galr_forward.14} parent=5 // pred_check_branch
      %218 = sbr.rel (%p215) target = $region40
    $region39: #{galr_forward.14} parent=5 // pred_region
      %s219 = ssub.s32 %s13, 1
      %p220 = scmp.lt.s32.totalorder %s18, 7
      %s221 = scalar_select %p220, %s18, 7
      %s222 = smul.addr %s221, 4
      %s223 = scalar_lea.vmem %s0, %s222
      %p224 = pneg %p39
      %p225 = pneg %p36
      %p226 = pneg %p60
      %p227 = pneg %p57
      %p228 = pneg %p81
      %p229 = pneg %p78
      %p230 = pneg %p102
      %p231 = pneg %p99
      %p232 = pneg %p123
      %p233 = pneg %p120
      %p234 = pneg %p149
      %p235 = pneg %p146
      %p236 = scmp.lt.s32.totalorder %s18, 7
      %s237 = scalar_select %p236, %s18, 7
      %s238 = smul.addr %s237, 4
      %s239 = scalar_lea.vmem %s5, %s238
      %p240 = pneg %p175
      %p241 = pneg %p172
      %p242 = scmp.lt.s32.totalorder %s18, 7
      %s243 = scalar_select %p242, %s18, 7
      %s244 = smul.addr %s243, 4
      %s245 = scalar_lea.vmem %s6, %s244
      %p246 = scmp.lt.s32.totalorder %s18, 7
      %s247 = scalar_select %p246, %s18, 7
      %s248 = smul.addr %s247, 4
      %s249 = scalar_lea.vmem %s0, %s248
      %p250 = scmp.lt.s32.totalorder %s18, 7
      %s251 = scalar_select %p250, %s18, 7
      %s252 = smul.addr %s251, 4
      %s253 = scalar_lea.vmem %s5, %s252
      %p254 = scmp.lt.s32.totalorder %s18, 7
      %s255 = scalar_select %p254, %s18, 7
      %s256 = smul.addr %s255, 4
      %s257 = scalar_lea.vmem %s6, %s256
      %v258 = vld [vmem:[%s249] sm:$0xf]
      %v259 = vld [vmem:[%s1] sm:$0xff]
      %v260 = vld [vmem:[%s1 + $0x8] sm:$0xff]
      %v261 = vld [vmem:[%s1 + $0x10] sm:$0xff]
      %v262 = vld [vmem:[%s1 + $0x18] sm:$0xff]
      %v263 = vld [vmem:[%s2] sm:$0x1]
      %v264 = vld [vmem:[%s2 + $0x1] sm:$0x1]
      %v267 = vlaneseq
      %v268 = vshrl.u32 %v267, 7
      %v269 = vsub.s32 0, %v268
      %v270 = vrot.slane %v263, %v269
      %v271 = vlaneseq
      %v272 = vshrl.u32 %v271, 7
      %v273 = vsub.s32 0, %v272
      %v274 = vrot.slane %v264, %v273
      %vm277 = vcmask 130048
      %v279 = vsel %vm277, %v258, 0
      %281 = vmatprep.subr.mxu0 0.0
      %282 = vmatpush1.msra.mxu0 %v259
      %283 = vmatprep.subr.mxu0 0.0
      %284 = vmatpush1.msra.mxu0 %v260
      %285 = vmatprep.subr.mxu0 0.0
      %286 = vmatpush1.msra.mxu0 0.0
      %287 = vmatprep.subr.mxu0 0.0
      %288 = vmatpush1.msra.mxu0 0.0
      %289 = vmatprep.subr.mxu0 0.0
      %290 = vmatpush1.msra.mxu0 0.0
      %291 = vmatprep.subr.mxu0 0.0
      %292 = vmatpush1.msra.mxu0 0.0
      %293 = vmatprep.subr.mxu0 0.0
      %294 = vmatpush1.msra.mxu0 0.0
      %295 = vmatprep.subr.mxu0 0.0
      %296 = vmatpush1.msra.mxu0 0.0
      %297 = vmatprep.subr.mxu0 0.0
      %298 = vmatpush1.msra.mxu0 0.0
      %299 = vmatprep.subr.mxu0 0.0
      %300 = vmatpush1.msra.mxu0 0.0
      %301 = vmatprep.subr.mxu0 0.0
      %302 = vmatpush1.msra.mxu0 0.0
      %303 = vmatprep.subr.mxu0 0.0
      %304 = vmatpush1.msra.mxu0 0.0
      %305 = vmatprep.subr.mxu0 0.0
      %306 = vmatpush1.msra.mxu0 0.0
      %307 = vmatprep.subr.mxu0 0.0
      %308 = vmatpush1.msra.mxu0 0.0
      %309 = vmatprep.subr.mxu0 0.0
      %310 = vmatpush1.msra.mxu0 0.0
      %311 = vmatprep.subr.mxu0 0.0
      %312 = vmatpush1.msra.mxu0 0.0
      %313 = vmatprep.subr.mxu0 0.0
      %314 = vmatpush1.msra.mxu0 0.0
      %315 = vmatprep.subr.mxu0 0.0
      %316 = vmatpush1.msra.mxu0 0.0
      %317 = vmatprep.subr.mxu0 0.0
      %318 = vmatpush1.msra.mxu0 0.0
      %319 = vmatprep.subr.mxu0 0.0
      %320 = vmatpush1.msra.mxu0 0.0
      %321 = vmatprep.subr.mxu0 0.0
      %322 = vmatpush1.msra.mxu0 0.0
      %323 = vmatprep.subr.mxu0 0.0
      %324 = vmatpush1.msra.mxu0 0.0
      %325 = vmatprep.subr.mxu0 0.0
      %326 = vmatpush1.msra.mxu0 0.0
      %327 = vmatprep.subr.mxu0 0.0
      %328 = vmatpush1.msra.mxu0 0.0
      %329 = vmatprep.subr.mxu0 0.0
      %330 = vmatpush1.msra.mxu0 0.0
      %331 = vmatprep.subr.mxu0 0.0
      %332 = vmatpush1.msra.mxu0 0.0
      %333 = vmatprep.subr.mxu0 0.0
      %334 = vmatpush1.msra.mxu0 0.0
      %335 = vmatprep.subr.mxu0 0.0
      %336 = vmatpush1.msra.mxu0 0.0
      %337 = vmatprep.subr.mxu0 0.0
      %338 = vmatpush1.msra.mxu0 0.0
      %339 = vmatprep.subr.mxu0 0.0
      %340 = vmatpush1.msra.mxu0 0.0
      %341 = vmatprep.subr.mxu0 0.0
      %342 = vmatpush1.msra.mxu0 0.0
      %343 = vmatprep.subr.mxu0 0.0
      %344 = vmatpush1.msra.mxu0 0.0
      %345 = vmatprep.mubr.f32.mxu0 0.0
      %346 = vmatmul.mubr.f32.gmra.mrb[0].mxu0 %v279
      %v347 = vpop.f32.mrb[0].mxu0
      %v348 = vadd.f32 %v270, %v347
      %v349 = vpop.f32.mrb[0].mxu0
      %350 = vdwg.mxu0
      %351 = vmatprep.subr.mxu0 0.0
      %352 = vmatpush1.msra.mxu0 %v261
      %353 = vmatprep.subr.mxu0 0.0
      %354 = vmatpush1.msra.mxu0 %v262
      %355 = vmatprep.subr.mxu0 0.0
      %356 = vmatpush1.msra.mxu0 0.0
      %357 = vmatprep.subr.mxu0 0.0
      %358 = vmatpush1.msra.mxu0 0.0
      %359 = vmatprep.subr.mxu0 0.0
      %360 = vmatpush1.msra.mxu0 0.0
      %361 = vmatprep.subr.mxu0 0.0
      %362 = vmatpush1.msra.mxu0 0.0
      %363 = vmatprep.subr.mxu0 0.0
      %364 = vmatpush1.msra.mxu0 0.0
      %365 = vmatprep.subr.mxu0 0.0
      %366 = vmatpush1.msra.mxu0 0.0
      %367 = vmatprep.subr.mxu0 0.0
      %368 = vmatpush1.msra.mxu0 0.0
      %369 = vmatprep.subr.mxu0 0.0
      %370 = vmatpush1.msra.mxu0 0.0
      %371 = vmatprep.subr.mxu0 0.0
      %372 = vmatpush1.msra.mxu0 0.0
      %373 = vmatprep.subr.mxu0 0.0
      %374 = vmatpush1.msra.mxu0 0.0
      %375 = vmatprep.subr.mxu0 0.0
      %376 = vmatpush1.msra.mxu0 0.0
      %377 = vmatprep.subr.mxu0 0.0
      %378 = vmatpush1.msra.mxu0 0.0
      %379 = vmatprep.subr.mxu0 0.0
      %380 = vmatpush1.msra.mxu0 0.0
      %381 = vmatprep.subr.mxu0 0.0
      %382 = vmatpush1.msra.mxu0 0.0
      %383 = vmatprep.subr.mxu0 0.0
      %384 = vmatpush1.msra.mxu0 0.0
      %385 = vmatprep.subr.mxu0 0.0
      %386 = vmatpush1.msra.mxu0 0.0
      %387 = vmatprep.subr.mxu0 0.0
      %388 = vmatpush1.msra.mxu0 0.0
      %389 = vmatprep.subr.mxu0 0.0
      %390 = vmatpush1.msra.mxu0 0.0
      %391 = vmatprep.subr.mxu0 0.0
      %392 = vmatpush1.msra.mxu0 0.0
      %393 = vmatprep.subr.mxu0 0.0
      %394 = vmatpush1.msra.mxu0 0.0
      %395 = vmatprep.subr.mxu0 0.0
      %396 = vmatpush1.msra.mxu0 0.0
      %397 = vmatprep.subr.mxu0 0.0
      %398 = vmatpush1.msra.mxu0 0.0
      %399 = vmatprep.subr.mxu0 0.0
      %400 = vmatpush1.msra.mxu0 0.0
      %401 = vmatprep.subr.mxu0 0.0
      %402 = vmatpush1.msra.mxu0 0.0
      %403 = vmatprep.subr.mxu0 0.0
      %404 = vmatpush1.msra.mxu0 0.0
      %405 = vmatprep.subr.mxu0 0.0
      %406 = vmatpush1.msra.mxu0 0.0
      %407 = vmatprep.subr.mxu0 0.0
      %408 = vmatpush1.msra.mxu0 0.0
      %409 = vmatprep.subr.mxu0 0.0
      %410 = vmatpush1.msra.mxu0 0.0
      %411 = vmatprep.subr.mxu0 0.0
      %412 = vmatpush1.msra.mxu0 0.0
      %413 = vmatprep.subr.mxu0 0.0
      %414 = vmatpush1.msra.mxu0 0.0
      %415 = vmatprep.mubr.f32.mxu0 0.0
      %416 = vmatmul.mubr.f32.gmra.mrb[0].mxu0 %v279
      %v417 = vpop.f32.mrb[0].mxu0
      %v418 = vadd.f32 %v274, %v417
      %v419 = vpop.f32.mrb[0].mxu0
      %420 = vdwg.mxu0
      %v421 = vmul.f32 %v348, 0.35355338
      %v422 = vmul.f32 %v418, 0.35355338
      %424 = vrot.lane.b32.xlu0 %v348, 120
      %v425 = vpop.permute.xlu0 %424
      %vm426 = vcmask 64512
      %v428 = vsel %vm426, %v421, 0
      %v430 = vsel %vm426, %v425, 0
      %432 = vmatprep.subr.mxu0 0.0
      %433 = vmatpush1.xpose.msra.mxu0 %v430
      %434 = vmatprep.subr.mxu0 0.0
      %435 = vmatpush1.xpose.msra.mxu0 0.0
      %436 = vmatprep.subr.mxu0 0.0
      %437 = vmatpush1.xpose.msra.mxu0 0.0
      %438 = vmatprep.subr.mxu0 0.0
      %439 = vmatpush1.xpose.msra.mxu0 0.0
      %440 = vmatprep.subr.mxu0 0.0
      %441 = vmatpush1.xpose.msra.mxu0 0.0
      %442 = vmatprep.subr.mxu0 0.0
      %443 = vmatpush1.xpose.msra.mxu0 0.0
      %444 = vmatprep.subr.mxu0 0.0
      %445 = vmatpush1.xpose.msra.mxu0 0.0
      %446 = vmatprep.subr.mxu0 0.0
      %447 = vmatpush1.xpose.msra.mxu0 0.0
      %448 = vmatprep.subr.mxu0 0.0
      %449 = vmatpush1.xpose.msra.mxu0 0.0
      %450 = vmatprep.subr.mxu0 0.0
      %451 = vmatpush1.xpose.msra.mxu0 0.0
      %452 = vmatprep.subr.mxu0 0.0
      %453 = vmatpush1.xpose.msra.mxu0 0.0
      %454 = vmatprep.subr.mxu0 0.0
      %455 = vmatpush1.xpose.msra.mxu0 0.0
      %456 = vmatprep.subr.mxu0 0.0
      %457 = vmatpush1.xpose.msra.mxu0 0.0
      %458 = vmatprep.subr.mxu0 0.0
      %459 = vmatpush1.xpose.msra.mxu0 0.0
      %460 = vmatprep.subr.mxu0 0.0
      %461 = vmatpush1.xpose.msra.mxu0 0.0
      %462 = vmatprep.subr.mxu0 0.0
      %463 = vmatpush1.xpose.msra.mxu0 0.0
      %464 = vmatprep.subr.mxu0 0.0
      %465 = vmatpush1.xpose.msra.mxu0 0.0
      %466 = vmatprep.subr.mxu0 0.0
      %467 = vmatpush1.xpose.msra.mxu0 0.0
      %468 = vmatprep.subr.mxu0 0.0
      %469 = vmatpush1.xpose.msra.mxu0 0.0
      %470 = vmatprep.subr.mxu0 0.0
      %471 = vmatpush1.xpose.msra.mxu0 0.0
      %472 = vmatprep.subr.mxu0 0.0
      %473 = vmatpush1.xpose.msra.mxu0 0.0
      %474 = vmatprep.subr.mxu0 0.0
      %475 = vmatpush1.xpose.msra.mxu0 0.0
      %476 = vmatprep.subr.mxu0 0.0
      %477 = vmatpush1.xpose.msra.mxu0 0.0
      %478 = vmatprep.subr.mxu0 0.0
      %479 = vmatpush1.xpose.msra.mxu0 0.0
      %480 = vmatprep.subr.mxu0 0.0
      %481 = vmatpush1.xpose.msra.mxu0 0.0
      %482 = vmatprep.subr.mxu0 0.0
      %483 = vmatpush1.xpose.msra.mxu0 0.0
      %484 = vmatprep.subr.mxu0 0.0
      %485 = vmatpush1.xpose.msra.mxu0 0.0
      %486 = vmatprep.subr.mxu0 0.0
      %487 = vmatpush1.xpose.msra.mxu0 0.0
      %488 = vmatprep.subr.mxu0 0.0
      %489 = vmatpush1.xpose.msra.mxu0 0.0
      %490 = vmatprep.subr.mxu0 0.0
      %491 = vmatpush1.xpose.msra.mxu0 0.0
      %492 = vmatprep.subr.mxu0 0.0
      %493 = vmatpush1.xpose.msra.mxu0 0.0
      %494 = vmatprep.subr.mxu0 0.0
      %495 = vmatpush1.xpose.msra.mxu0 0.0
      %496 = vmatprep.mubr.f32.mxu0 0.0
      %497 = vmatmul.mubr.f32.gmra.mrb[0].mxu0 %v428
      %v498 = vpop.f32.mrb[0].mxu0
      %v499 = vadd.f32 0.0, %v498
      %v500 = vpop.f32.mrb[0].mxu0
      %501 = vdwg.mxu0
      %503 = vrot.lane.b32.xlu0 %v418, 120
      %v504 = vpop.permute.xlu0 %503
      %v506 = vsel %vm426, %v422, 0
      %v508 = vsel %vm426, %v504, 0
      %510 = vmatprep.subr.mxu0 0.0
      %511 = vmatpush1.xpose.msra.mxu0 %v508
      %512 = vmatprep.subr.mxu0 0.0
      %513 = vmatpush1.xpose.msra.mxu0 0.0
      %514 = vmatprep.subr.mxu0 0.0
      %515 = vmatpush1.xpose.msra.mxu0 0.0
      %516 = vmatprep.subr.mxu0 0.0
      %517 = vmatpush1.xpose.msra.mxu0 0.0
      %518 = vmatprep.subr.mxu0 0.0
      %519 = vmatpush1.xpose.msra.mxu0 0.0
      %520 = vmatprep.subr.mxu0 0.0
      %521 = vmatpush1.xpose.msra.mxu0 0.0
      %522 = vmatprep.subr.mxu0 0.0
      %523 = vmatpush1.xpose.msra.mxu0 0.0
      %524 = vmatprep.subr.mxu0 0.0
      %525 = vmatpush1.xpose.msra.mxu0 0.0
      %526 = vmatprep.subr.mxu0 0.0
      %527 = vmatpush1.xpose.msra.mxu0 0.0
      %528 = vmatprep.subr.mxu0 0.0
      %529 = vmatpush1.xpose.msra.mxu0 0.0
      %530 = vmatprep.subr.mxu0 0.0
      %531 = vmatpush1.xpose.msra.mxu0 0.0
      %532 = vmatprep.subr.mxu0 0.0
      %533 = vmatpush1.xpose.msra.mxu0 0.0
      %534 = vmatprep.subr.mxu0 0.0
      %535 = vmatpush1.xpose.msra.mxu0 0.0
      %536 = vmatprep.subr.mxu0 0.0
      %537 = vmatpush1.xpose.msra.mxu0 0.0
      %538 = vmatprep.subr.mxu0 0.0
      %539 = vmatpush1.xpose.msra.mxu0 0.0
      %540 = vmatprep.subr.mxu0 0.0
      %541 = vmatpush1.xpose.msra.mxu0 0.0
      %542 = vmatprep.subr.mxu0 0.0
      %543 = vmatpush1.xpose.msra.mxu0 0.0
      %544 = vmatprep.subr.mxu0 0.0
      %545 = vmatpush1.xpose.msra.mxu0 0.0
      %546 = vmatprep.subr.mxu0 0.0
      %547 = vmatpush1.xpose.msra.mxu0 0.0
      %548 = vmatprep.subr.mxu0 0.0
      %549 = vmatpush1.xpose.msra.mxu0 0.0
      %550 = vmatprep.subr.mxu0 0.0
      %551 = vmatpush1.xpose.msra.mxu0 0.0
      %552 = vmatprep.subr.mxu0 0.0
      %553 = vmatpush1.xpose.msra.mxu0 0.0
      %554 = vmatprep.subr.mxu0 0.0
      %555 = vmatpush1.xpose.msra.mxu0 0.0
      %556 = vmatprep.subr.mxu0 0.0
      %557 = vmatpush1.xpose.msra.mxu0 0.0
      %558 = vmatprep.subr.mxu0 0.0
      %559 = vmatpush1.xpose.msra.mxu0 0.0
      %560 = vmatprep.subr.mxu0 0.0
      %561 = vmatpush1.xpose.msra.mxu0 0.0
      %562 = vmatprep.subr.mxu0 0.0
      %563 = vmatpush1.xpose.msra.mxu0 0.0
      %564 = vmatprep.subr.mxu0 0.0
      %565 = vmatpush1.xpose.msra.mxu0 0.0
      %566 = vmatprep.subr.mxu0 0.0
      %567 = vmatpush1.xpose.msra.mxu0 0.0
      %568 = vmatprep.subr.mxu0 0.0
      %569 = vmatpush1.xpose.msra.mxu0 0.0
      %570 = vmatprep.subr.mxu0 0.0
      %571 = vmatpush1.xpose.msra.mxu0 0.0
      %572 = vmatprep.subr.mxu0 0.0
      %573 = vmatpush1.xpose.msra.mxu0 0.0
      %574 = vmatprep.mubr.f32.mxu0 0.0
      %575 = vmatmul.mubr.f32.gmra.mrb[0].mxu0 %v506
      %v576 = vpop.f32.mrb[0].mxu0
      %v577 = vadd.f32 0.0, %v576
      %v578 = vpop.f32.mrb[0].mxu0
      %579 = vdwg.mxu0
      %vm580 = vcmask 27648
      %v581 = vsel %vm580, %v499, -inf
      %582 = vmax.xlane.f32.xlu0 %v581
      %v583 = vpop.xlane.xlu0 %582
      %v584 = vsel %vm580, %v577, -inf
      %585 = vmax.xlane.f32.xlu0 %v584
      %v586 = vpop.xlane.xlu0 %585
      %v587 = vsub.f32 %v499, %v583
      %v588 = vsub.f32 %v577, %v586
      %v589 = vmul.f32 %v587, 1.442695
      %v590 = vpow.pop %v589
      %v591 = vmul.f32 %v588, 1.442695
      %v592 = vpow.pop %v591
      %v593 = vsel %vm580, %v590, 0.0
      %594 = vadd.xlane.f32.xlu0 %v593
      %v595 = vpop.xlane.xlu0 %594
      %v596 = vsel %vm580, %v592, 0.0
      %597 = vadd.xlane.f32.xlu0 %v596
      %v598 = vpop.xlane.xlu0 %597
      %v599 = vrcp.pop %v595
      %v600 = vrcp.pop %v598
      %v601 = vmul.f32 %v590, %v599
      %v602 = vmul.f32 %v592, %v600
      %603 = vrot.lane.b32.xlu0 %v348, 112
      %v604 = vpop.permute.xlu0 %603
      %vm605 = vcmask 31744
      %v607 = vsel %vm605, %v601, 0
      %vm609 = vcmask 1043456
      %v610 = vsel %vm609, %v604, 0
      %612 = vmatprep.subr.mxu0 0.0
      %613 = vmatpush1.msra.mxu0 %v610
      %614 = vmatprep.subr.mxu0 0.0
      %615 = vmatpush1.msra.mxu0 0.0
      %616 = vmatprep.subr.mxu0 0.0
      %617 = vmatpush1.msra.mxu0 0.0
      %618 = vmatprep.subr.mxu0 0.0
      %619 = vmatpush1.msra.mxu0 0.0
      %620 = vmatprep.subr.mxu0 0.0
      %621 = vmatpush1.msra.mxu0 0.0
      %622 = vmatprep.subr.mxu0 0.0
      %623 = vmatpush1.msra.mxu0 0.0
      %624 = vmatprep.subr.mxu0 0.0
      %625 = vmatpush1.msra.mxu0 0.0
      %626 = vmatprep.subr.mxu0 0.0
      %627 = vmatpush1.msra.mxu0 0.0
      %628 = vmatprep.subr.mxu0 0.0
      %629 = vmatpush1.msra.mxu0 0.0
      %630 = vmatprep.subr.mxu0 0.0
      %631 = vmatpush1.msra.mxu0 0.0
      %632 = vmatprep.subr.mxu0 0.0
      %633 = vmatpush1.msra.mxu0 0.0
      %634 = vmatprep.subr.mxu0 0.0
      %635 = vmatpush1.msra.mxu0 0.0
      %636 = vmatprep.subr.mxu0 0.0
      %637 = vmatpush1.msra.mxu0 0.0
      %638 = vmatprep.subr.mxu0 0.0
      %639 = vmatpush1.msra.mxu0 0.0
      %640 = vmatprep.subr.mxu0 0.0
      %641 = vmatpush1.msra.mxu0 0.0
      %642 = vmatprep.subr.mxu0 0.0
      %643 = vmatpush1.msra.mxu0 0.0
      %644 = vmatprep.subr.mxu0 0.0
      %645 = vmatpush1.msra.mxu0 0.0
      %646 = vmatprep.subr.mxu0 0.0
      %647 = vmatpush1.msra.mxu0 0.0
      %648 = vmatprep.subr.mxu0 0.0
      %649 = vmatpush1.msra.mxu0 0.0
      %650 = vmatprep.subr.mxu0 0.0
      %651 = vmatpush1.msra.mxu0 0.0
      %652 = vmatprep.subr.mxu0 0.0
      %653 = vmatpush1.msra.mxu0 0.0
      %654 = vmatprep.subr.mxu0 0.0
      %655 = vmatpush1.msra.mxu0 0.0
      %656 = vmatprep.subr.mxu0 0.0
      %657 = vmatpush1.msra.mxu0 0.0
      %658 = vmatprep.subr.mxu0 0.0
      %659 = vmatpush1.msra.mxu0 0.0
      %660 = vmatprep.subr.mxu0 0.0
      %661 = vmatpush1.msra.mxu0 0.0
      %662 = vmatprep.subr.mxu0 0.0
      %663 = vmatpush1.msra.mxu0 0.0
      %664 = vmatprep.subr.mxu0 0.0
      %665 = vmatpush1.msra.mxu0 0.0
      %666 = vmatprep.subr.mxu0 0.0
      %667 = vmatpush1.msra.mxu0 0.0
      %668 = vmatprep.subr.mxu0 0.0
      %669 = vmatpush1.msra.mxu0 0.0
      %670 = vmatprep.subr.mxu0 0.0
      %671 = vmatpush1.msra.mxu0 0.0
      %672 = vmatprep.subr.mxu0 0.0
      %673 = vmatpush1.msra.mxu0 0.0
      %674 = vmatprep.subr.mxu0 0.0
      %675 = vmatpush1.msra.mxu0 0.0
      %676 = vmatprep.mubr.f32.mxu0 0.0
      %677 = vmatmul.mubr.f32.gmra.mrb[0].mxu0 %v607
      %v678 = vpop.f32.mrb[0].mxu0
      %v679 = vadd.f32 0.0, %v678
      %v680 = vpop.f32.mrb[0].mxu0
      %681 = vdwg.mxu0
      %682 = vrot.lane.b32.xlu0 %v418, 112
      %v683 = vpop.permute.xlu0 %682
      %v685 = vsel %vm605, %v602, 0
      %v687 = vsel %vm609, %v683, 0
      %689 = vmatprep.subr.mxu0 0.0
      %690 = vmatpush1.msra.mxu0 %v687
      %691 = vmatprep.subr.mxu0 0.0
      %692 = vmatpush1.msra.mxu0 0.0
      %693 = vmatprep.subr.mxu0 0.0
      %694 = vmatpush1.msra.mxu0 0.0
      %695 = vmatprep.subr.mxu0 0.0
      %696 = vmatpush1.msra.mxu0 0.0
      %697 = vmatprep.subr.mxu0 0.0
      %698 = vmatpush1.msra.mxu0 0.0
      %699 = vmatprep.subr.mxu0 0.0
      %700 = vmatpush1.msra.mxu0 0.0
      %701 = vmatprep.subr.mxu0 0.0
      %702 = vmatpush1.msra.mxu0 0.0
      %703 = vmatprep.subr.mxu0 0.0
      %704 = vmatpush1.msra.mxu0 0.0
      %705 = vmatprep.subr.mxu0 0.0
      %706 = vmatpush1.msra.mxu0 0.0
      %707 = vmatprep.subr.mxu0 0.0
      %708 = vmatpush1.msra.mxu0 0.0
      %709 = vmatprep.subr.mxu0 0.0
      %710 = vmatpush1.msra.mxu0 0.0
      %711 = vmatprep.subr.mxu0 0.0
      %712 = vmatpush1.msra.mxu0 0.0
      %713 = vmatprep.subr.mxu0 0.0
      %714 = vmatpush1.msra.mxu0 0.0
      %715 = vmatprep.subr.mxu0 0.0
      %716 = vmatpush1.msra.mxu0 0.0
      %717 = vmatprep.subr.mxu0 0.0
      %718 = vmatpush1.msra.mxu0 0.0
      %719 = vmatprep.subr.mxu0 0.0
      %720 = vmatpush1.msra.mxu0 0.0
      %721 = vmatprep.subr.mxu0 0.0
      %722 = vmatpush1.msra.mxu0 0.0
      %723 = vmatprep.subr.mxu0 0.0
      %724 = vmatpush1.msra.mxu0 0.0
      %725 = vmatprep.subr.mxu0 0.0
      %726 = vmatpush1.msra.mxu0 0.0
      %727 = vmatprep.subr.mxu0 0.0
      %728 = vmatpush1.msra.mxu0 0.0
      %729 = vmatprep.subr.mxu0 0.0
      %730 = vmatpush1.msra.mxu0 0.0
      %731 = vmatprep.subr.mxu0 0.0
      %732 = vmatpush1.msra.mxu0 0.0
      %733 = vmatprep.subr.mxu0 0.0
      %734 = vmatpush1.msra.mxu0 0.0
      %735 = vmatprep.subr.mxu0 0.0
      %736 = vmatpush1.msra.mxu0 0.0
      %737 = vmatprep.subr.mxu0 0.0
      %738 = vmatpush1.msra.mxu0 0.0
      %739 = vmatprep.subr.mxu0 0.0
      %740 = vmatpush1.msra.mxu0 0.0
      %741 = vmatprep.subr.mxu0 0.0
      %742 = vmatpush1.msra.mxu0 0.0
      %743 = vmatprep.subr.mxu0 0.0
      %744 = vmatpush1.msra.mxu0 0.0
      %745 = vmatprep.subr.mxu0 0.0
      %746 = vmatpush1.msra.mxu0 0.0
      %747 = vmatprep.subr.mxu0 0.0
      %748 = vmatpush1.msra.mxu0 0.0
      %749 = vmatprep.subr.mxu0 0.0
      %750 = vmatpush1.msra.mxu0 0.0
      %751 = vmatprep.subr.mxu0 0.0
      %752 = vmatpush1.msra.mxu0 0.0
      %753 = vmatprep.mubr.f32.mxu0 0.0
      %754 = vmatmul.mubr.f32.gmra.mrb[0].mxu0 %v685
      %v755 = vpop.f32.mrb[0].mxu0
      %v756 = vadd.f32 0.0, %v755
      %v757 = vpop.f32.mrb[0].mxu0
      %758 = vdwg.mxu0
      %v759 = vld [vmem:[%s3] sm:$0xff]
      %v760 = vld [vmem:[%s3 + $0x8] sm:$0xff]
      %v762 = vsel %vm426, %v679, 0
      %764 = vmatprep.subr.mxu0 0.0
      %765 = vmatpush1.msra.mxu0 %v759
      %766 = vmatprep.subr.mxu0 0.0
      %767 = vmatpush1.msra.mxu0 0.0
      %768 = vmatprep.subr.mxu0 0.0
      %769 = vmatpush1.msra.mxu0 0.0
      %770 = vmatprep.subr.mxu0 0.0
      %771 = vmatpush1.msra.mxu0 0.0
      %772 = vmatprep.subr.mxu0 0.0
      %773 = vmatpush1.msra.mxu0 0.0
      %774 = vmatprep.subr.mxu0 0.0
      %775 = vmatpush1.msra.mxu0 0.0
      %776 = vmatprep.subr.mxu0 0.0
      %777 = vmatpush1.msra.mxu0 0.0
      %778 = vmatprep.subr.mxu0 0.0
      %779 = vmatpush1.msra.mxu0 0.0
      %780 = vmatprep.subr.mxu0 0.0
      %781 = vmatpush1.msra.mxu0 0.0
      %782 = vmatprep.subr.mxu0 0.0
      %783 = vmatpush1.msra.mxu0 0.0
      %784 = vmatprep.subr.mxu0 0.0
      %785 = vmatpush1.msra.mxu0 0.0
      %786 = vmatprep.subr.mxu0 0.0
      %787 = vmatpush1.msra.mxu0 0.0
      %788 = vmatprep.subr.mxu0 0.0
      %789 = vmatpush1.msra.mxu0 0.0
      %790 = vmatprep.subr.mxu0 0.0
      %791 = vmatpush1.msra.mxu0 0.0
      %792 = vmatprep.subr.mxu0 0.0
      %793 = vmatpush1.msra.mxu0 0.0
      %794 = vmatprep.subr.mxu0 0.0
      %795 = vmatpush1.msra.mxu0 0.0
      %796 = vmatprep.subr.mxu0 0.0
      %797 = vmatpush1.msra.mxu0 0.0
      %798 = vmatprep.subr.mxu0 0.0
      %799 = vmatpush1.msra.mxu0 0.0
      %800 = vmatprep.subr.mxu0 0.0
      %801 = vmatpush1.msra.mxu0 0.0
      %802 = vmatprep.subr.mxu0 0.0
      %803 = vmatpush1.msra.mxu0 0.0
      %804 = vmatprep.subr.mxu0 0.0
      %805 = vmatpush1.msra.mxu0 0.0
      %806 = vmatprep.subr.mxu0 0.0
      %807 = vmatpush1.msra.mxu0 0.0
      %808 = vmatprep.subr.mxu0 0.0
      %809 = vmatpush1.msra.mxu0 0.0
      %810 = vmatprep.subr.mxu0 0.0
      %811 = vmatpush1.msra.mxu0 0.0
      %812 = vmatprep.subr.mxu0 0.0
      %813 = vmatpush1.msra.mxu0 0.0
      %814 = vmatprep.subr.mxu0 0.0
      %815 = vmatpush1.msra.mxu0 0.0
      %816 = vmatprep.subr.mxu0 0.0
      %817 = vmatpush1.msra.mxu0 0.0
      %818 = vmatprep.subr.mxu0 0.0
      %819 = vmatpush1.msra.mxu0 0.0
      %820 = vmatprep.subr.mxu0 0.0
      %821 = vmatpush1.msra.mxu0 0.0
      %822 = vmatprep.subr.mxu0 0.0
      %823 = vmatpush1.msra.mxu0 0.0
      %824 = vmatprep.subr.mxu0 0.0
      %825 = vmatpush1.msra.mxu0 0.0
      %826 = vmatprep.subr.mxu0 0.0
      %827 = vmatpush1.msra.mxu0 0.0
      %828 = vmatprep.mubr.f32.mxu0 0.0
      %829 = vmatmul.mubr.f32.gmra.mrb[0].mxu0 %v762
      %v830 = vpop.f32.mrb[0].mxu0
      %v831 = vadd.f32 0.0, %v830
      %v832 = vpop.f32.mrb[0].mxu0
      %833 = vdwg.mxu0
      %v835 = vsel %vm426, %v756, 0
      %837 = vmatprep.subr.mxu0 0.0
      %838 = vmatpush1.msra.mxu0 %v760
      %839 = vmatprep.subr.mxu0 0.0
      %840 = vmatpush1.msra.mxu0 0.0
      %841 = vmatprep.subr.mxu0 0.0
      %842 = vmatpush1.msra.mxu0 0.0
      %843 = vmatprep.subr.mxu0 0.0
      %844 = vmatpush1.msra.mxu0 0.0
      %845 = vmatprep.subr.mxu0 0.0
      %846 = vmatpush1.msra.mxu0 0.0
      %847 = vmatprep.subr.mxu0 0.0
      %848 = vmatpush1.msra.mxu0 0.0
      %849 = vmatprep.subr.mxu0 0.0
      %850 = vmatpush1.msra.mxu0 0.0
      %851 = vmatprep.subr.mxu0 0.0
      %852 = vmatpush1.msra.mxu0 0.0
      %853 = vmatprep.subr.mxu0 0.0
      %854 = vmatpush1.msra.mxu0 0.0
      %855 = vmatprep.subr.mxu0 0.0
      %856 = vmatpush1.msra.mxu0 0.0
      %857 = vmatprep.subr.mxu0 0.0
      %858 = vmatpush1.msra.mxu0 0.0
      %859 = vmatprep.subr.mxu0 0.0
      %860 = vmatpush1.msra.mxu0 0.0
      %861 = vmatprep.subr.mxu0 0.0
      %862 = vmatpush1.msra.mxu0 0.0
      %863 = vmatprep.subr.mxu0 0.0
      %864 = vmatpush1.msra.mxu0 0.0
      %865 = vmatprep.subr.mxu0 0.0
      %866 = vmatpush1.msra.mxu0 0.0
      %867 = vmatprep.subr.mxu0 0.0
      %868 = vmatpush1.msra.mxu0 0.0
      %869 = vmatprep.subr.mxu0 0.0
      %870 = vmatpush1.msra.mxu0 0.0
      %871 = vmatprep.subr.mxu0 0.0
      %872 = vmatpush1.msra.mxu0 0.0
      %873 = vmatprep.subr.mxu0 0.0
      %874 = vmatpush1.msra.mxu0 0.0
      %875 = vmatprep.subr.mxu0 0.0
      %876 = vmatpush1.msra.mxu0 0.0
      %877 = vmatprep.subr.mxu0 0.0
      %878 = vmatpush1.msra.mxu0 0.0
      %879 = vmatprep.subr.mxu0 0.0
      %880 = vmatpush1.msra.mxu0 0.0
      %881 = vmatprep.subr.mxu0 0.0
      %882 = vmatpush1.msra.mxu0 0.0
      %883 = vmatprep.subr.mxu0 0.0
      %884 = vmatpush1.msra.mxu0 0.0
      %885 = vmatprep.subr.mxu0 0.0
      %886 = vmatpush1.msra.mxu0 0.0
      %887 = vmatprep.subr.mxu0 0.0
      %888 = vmatpush1.msra.mxu0 0.0
      %889 = vmatprep.subr.mxu0 0.0
      %890 = vmatpush1.msra.mxu0 0.0
      %891 = vmatprep.subr.mxu0 0.0
      %892 = vmatpush1.msra.mxu0 0.0
      %893 = vmatprep.subr.mxu0 0.0
      %894 = vmatpush1.msra.mxu0 0.0
      %895 = vmatprep.subr.mxu0 0.0
      %896 = vmatpush1.msra.mxu0 0.0
      %897 = vmatprep.subr.mxu0 0.0
      %898 = vmatpush1.msra.mxu0 0.0
      %899 = vmatprep.subr.mxu0 0.0
      %900 = vmatpush1.msra.mxu0 0.0
      %901 = vmatprep.mubr.f32.mxu0 0.0
      %902 = vmatmul.mubr.f32.gmra.mrb[0].mxu0 %v835
      %v903 = vpop.f32.mrb[0].mxu0
      %v904 = vadd.f32 0.0, %v903
      %v905 = vpop.f32.mrb[0].mxu0
      %906 = vdwg.mxu0
      %vm907 = vcmask 125952
      %v908 = vsel %vm907, %v831, 0.0
      %v909 = vsel %vm907, %v904, 0.0
      %v910 = vadd.f32 %v908, %v909
      %v911 = vld [vmem:[%s4] sm:$0x1]
      %v913 = vlaneseq
      %v914 = vshrl.u32 %v913, 7
      %v915 = vsub.s32 0, %v914
      %v916 = vrot.slane %v911, %v915
      %v918 = vadd.f32 %v910, %v916
      %v919 = vadd.f32 %v918, %v258
      %920 = vst.msk [vmem:[%s253] sm:$0xf] %vm907, %v919
      %v921 = vsel %vm580, %v601, 0.0
      %v922 = vsel %vm580, %v602, 0.0
      %v923 = vadd.f32 %v921, %v922
      %v924 = vrcp.pop 2.0
      %v925 = vmul.f32 %v923, %v924
      %926 = vst.msk [vmem:[%s257] sm:$0xf] %vm580, %v925
      %p927 = scmp.lt.s32.totalorder %s18, 7
      %s928 = scalar_select %p927, %s18, 7
      %s929 = smul.addr %s928, 4
      %s930 = scalar_lea.vmem %s5, %s929
      %p931 = scmp.lt.s32.totalorder %s18, 7
      %s932 = scalar_select %p931, %s18, 7
      %s933 = smul.addr %s932, 4
      %s934 = scalar_lea.vmem %s6, %s933
      // Predicated region
      $region41: #{galr_forward.14} parent=39 // pred_check
        %p935 = pneg %p146
      $region42: #{galr_forward.14} parent=39 // pred_check_branch
        %937 = sbr.rel (%p935) target = $region44
      $region43: #{galr_forward.14} parent=39 // pred_region
        _
      $region44: #{galr_forward.14} parent=39 // pred_fallthru
        _
      // Predicated region
      $region45: #{galr_forward.14} parent=39 // pred_check
        %p938 = pneg %p172
      $region46: #{galr_forward.14} parent=39 // pred_check_branch
        %940 = sbr.rel (%p938) target = $region48
      $region47: #{galr_forward.14} parent=39 // pred_region
        _
      $region48: #{galr_forward.14} parent=39 // pred_fallthru
        _
    $region40: #{galr_forward.14} parent=5 // pred_fallthru
      _
    %p941 = scmp.le.s32.totalorder 2, %s13
    // Predicated region
    $region49: #{galr_forward.14} parent=5 // pred_check
      %p942 = pneg %p941
    $region50: #{galr_forward.14} parent=5 // pred_check_branch
      %944 = sbr.rel (%p942) target = $region52
    $region51: #{galr_forward.14} parent=5 // pred_region
      %s945 = ssub.s32 %s13, 2
      // Predicated region
      $region53: #{galr_forward.14} parent=51 // pred_check
        %p946 = pneg %p152
      $region54: #{galr_forward.14} parent=51 // pred_check_branch
        %948 = sbr.rel (%p946) target = $region56
      $region55: #{galr_forward.14} parent=51 // pred_region
        %p949 = scmp.lt.s32.totalorder %s19, 7
        %s950 = scalar_select %p949, %s19, 7
        %s951 = smul.addr %s950, 4
        %s952 = scalar_lea.vmem %s5, %s951
      $region56: #{galr_forward.14} parent=51 // pred_fallthru
        _
      // Predicated region
      $region57: #{galr_forward.14} parent=51 // pred_check
        %p953 = pneg %p178
      $region58: #{galr_forward.14} parent=51 // pred_check_branch
        %955 = sbr.rel (%p953) target = $region60
      $region59: #{galr_forward.14} parent=51 // pred_region
        %p956 = scmp.lt.s32.totalorder %s19, 7
        %s957 = scalar_select %p956, %s19, 7
        %s958 = smul.addr %s957, 4
        %s959 = scalar_lea.vmem %s6, %s958
      $region60: #{galr_forward.14} parent=51 // pred_fallthru
        _
    $region52: #{galr_forward.14} parent=5 // pred_fallthru
      _
  $region6: #{galr_forward.14} parent=0 // loop_footer
    %s17 = sadd.s32 1, %s13
  $region7: #{galr_forward.14} parent=0 // loop_footer_branch
    %12 = sbr.rel target = $region3
  $region8: #{galr_forward.14} parent=0 // loop_exit
    _

</llo_original>
